<compile_context>
chip_gen: v7x
topology: tpu7x:2x2x1
jax: 0.10.0
libtpu: 0.0.40
codegen_flags: <defaults>
</compile_context>

<pallas_src>
import functools
import math

import jax
import jax.numpy as jnp
from jax.experimental import pallas as pl
from jax.experimental.pallas import tpu as pltpu

_LN_EPS = 1e-5                    # PyTorch LayerNorm default
_ROW_TILE = 256                   # row tile for 2-D kernels (multiple of 8)
_Q_TILE = 256                     # query tile for the MHA kernel
_VMEM_LIMIT = 48 * 1024 * 1024    # < v7x 64 MiB physical, > 16/32 MiB defaults


# ----------------------------------------------------------------------------- helpers

def _layernorm_f32(y, gamma, beta, eps):
    mean = jnp.mean(y, axis=-1, keepdims=True)
    c = y - mean
    var = jnp.mean(c * c, axis=-1, keepdims=True)
    return (c * jax.lax.rsqrt(var + eps)) * gamma + beta


def _row_tile(m):
    return m if m <= _ROW_TILE else _ROW_TILE


# ------------------------------------------------------------------- embedding + posenc

def _embed_pe_kernel(x_ref, w_ref, b_ref, pe_ref, o_ref, *, n_feat):
    x = x_ref[0]                                       # (TS, F) f32
    y = b_ref[...] + pe_ref[...]                       # (TS, D) f32
    if n_feat <= 16:
        # tiny F: broadcast multiply-accumulate on the VPU (avoid a K=4 MXU matmul)
        for f in range(n_feat):
            y = y + x[:, f:f + 1] * w_ref[f:f + 1, :]
    else:
        y = y + jnp.dot(x, w_ref[...], preferred_element_type=jnp.float32)
    o_ref[0] = y.astype(o_ref.dtype)


def embed_pe(x, w, b, pe):
    """x:[B,S,F] -> (x @ w + b) + pe, returned as bf16 [B,S,D]."""
    B, S, F = x.shape
    D = w.shape[1]
    TS = S if S <= _ROW_TILE else _ROW_TILE
    return pl.pallas_call(
        functools.partial(_embed_pe_kernel, n_feat=F),
        out_shape=jax.ShapeDtypeStruct((B, S, D), jnp.bfloat16),
        grid=(B, pl.cdiv(S, TS)),
        in_specs=[
            pl.BlockSpec((1, TS, F), lambda b_, s_: (b_, s_, 0)),
            pl.BlockSpec((F, D), lambda b_, s_: (0, 0)),
            pl.BlockSpec((1, D), lambda b_, s_: (0, 0)),
            pl.BlockSpec((TS, D), lambda b_, s_: (s_, 0)),
        ],
        out_specs=pl.BlockSpec((1, TS, D), lambda b_, s_: (b_, s_, 0)),
        compiler_params=pltpu.CompilerParams(
            dimension_semantics=("parallel", "parallel")),
    )(x, w, b, pe)


# ----------------------------------------------------- fused MHA sublayer (attn + LN)

def _mha_kernel(x_ref, kv_ref, wq_ref, wk_ref, wv_ref, wo_ref,
                bq_ref, bk_ref, bv_ref, bo_ref, g_ref, b_ref,
                o_ref, k_scr, v_scr, ctx_scr,
                *, num_heads, scale, eps, causal, q_tile):
    qi = pl.program_id(1)

    # K/V projections once per batch element (query-tile axis is sequential).
    @pl.when(qi == 0)
    def _():
        src = kv_ref[0]                                                    # (Sk,D) bf16
        k = jnp.dot(src, wk_ref[...], preferred_element_type=jnp.float32) + bk_ref[...]
        v = jnp.dot(src, wv_ref[...], preferred_element_type=jnp.float32) + bv_ref[...]
        k_scr[...] = k.astype(jnp.bfloat16)
        v_scr[...] = v.astype(jnp.bfloat16)

    x = x_ref[0]                                                           # (TQ,D) bf16
    D = x.shape[-1]
    hd = D // num_heads

    q = (jnp.dot(x, wq_ref[...], preferred_element_type=jnp.float32)
         + bq_ref[...]) * scale                                            # fold 1/sqrt(hd)
    qb = q.astype(jnp.bfloat16)
    k = k_scr[...]                                                         # (Sk,D) bf16
    v = v_scr[...]

    TQ, Sk = qb.shape[0], k.shape[0]
    if causal:
        row = jax.lax.broadcasted_iota(jnp.int32, (TQ, Sk), 0) + qi * q_tile
        col = jax.lax.broadcasted_iota(jnp.int32, (TQ, Sk), 1)
        neg = jnp.float32(-1e30)   # finite: avoids NaN from exp(-inf - (-inf))

    # TODO(synk): head_dim < 128 still forces sub-128-lane q/k/v slices; a head-major
    # or padded-head layout would remove the remaining relayouts at realistic sizes.
    for h in range(num_heads):
        lo, hi = h * hd, (h + 1) * hd
        s = jax.lax.dot_general(qb[:, lo:hi], k[:, lo:hi],
                                (((1,), (1,)), ((), ())),
                                preferred_element_type=jnp.float32)        # (TQ,Sk) f32
        if causal:
            s = jnp.where(col > row, neg, s)
        mx = jnp.max(s, axis=-1, keepdims=True)
        p = jnp.exp(s - mx)
        p = p * pl.reciprocal(jnp.sum(p, axis=-1, keepdims=True), approx=True)
        ctx_scr[:, lo:hi] = jnp.dot(p.astype(jnp.bfloat16), v[:, lo:hi],
                                    preferred_element_type=jnp.float32)    # (TQ,hd)

    # single full-width output projection: contraction dim = D (fills the MXU)
    attn = jnp.dot(ctx_scr[...].astype(jnp.bfloat16), wo_ref[...],
                   preferred_element_type=jnp.float32) + bo_ref[...]

    y = _layernorm_f32(x.astype(jnp.float32) + attn, g_ref[...], b_ref[...], eps)
    o_ref[0] = y.astype(o_ref.dtype)


def mha_block(x, kv, p, ln_g, ln_b, num_heads, causal, eps=_LN_EPS):
    """Attention sublayer: LayerNorm(x + MHA(x, kv, kv)).  x:[B,Sq,D] kv:[B,Sk,D] (bf16)."""
    B, Sq, D = x.shape
    Sk = kv.shape[1]
    hd = D // num_heads
    scale = 1.0 / math.sqrt(hd)
    TQ = Sq if Sq <= _Q_TILE else _Q_TILE
    n_qt = pl.cdiv(Sq, TQ)

    in_specs = (
        [pl.BlockSpec((1, TQ, D), lambda b_, q_: (b_, q_, 0)),
         pl.BlockSpec((1, Sk, D), lambda b_, q_: (b_, 0, 0))]
        + [pl.BlockSpec((D, D), lambda b_, q_: (0, 0))] * 4
        + [pl.BlockSpec((1, D), lambda b_, q_: (0, 0))] * 6
    )
    inputs = [x, kv, p["wq"], p["wk"], p["wv"], p["wo"],
              p["bq"], p["bk"], p["bv"], p["bo"], ln_g, ln_b]

    return pl.pallas_call(
        functools.partial(_mha_kernel, num_heads=num_heads, scale=scale,
                          eps=eps, causal=causal, q_tile=TQ),
        out_shape=jax.ShapeDtypeStruct((B, Sq, D), jnp.bfloat16),
        grid=(B, n_qt),
        in_specs=in_specs,
        out_specs=pl.BlockSpec((1, TQ, D), lambda b_, q_: (b_, q_, 0)),
        scratch_shapes=[
            pltpu.VMEM((Sk, D), jnp.bfloat16),   # K (per-batch, reused across q tiles)
            pltpu.VMEM((Sk, D), jnp.bfloat16),   # V
            pltpu.VMEM((TQ, D), jnp.float32),    # concatenated per-head contexts
        ],
        compiler_params=pltpu.CompilerParams(
            dimension_semantics=("parallel", "arbitrary"),
            vmem_limit_bytes=_VMEM_LIMIT),
    )(*inputs)


# ------------------------------------ fused FFN sublayer (ffn + LN [+ final stack LN])

def _ffn_ln_kernel(*refs, eps, final_ln):
    if final_ln:
        (x_ref, w1_ref, b1_ref, w2_ref, b2_ref, g_ref, b_ref,
         g2_ref, b2f_ref, o_ref) = refs
    else:
        (x_ref, w1_ref, b1_ref, w2_ref, b2_ref, g_ref, b_ref, o_ref) = refs

    xb = x_ref[...]                                                        # (TM,D) bf16
    h = jnp.dot(xb, w1_ref[...], preferred_element_type=jnp.float32) + b1_ref[...]
    h = jnp.maximum(h, 0.0)
    y = jnp.dot(h.astype(jnp.bfloat16), w2_ref[...],
                preferred_element_type=jnp.float32) + b2_ref[...]
    y = _layernorm_f32(xb.astype(jnp.float32) + y, g_ref[...], b_ref[...], eps)
    if final_ln:                        # fused final encoder/decoder LayerNorm
        y = _layernorm_f32(y, g2_ref[...], b2f_ref[...], eps)
    o_ref[...] = y.astype(o_ref.dtype)


def ffn_ln(x2d, w1, b1, w2, b2, gamma, beta, final_g=None, final_b=None, eps=_LN_EPS):
    """LayerNorm(x + W2·relu(W1·x + b1) + b2) [then optional fused final LN] over rows."""
    M, D = x2d.shape
    FF = w1.shape[1]
    TM = _row_tile(M)
    final_ln = final_g is not None

    inputs = [x2d, w1, b1, w2, b2, gamma, beta]
    in_specs = [
        pl.BlockSpec((TM, D), lambda i: (i, 0)),
        pl.BlockSpec((D, FF), lambda i: (0, 0)),
        pl.BlockSpec((1, FF), lambda i: (0, 0)),
        pl.BlockSpec((FF, D), lambda i: (0, 0)),
        pl.BlockSpec((1, D), lambda i: (0, 0)),
        pl.BlockSpec((1, D), lambda i: (0, 0)),
        pl.BlockSpec((1, D), lambda i: (0, 0)),
    ]
    if final_ln:
        inputs += [final_g, final_b]
        in_specs += [pl.BlockSpec((1, D), lambda i: (0, 0))] * 2

    return pl.pallas_call(
        functools.partial(_ffn_ln_kernel, eps=eps, final_ln=final_ln),
        out_shape=jax.ShapeDtypeStruct((M, D), jnp.bfloat16),
        grid=(pl.cdiv(M, TM),),
        in_specs=in_specs,
        out_specs=pl.BlockSpec((TM, D), lambda i: (i, 0)),
        compiler_params=pltpu.CompilerParams(
            dimension_semantics=("parallel",),
            vmem_limit_bytes=_VMEM_LIMIT),
    )(*inputs)


# ------------------------------------------------------------------- MLP head (lane-padded)

def _mlp_head_kernel(x_ref, w1_ref, b1_ref, w2_ref, b2_ref, o_ref):
    x = x_ref[...]                                                         # (TM,D) bf16
    h = jnp.dot(x, w1_ref[...], preferred_element_type=jnp.float32) + b1_ref[...]
    h = jnp.maximum(h, 0.0)
    y = jnp.dot(h.astype(jnp.bfloat16), w2_ref[...],
                preferred_element_type=jnp.float32) + b2_ref[...]
    o_ref[...] = y.astype(o_ref.dtype)


def mlp_head(x2d, w1, b1, w2p, b2p, out_dim):
    """ReLU MLP head; w2p/b2p are pre-padded to a 128-multiple output width at init."""
    M, D = x2d.shape
    FC = w1.shape[1]
    OUTP = w2p.shape[1]
    TM = _row_tile(M)
    out = pl.pallas_call(
        _mlp_head_kernel,
        out_shape=jax.ShapeDtypeStruct((M, OUTP), jnp.float32),
        grid=(pl.cdiv(M, TM),),
        in_specs=[
            pl.BlockSpec((TM, D), lambda i: (i, 0)),
            pl.BlockSpec((D, FC), lambda i: (0, 0)),
            pl.BlockSpec((1, FC), lambda i: (0, 0)),
            pl.BlockSpec((FC, OUTP), lambda i: (0, 0)),
            pl.BlockSpec((1, OUTP), lambda i: (0, 0)),
        ],
        out_specs=pl.BlockSpec((TM, OUTP), lambda i: (i, 0)),
        compiler_params=pltpu.CompilerParams(
            dimension_semantics=("parallel",),
            vmem_limit_bytes=_VMEM_LIMIT),
    )(x2d, w1, b1, w2p, b2p)
    return out[:, :out_dim]


# --------------------------------------------------------------------------- model glue

def sinusoidal_pe(seq_len, d_model, dtype=jnp.float32):
    pos = jnp.arange(seq_len, dtype=jnp.float32)[:, None]
    div = jnp.exp(jnp.arange(0, d_model, 2, dtype=jnp.float32)
                  * (-math.log(10000.0) / d_model))
    pe = jnp.zeros((seq_len, d_model), jnp.float32)
    pe = pe.at[:, 0::2].set(jnp.sin(pos * div))
    pe = pe.at[:, 1::2].set(jnp.cos(pos * div))
    return pe.astype(dtype)


def encoder_layer(x, p, num_heads, final_g=None, final_b=None):
    B, S, D = x.shape
    x = mha_block(x, x, p["self_attn"], p["ln1_g"], p["ln1_b"], num_heads, causal=True)
    x = ffn_ln(x.reshape(B * S, D), p["w1"], p["b1"], p["w2"], p["b2"],
               p["ln2_g"], p["ln2_b"], final_g, final_b).reshape(B, S, D)
    return x


def decoder_layer(x, memory, p, num_heads, final_g=None, final_b=None):
    B, T, D = x.shape
    x = mha_block(x, x, p["self_attn"], p["ln1_g"], p["ln1_b"], num_heads, causal=True)
    # memory_mask is None in the PyTorch module -> unmasked cross-attention
    x = mha_block(x, memory, p["cross_attn"], p["ln2_g"], p["ln2_b"], num_heads,
                  causal=False)
    x = ffn_ln(x.reshape(B * T, D), p["w1"], p["b1"], p["w2"], p["b2"],
               p["ln3_g"], p["ln3_b"], final_g, final_b).reshape(B, T, D)
    return x


def vanilla_transformer_forward(params, source, target, cfg):
    # TODO(synk): only the module's default causal src/tgt masks are implemented
    # (generated in-kernel via iota compare); arbitrary user-supplied dense masks
    # are not plumbed through.
    D = cfg["d_model"]
    H = cfg["num_heads"]
    B, S, _ = source.shape
    T = target.shape[1]

    pe_s = sinusoidal_pe(S, D)
    pe_t = pe_s if T == S else sinusoidal_pe(T, D)

    # feature embedding + positional encoding (dropout is identity in eval mode)
    x = embed_pe(source, params["emb_w"], params["emb_b"], pe_s)
    t = embed_pe(target, params["emb_w"], params["emb_b"], pe_t)

    # encoder stack (post-norm); final encoder LayerNorm fused into last layer's FFN
    mem = x
    n_enc = len(params["encoder_layers"])
    for li, lp in enumerate(params["encoder_layers"]):
        last = li == n_enc - 1
        mem = encoder_layer(mem, lp, H,
                            params["enc_norm_g"] if last else None,
                            params["enc_norm_b"] if last else None)

    # decoder stack; final decoder LayerNorm fused into last layer's FFN
    dec = t
    n_dec = len(params["decoder_layers"])
    for li, lp in enumerate(params["decoder_layers"]):
        last = li == n_dec - 1
        dec = decoder_layer(dec, mem, lp, H,
                            params["dec_norm_g"] if last else None,
                            params["dec_norm_b"] if last else None)

    # MLP head: Linear(D, fc_dim) -> ReLU -> [dropout: identity] -> Linear(fc_dim, out)
    out = mlp_head(dec.reshape(B * T, D), params["fc_w1"], params["fc_b1"],
                   params["fc_w2"], params["fc_b2"], cfg["output_dim"])
    return out.reshape(B, T, cfg["output_dim"])


# ------------------------------------------------------------------------ parameter init

def init_params(key, cfg):
    """Weights stored bf16 (halve DMA + VMEM); biases / LN params f32 as (1, dim) rows.
    MLP-head output weight pre-padded to a 128-multiple width (lane-dense store)."""
    D, F = cfg["d_model"], cfg["num_features"]
    FF, FC, OUT = cfg["dim_feedforward"], cfg["fc_dim"], cfg["output_dim"]
    scale = 0.02

    def w_bf16(k, shape):
        return (jax.random.normal(k, shape, jnp.float32) * scale).astype(jnp.bfloat16)

    def zeros_row(n):
        return jnp.zeros((1, n), jnp.float32)

    def ones_row(n):
        return jnp.ones((1, n), jnp.float32)

    keys = iter(jax.random.split(key, 512))

    def attn_params():
        return {
            "wq": w_bf16(next(keys), (D, D)), "bq": zeros_row(D),
            "wk": w_bf16(next(keys), (D, D)), "bk": zeros_row(D),
            "wv": w_bf16(next(keys), (D, D)), "bv": zeros_row(D),
            "wo": w_bf16(next(keys), (D, D)), "bo": zeros_row(D),
        }

    def enc_layer():
        return {
            "self_attn": attn_params(),
            "ln1_g": ones_row(D), "ln1_b": zeros_row(D),
            "w1": w_bf16(next(keys), (D, FF)), "b1": zeros_row(FF),
            "w2": w_bf16(next(keys), (FF, D)), "b2": zeros_row(D),
            "ln2_g": ones_row(D), "ln2_b": zeros_row(D),
        }

    def dec_layer():
        return {
            "self_attn": attn_params(),
            "ln1_g": ones_row(D), "ln1_b": zeros_row(D),
            "cross_attn": attn_params(),
            "ln2_g": ones_row(D), "ln2_b": zeros_row(D),
            "w1": w_bf16(next(keys), (D, FF)), "b1": zeros_row(FF),
            "w2": w_bf16(next(keys), (FF, D)), "b2": zeros_row(D),
            "ln3_g": ones_row(D), "ln3_b": zeros_row(D),
        }

    # MLP head: pad the output projection to a lane-dense width once, here.
    OUTP = max(128, ((OUT + 127) // 128) * 128)
    fc_w2 = (jax.random.normal(next(keys), (FC, OUT), jnp.float32) * scale)
    fc_w2 = jnp.pad(fc_w2, ((0, 0), (0, OUTP - OUT))).astype(jnp.bfloat16)
    fc_b2 = jnp.zeros((1, OUTP), jnp.float32)

    # TODO(synk): fc_dim tuples (multi-hidden-layer MLP head) are not implemented;
    # a single hidden layer is assumed.
    return {
        "emb_w": jax.random.normal(next(keys), (F, D), jnp.float32) * scale,
        "emb_b": zeros_row(D),
        "encoder_layers": [enc_layer() for _ in range(cfg["num_encoder_layers"])],
        "enc_norm_g": ones_row(D), "enc_norm_b": zeros_row(D),
        "decoder_layers": [dec_layer() for _ in range(cfg["num_decoder_layers"])],
        "dec_norm_g": ones_row(D), "dec_norm_b": zeros_row(D),
        "fc_w1": w_bf16(next(keys), (D, FC)), "fc_b1": zeros_row(FC),
        "fc_w2": fc_w2, "fc_b2": fc_b2,
    }


# ------------------------------------------------------------------------------- driver

if __name__ == "__main__":
    cfg = dict(
        num_features=4,
        seq_len=8,
        out_seq_len=8,
        d_model=32,
        num_heads=4,
        num_encoder_layers=2,
        num_decoder_layers=2,
        dim_feedforward=64,   # nn.Transformer default is 2048; small for synthetic run
        fc_dim=64,
        output_dim=7,
    )
    B = 2

    key = jax.random.PRNGKey(0)
    kp, ks, kt = jax.random.split(key, 3)
    params = init_params(kp, cfg)
    source = jax.random.normal(ks, (B, cfg["seq_len"], cfg["num_features"]), jnp.float32)
    target = jax.random.normal(kt, (B, cfg["out_seq_len"], cfg["num_features"]), jnp.float32)

    fwd = jax.jit(functools.partial(vanilla_transformer_forward, cfg=cfg))
    out = fwd(params, source, target)
    out = jax.block_until_ready(out)

    assert out.shape == (B, cfg["out_seq_len"], cfg["output_dim"]), out.shape
    assert bool(jnp.all(jnp.isfinite(out)))
    # TODO(synk): dropout layers are identity (eval mode); no stochastic path implemented.
    print("KERNEL_OK")
</pallas_src>

<mosaic_0001>
module attributes {stable_mosaic.version = 11 : i64} {
  func.func @_embed_pe_kernel(%arg0: i32, %arg1: i32, %arg2: memref<1x8x4xf32, #tpu.memory_space<vmem>>, %arg3: memref<4x32xf32, #tpu.memory_space<vmem>>, %arg4: memref<1x32xf32, #tpu.memory_space<vmem>>, %arg5: memref<8x32xf32, #tpu.memory_space<vmem>>, %arg6: memref<1x8x32xbf16, #tpu.memory_space<vmem>>) attributes {dimension_semantics = [#tpu.dimension_semantics<parallel>, #tpu.dimension_semantics<parallel>], iteration_bounds = array<i64: 2, 1>, scalar_prefetch = 0 : i64, scratch_operands = 0 : i64, tpu.core_type = #tpu.core_type<tc>, window_params = [{transform_indices = @transform_0, window_bounds = array<i64: 1, 8, 4>}, {pipeline_mode = #tpu.pipeline_mode<synchronous>, transform_indices = @transform_1, window_bounds = array<i64: 4, 32>}, {pipeline_mode = #tpu.pipeline_mode<synchronous>, transform_indices = @transform_2, window_bounds = array<i64: 1, 32>}, {transform_indices = @transform_3, window_bounds = array<i64: 8, 32>}, {transform_indices = @transform_4, window_bounds = array<i64: 1, 8, 32>}]} {
    %c0 = arith.constant 0 : index
    %c0_0 = arith.constant 0 : index
    %c0_1 = arith.constant 0 : index
    %0 = vector.load %arg2[%c0, %c0_0, %c0_1] : memref<1x8x4xf32, #tpu.memory_space<vmem>>, vector<1x8x4xf32>
    %1 = vector.shape_cast %0 : vector<1x8x4xf32> to vector<8x4xf32>
    %c0_2 = arith.constant 0 : index
    %c0_3 = arith.constant 0 : index
    %2 = vector.load %arg4[%c0_2, %c0_3] : memref<1x32xf32, #tpu.memory_space<vmem>>, vector<1x32xf32>
    %c0_4 = arith.constant 0 : index
    %c0_5 = arith.constant 0 : index
    %3 = vector.load %arg5[%c0_4, %c0_5] : memref<8x32xf32, #tpu.memory_space<vmem>>, vector<8x32xf32>
    %4 = vector.broadcast %2 : vector<1x32xf32> to vector<8x32xf32>
    %5 = arith.addf %4, %3 : vector<8x32xf32>
    %6 = vector.extract_strided_slice %1 {offsets = [0, 0], sizes = [8, 1], strides = [1, 1]} : vector<8x4xf32> to vector<8x1xf32>
    %c0_6 = arith.constant 0 : index
    %c0_7 = arith.constant 0 : index
    %7 = vector.load %arg3[%c0_6, %c0_7] : memref<4x32xf32, #tpu.memory_space<vmem>>, vector<1x32xf32>
    %8 = vector.broadcast %6 : vector<8x1xf32> to vector<8x32xf32>
    %9 = vector.broadcast %7 : vector<1x32xf32> to vector<8x32xf32>
    %10 = arith.mulf %8, %9 : vector<8x32xf32>
    %11 = arith.addf %5, %10 : vector<8x32xf32>
    %12 = vector.extract_strided_slice %1 {offsets = [0, 1], sizes = [8, 1], strides = [1, 1]} : vector<8x4xf32> to vector<8x1xf32>
    %c1 = arith.constant 1 : index
    %c0_8 = arith.constant 0 : index
    %13 = vector.load %arg3[%c1, %c0_8] : memref<4x32xf32, #tpu.memory_space<vmem>>, vector<1x32xf32>
    %14 = vector.broadcast %12 : vector<8x1xf32> to vector<8x32xf32>
    %15 = vector.broadcast %13 : vector<1x32xf32> to vector<8x32xf32>
    %16 = arith.mulf %14, %15 : vector<8x32xf32>
    %17 = arith.addf %11, %16 : vector<8x32xf32>
    %18 = vector.extract_strided_slice %1 {offsets = [0, 2], sizes = [8, 1], strides = [1, 1]} : vector<8x4xf32> to vector<8x1xf32>
    %c2 = arith.constant 2 : index
    %c0_9 = arith.constant 0 : index
    %19 = vector.load %arg3[%c2, %c0_9] : memref<4x32xf32, #tpu.memory_space<vmem>>, vector<1x32xf32>
    %20 = vector.broadcast %18 : vector<8x1xf32> to vector<8x32xf32>
    %21 = vector.broadcast %19 : vector<1x32xf32> to vector<8x32xf32>
    %22 = arith.mulf %20, %21 : vector<8x32xf32>
    %23 = arith.addf %17, %22 : vector<8x32xf32>
    %24 = vector.extract_strided_slice %1 {offsets = [0, 3], sizes = [8, 1], strides = [1, 1]} : vector<8x4xf32> to vector<8x1xf32>
    %c3 = arith.constant 3 : index
    %c0_10 = arith.constant 0 : index
    %25 = vector.load %arg3[%c3, %c0_10] : memref<4x32xf32, #tpu.memory_space<vmem>>, vector<1x32xf32>
    %26 = vector.broadcast %24 : vector<8x1xf32> to vector<8x32xf32>
    %27 = vector.broadcast %25 : vector<1x32xf32> to vector<8x32xf32>
    %28 = arith.mulf %26, %27 : vector<8x32xf32>
    %29 = arith.addf %23, %28 : vector<8x32xf32>
    %30 = arith.truncf %29 : vector<8x32xf32> to vector<8x32xbf16>
    %c0_11 = arith.constant 0 : index
    %c0_12 = arith.constant 0 : index
    %c0_13 = arith.constant 0 : index
    %31 = vector.load %arg6[%c0_11, %c0_12, %c0_13] : memref<1x8x32xbf16, #tpu.memory_space<vmem>>, vector<1x8x32xbf16>
    %32 = vector.shape_cast %31 : vector<1x8x32xbf16> to vector<8x32xbf16>
    %33 = vector.shape_cast %30 : vector<8x32xbf16> to vector<1x8x32xbf16>
    tpu.vector_store %arg6[%c0_11, %c0_12, %c0_13], %33 {strides = array<i32>} : memref<1x8x32xbf16, #tpu.memory_space<vmem>>, vector<1x8x32xbf16>,
    return
  }
  func.func @transform_0(%arg0: i32, %arg1: i32) -> (i32, i32, i32) {
    %c0_i32 = arith.constant 0 : i32
    %c0_i32_0 = arith.constant 0 : i32
    return %arg0, %arg1, %c0_i32 : i32, i32, i32
  }
  func.func @transform_1(%arg0: i32, %arg1: i32) -> (i32, i32) {
    %c0_i32 = arith.constant 0 : i32
    %c0_i32_0 = arith.constant 0 : i32
    %c0_i32_1 = arith.constant 0 : i32
    return %c0_i32, %c0_i32_0 : i32, i32
  }
  func.func @transform_2(%arg0: i32, %arg1: i32) -> (i32, i32) {
    %c0_i32 = arith.constant 0 : i32
    %c0_i32_0 = arith.constant 0 : i32
    %c0_i32_1 = arith.constant 0 : i32
    return %c0_i32, %c0_i32_0 : i32, i32
  }
  func.func @transform_3(%arg0: i32, %arg1: i32) -> (i32, i32) {
    %c0_i32 = arith.constant 0 : i32
    %c0_i32_0 = arith.constant 0 : i32
    return %arg1, %c0_i32 : i32, i32
  }
  func.func @transform_4(%arg0: i32, %arg1: i32) -> (i32, i32, i32) {
    %c0_i32 = arith.constant 0 : i32
    %c0_i32_0 = arith.constant 0 : i32
    return %arg0, %arg1, %c0_i32 : i32, i32, i32
  }
}

module attributes {stable_mosaic.version = 11 : i64} {
  func.func @_mha_kernel(%arg0: i32, %arg1: i32, %arg2: memref<1x8x32xbf16, #tpu.memory_space<vmem>>, %arg3: memref<1x8x32xbf16, #tpu.memory_space<vmem>>, %arg4: memref<32x32xbf16, #tpu.memory_space<vmem>>, %arg5: memref<32x32xbf16, #tpu.memory_space<vmem>>, %arg6: memref<32x32xbf16, #tpu.memory_space<vmem>>, %arg7: memref<32x32xbf16, #tpu.memory_space<vmem>>, %arg8: memref<1x32xf32, #tpu.memory_space<vmem>>, %arg9: memref<1x32xf32, #tpu.memory_space<vmem>>, %arg10: memref<1x32xf32, #tpu.memory_space<vmem>>, %arg11: memref<1x32xf32, #tpu.memory_space<vmem>>, %arg12: memref<1x32xf32, #tpu.memory_space<vmem>>, %arg13: memref<1x32xf32, #tpu.memory_space<vmem>>, %arg14: memref<1x8x32xbf16, #tpu.memory_space<vmem>>, %arg15: memref<8x32xbf16, #tpu.memory_space<vmem>>, %arg16: memref<8x32xbf16, #tpu.memory_space<vmem>>, %arg17: memref<8x32xf32, #tpu.memory_space<vmem>>) attributes {dimension_semantics = [#tpu.dimension_semantics<parallel>, #tpu.dimension_semantics<arbitrary>], iteration_bounds = array<i64: 2, 1>, scalar_prefetch = 0 : i64, scratch_operands = 3 : i64, tpu.core_type = #tpu.core_type<tc>, window_params = [{transform_indices = @transform_0, window_bounds = array<i64: 1, 8, 32>}, {transform_indices = @transform_1, window_bounds = array<i64: 1, 8, 32>}, {pipeline_mode = #tpu.pipeline_mode<synchronous>, transform_indices = @transform_2, window_bounds = array<i64: 32, 32>}, {pipeline_mode = #tpu.pipeline_mode<synchronous>, transform_indices = @transform_3, window_bounds = array<i64: 32, 32>}, {pipeline_mode = #tpu.pipeline_mode<synchronous>, transform_indices = @transform_4, window_bounds = array<i64: 32, 32>}, {pipeline_mode = #tpu.pipeline_mode<synchronous>, transform_indices = @transform_5, window_bounds = array<i64: 32, 32>}, {pipeline_mode = #tpu.pipeline_mode<synchronous>, transform_indices = @transform_6, window_bounds = array<i64: 1, 32>}, {pipeline_mode = #tpu.pipeline_mode<synchronous>, transform_indices = @transform_7, window_bounds = array<i64: 1, 32>}, {pipeline_mode = #tpu.pipeline_mode<synchronous>, transform_indices = @transform_8, window_bounds = array<i64: 1, 32>}, {pipeline_mode = #tpu.pipeline_mode<synchronous>, transform_indices = @transform_9, window_bounds = array<i64: 1, 32>}, {pipeline_mode = #tpu.pipeline_mode<synchronous>, transform_indices = @transform_10, window_bounds = array<i64: 1, 32>}, {pipeline_mode = #tpu.pipeline_mode<synchronous>, transform_indices = @transform_11, window_bounds = array<i64: 1, 32>}, {transform_indices = @transform_12, window_bounds = array<i64: 1, 8, 32>}]} {
    %c0_i32 = arith.constant 0 : i32
    %0 = arith.cmpi eq, %arg1, %c0_i32 : i32
    %1 = arith.extui %0 : i1 to i32
    %c0_i32_0 = arith.constant 0 : i32
    %2 = arith.cmpi ne, %1, %c0_i32_0 : i32
    scf.if %2 {
      %c0_56 = arith.constant 0 : index
      %c0_57 = arith.constant 0 : index
      %c0_58 = arith.constant 0 : index
      %135 = vector.load %arg3[%c0_56, %c0_57, %c0_58] : memref<1x8x32xbf16, #tpu.memory_space<vmem>>, vector<1x8x32xbf16>
      %136 = vector.shape_cast %135 : vector<1x8x32xbf16> to vector<8x32xbf16>
      %c0_59 = arith.constant 0 : index
      %c0_60 = arith.constant 0 : index
      %137 = vector.load %arg5[%c0_59, %c0_60] : memref<32x32xbf16, #tpu.memory_space<vmem>>, vector<32x32xbf16>
      %cst_61 = arith.constant dense<0.000000e+00> : vector<8x32xf32>
      %138 = tpu.matmul %136, %137, %cst_61 {dimension_numbers = #tpu.dot_dimension_numbers<[1], [0], [0], [1], [0, 0, 1, 1], [], []>} : vector<8x32xbf16>, vector<32x32xbf16>, vector<8x32xf32> -> vector<8x32xf32>
      %c0_62 = arith.constant 0 : index
      %c0_63 = arith.constant 0 : index
      %139 = vector.load %arg9[%c0_62, %c0_63] : memref<1x32xf32, #tpu.memory_space<vmem>>, vector<1x32xf32>
      %140 = vector.broadcast %139 : vector<1x32xf32> to vector<8x32xf32>
      %141 = arith.addf %138, %140 : vector<8x32xf32>
      %c0_64 = arith.constant 0 : index
      %c0_65 = arith.constant 0 : index
      %142 = vector.load %arg6[%c0_64, %c0_65] : memref<32x32xbf16, #tpu.memory_space<vmem>>, vector<32x32xbf16>
      %cst_66 = arith.constant dense<0.000000e+00> : vector<8x32xf32>
      %143 = tpu.matmul %136, %142, %cst_66 {dimension_numbers = #tpu.dot_dimension_numbers<[1], [0], [0], [1], [0, 0, 1, 1], [], []>} : vector<8x32xbf16>, vector<32x32xbf16>, vector<8x32xf32> -> vector<8x32xf32>
      %c0_67 = arith.constant 0 : index
      %c0_68 = arith.constant 0 : index
      %144 = vector.load %arg10[%c0_67, %c0_68] : memref<1x32xf32, #tpu.memory_space<vmem>>, vector<1x32xf32>
      %145 = vector.broadcast %144 : vector<1x32xf32> to vector<8x32xf32>
      %146 = arith.addf %143, %145 : vector<8x32xf32>
      %147 = arith.truncf %141 : vector<8x32xf32> to vector<8x32xbf16>
      %c0_69 = arith.constant 0 : index
      %c0_70 = arith.constant 0 : index
      %148 = vector.load %arg15[%c0_69, %c0_70] : memref<8x32xbf16, #tpu.memory_space<vmem>>, vector<8x32xbf16>
      tpu.vector_store %arg15[%c0_69, %c0_70], %147 {strides = array<i32>} : memref<8x32xbf16, #tpu.memory_space<vmem>>, vector<8x32xbf16>,
      %149 = arith.truncf %146 : vector<8x32xf32> to vector<8x32xbf16>
      %c0_71 = arith.constant 0 : index
      %c0_72 = arith.constant 0 : index
      %150 = vector.load %arg16[%c0_71, %c0_72] : memref<8x32xbf16, #tpu.memory_space<vmem>>, vector<8x32xbf16>
      tpu.vector_store %arg16[%c0_71, %c0_72], %149 {strides = array<i32>} : memref<8x32xbf16, #tpu.memory_space<vmem>>, vector<8x32xbf16>,
    } else {
    }
    %c0 = arith.constant 0 : index
    %c0_1 = arith.constant 0 : index
    %c0_2 = arith.constant 0 : index
    %3 = vector.load %arg2[%c0, %c0_1, %c0_2] : memref<1x8x32xbf16, #tpu.memory_space<vmem>>, vector<1x8x32xbf16>
    %4 = vector.shape_cast %3 : vector<1x8x32xbf16> to vector<8x32xbf16>
    %c0_3 = arith.constant 0 : index
    %c0_4 = arith.constant 0 : index
    %5 = vector.load %arg4[%c0_3, %c0_4] : memref<32x32xbf16, #tpu.memory_space<vmem>>, vector<32x32xbf16>
    %cst = arith.constant dense<0.000000e+00> : vector<8x32xf32>
    %6 = tpu.matmul %4, %5, %cst {dimension_numbers = #tpu.dot_dimension_numbers<[1], [0], [0], [1], [0, 0, 1, 1], [], []>} : vector<8x32xbf16>, vector<32x32xbf16>, vector<8x32xf32> -> vector<8x32xf32>
    %c0_5 = arith.constant 0 : index
    %c0_6 = arith.constant 0 : index
    %7 = vector.load %arg8[%c0_5, %c0_6] : memref<1x32xf32, #tpu.memory_space<vmem>>, vector<1x32xf32>
    %8 = vector.broadcast %7 : vector<1x32xf32> to vector<8x32xf32>
    %9 = arith.addf %6, %8 : vector<8x32xf32>
    %cst_7 = arith.constant 0.353553385 : f32
    %10 = vector.broadcast %cst_7 : f32 to vector<8x32xf32>
    %11 = arith.mulf %9, %10 : vector<8x32xf32>
    %12 = arith.truncf %11 : vector<8x32xf32> to vector<8x32xbf16>
    %c0_8 = arith.constant 0 : index
    %c0_9 = arith.constant 0 : index
    %13 = vector.load %arg15[%c0_8, %c0_9] : memref<8x32xbf16, #tpu.memory_space<vmem>>, vector<8x32xbf16>
    %c0_10 = arith.constant 0 : index
    %c0_11 = arith.constant 0 : index
    %14 = vector.load %arg16[%c0_10, %c0_11] : memref<8x32xbf16, #tpu.memory_space<vmem>>, vector<8x32xbf16>
    %15 = tpu.iota {dimensions = array<i32: 0>} : vector<8x8xi32>
    %c8_i32 = arith.constant 8 : i32
    %16 = arith.muli %arg1, %c8_i32 : i32
    %17 = vector.broadcast %16 : i32 to vector<8x8xi32>
    %18 = arith.addi %15, %17 : vector<8x8xi32>
    %19 = tpu.iota {dimensions = array<i32: 1>} : vector<8x8xi32>
    %20 = vector.extract_strided_slice %12 {offsets = [0, 0], sizes = [8, 8], strides = [1, 1]} : vector<8x32xbf16> to vector<8x8xbf16>
    %21 = vector.extract_strided_slice %13 {offsets = [0, 0], sizes = [8, 8], strides = [1, 1]} : vector<8x32xbf16> to vector<8x8xbf16>
    %cst_12 = arith.constant dense<0.000000e+00> : vector<8x8xf32>
    %22 = tpu.matmul %20, %21, %cst_12 {dimension_numbers = #tpu.dot_dimension_numbers<[1], [1], [0], [0], [0, 0, 1, 0], [], []>} : vector<8x8xbf16>, vector<8x8xbf16>, vector<8x8xf32> -> vector<8x8xf32>
    %23 = arith.cmpi sgt, %19, %18 : vector<8x8xi32>
    %cst_13 = arith.constant -1.000000e+30 : f32
    %24 = vector.broadcast %cst_13 : f32 to vector<8x8xf32>
    %25 = arith.select %23, %24, %22 : vector<8x8xi1>, vector<8x8xf32>
    %cst_14 = arith.constant dense<0xFF800000> : vector<8xf32>
    %26 = vector.multi_reduction <maximumf>, %25, %cst_14 [1] : vector<8x8xf32> to vector<8xf32>
    %27 = vector.shape_cast %26 : vector<8xf32> to vector<8x1xf32>
    %28 = vector.broadcast %27 : vector<8x1xf32> to vector<8x8xf32>
    %29 = arith.subf %25, %28 : vector<8x8xf32>
    %30 = math.exp %29 : vector<8x8xf32>
    %cst_15 = arith.constant dense<0.000000e+00> : vector<8xf32>
    %31 = vector.multi_reduction <add>, %30, %cst_15 [1] : vector<8x8xf32> to vector<8xf32>
    %32 = vector.shape_cast %31 : vector<8xf32> to vector<8x1xf32>
    %33 = tpu.reciprocal %32 {approx = true} : vector<8x1xf32> -> vector<8x1xf32>
    %34 = vector.broadcast %33 : vector<8x1xf32> to vector<8x8xf32>
    %35 = arith.mulf %30, %34 : vector<8x8xf32>
    %36 = arith.truncf %35 : vector<8x8xf32> to vector<8x8xbf16>
    %37 = vector.extract_strided_slice %14 {offsets = [0, 0], sizes = [8, 8], strides = [1, 1]} : vector<8x32xbf16> to vector<8x8xbf16>
    %cst_16 = arith.constant dense<0.000000e+00> : vector<8x8xf32>
    %38 = tpu.matmul %36, %37, %cst_16 {dimension_numbers = #tpu.dot_dimension_numbers<[1], [0], [0], [1], [0, 0, 1, 1], [], []>} : vector<8x8xbf16>, vector<8x8xbf16>, vector<8x8xf32> -> vector<8x8xf32>
    %c0_17 = arith.constant 0 : index
    %c0_18 = arith.constant 0 : index
    %39 = vector.load %arg17[%c0_17, %c0_18] : memref<8x32xf32, #tpu.memory_space<vmem>>, vector<8x8xf32>
    tpu.vector_store %arg17[%c0_17, %c0_18], %38 {strides = array<i32>} : memref<8x32xf32, #tpu.memory_space<vmem>>, vector<8x8xf32>,
    %40 = vector.extract_strided_slice %12 {offsets = [0, 8], sizes = [8, 8], strides = [1, 1]} : vector<8x32xbf16> to vector<8x8xbf16>
    %41 = vector.extract_strided_slice %13 {offsets = [0, 8], sizes = [8, 8], strides = [1, 1]} : vector<8x32xbf16> to vector<8x8xbf16>
    %cst_19 = arith.constant dense<0.000000e+00> : vector<8x8xf32>
    %42 = tpu.matmul %40, %41, %cst_19 {dimension_numbers = #tpu.dot_dimension_numbers<[1], [1], [0], [0], [0, 0, 1, 0], [], []>} : vector<8x8xbf16>, vector<8x8xbf16>, vector<8x8xf32> -> vector<8x8xf32>
    %43 = arith.cmpi sgt, %19, %18 : vector<8x8xi32>
    %cst_20 = arith.constant -1.000000e+30 : f32
    %44 = vector.broadcast %cst_20 : f32 to vector<8x8xf32>
    %45 = arith.select %43, %44, %42 : vector<8x8xi1>, vector<8x8xf32>
    %cst_21 = arith.constant dense<0xFF800000> : vector<8xf32>
    %46 = vector.multi_reduction <maximumf>, %45, %cst_21 [1] : vector<8x8xf32> to vector<8xf32>
    %47 = vector.shape_cast %46 : vector<8xf32> to vector<8x1xf32>
    %48 = vector.broadcast %47 : vector<8x1xf32> to vector<8x8xf32>
    %49 = arith.subf %45, %48 : vector<8x8xf32>
    %50 = math.exp %49 : vector<8x8xf32>
    %cst_22 = arith.constant dense<0.000000e+00> : vector<8xf32>
    %51 = vector.multi_reduction <add>, %50, %cst_22 [1] : vector<8x8xf32> to vector<8xf32>
    %52 = vector.shape_cast %51 : vector<8xf32> to vector<8x1xf32>
    %53 = tpu.reciprocal %52 {approx = true} : vector<8x1xf32> -> vector<8x1xf32>
    %54 = vector.broadcast %53 : vector<8x1xf32> to vector<8x8xf32>
    %55 = arith.mulf %50, %54 : vector<8x8xf32>
    %56 = arith.truncf %55 : vector<8x8xf32> to vector<8x8xbf16>
    %57 = vector.extract_strided_slice %14 {offsets = [0, 8], sizes = [8, 8], strides = [1, 1]} : vector<8x32xbf16> to vector<8x8xbf16>
    %cst_23 = arith.constant dense<0.000000e+00> : vector<8x8xf32>
    %58 = tpu.matmul %56, %57, %cst_23 {dimension_numbers = #tpu.dot_dimension_numbers<[1], [0], [0], [1], [0, 0, 1, 1], [], []>} : vector<8x8xbf16>, vector<8x8xbf16>, vector<8x8xf32> -> vector<8x8xf32>
    %c0_24 = arith.constant 0 : index
    %c8 = arith.constant 8 : index
    %59 = vector.load %arg17[%c0_24, %c8] : memref<8x32xf32, #tpu.memory_space<vmem>>, vector<8x8xf32>
    tpu.vector_store %arg17[%c0_24, %c8], %58 {strides = array<i32>} : memref<8x32xf32, #tpu.memory_space<vmem>>, vector<8x8xf32>,
    %60 = vector.extract_strided_slice %12 {offsets = [0, 16], sizes = [8, 8], strides = [1, 1]} : vector<8x32xbf16> to vector<8x8xbf16>
    %61 = vector.extract_strided_slice %13 {offsets = [0, 16], sizes = [8, 8], strides = [1, 1]} : vector<8x32xbf16> to vector<8x8xbf16>
    %cst_25 = arith.constant dense<0.000000e+00> : vector<8x8xf32>
    %62 = tpu.matmul %60, %61, %cst_25 {dimension_numbers = #tpu.dot_dimension_numbers<[1], [1], [0], [0], [0, 0, 1, 0], [], []>} : vector<8x8xbf16>, vector<8x8xbf16>, vector<8x8xf32> -> vector<8x8xf32>
    %63 = arith.cmpi sgt, %19, %18 : vector<8x8xi32>
    %cst_26 = arith.constant -1.000000e+30 : f32
    %64 = vector.broadcast %cst_26 : f32 to vector<8x8xf32>
    %65 = arith.select %63, %64, %62 : vector<8x8xi1>, vector<8x8xf32>
    %cst_27 = arith.constant dense<0xFF800000> : vector<8xf32>
    %66 = vector.multi_reduction <maximumf>, %65, %cst_27 [1] : vector<8x8xf32> to vector<8xf32>
    %67 = vector.shape_cast %66 : vector<8xf32> to vector<8x1xf32>
    %68 = vector.broadcast %67 : vector<8x1xf32> to vector<8x8xf32>
    %69 = arith.subf %65, %68 : vector<8x8xf32>
    %70 = math.exp %69 : vector<8x8xf32>
    %cst_28 = arith.constant dense<0.000000e+00> : vector<8xf32>
    %71 = vector.multi_reduction <add>, %70, %cst_28 [1] : vector<8x8xf32> to vector<8xf32>
    %72 = vector.shape_cast %71 : vector<8xf32> to vector<8x1xf32>
    %73 = tpu.reciprocal %72 {approx = true} : vector<8x1xf32> -> vector<8x1xf32>
    %74 = vector.broadcast %73 : vector<8x1xf32> to vector<8x8xf32>
    %75 = arith.mulf %70, %74 : vector<8x8xf32>
    %76 = arith.truncf %75 : vector<8x8xf32> to vector<8x8xbf16>
    %77 = vector.extract_strided_slice %14 {offsets = [0, 16], sizes = [8, 8], strides = [1, 1]} : vector<8x32xbf16> to vector<8x8xbf16>
    %cst_29 = arith.constant dense<0.000000e+00> : vector<8x8xf32>
    %78 = tpu.matmul %76, %77, %cst_29 {dimension_numbers = #tpu.dot_dimension_numbers<[1], [0], [0], [1], [0, 0, 1, 1], [], []>} : vector<8x8xbf16>, vector<8x8xbf16>, vector<8x8xf32> -> vector<8x8xf32>
    %c0_30 = arith.constant 0 : index
    %c16 = arith.constant 16 : index
    %79 = vector.load %arg17[%c0_30, %c16] : memref<8x32xf32, #tpu.memory_space<vmem>>, vector<8x8xf32>
    tpu.vector_store %arg17[%c0_30, %c16], %78 {strides = array<i32>} : memref<8x32xf32, #tpu.memory_space<vmem>>, vector<8x8xf32>,
    %80 = vector.extract_strided_slice %12 {offsets = [0, 24], sizes = [8, 8], strides = [1, 1]} : vector<8x32xbf16> to vector<8x8xbf16>
    %81 = vector.extract_strided_slice %13 {offsets = [0, 24], sizes = [8, 8], strides = [1, 1]} : vector<8x32xbf16> to vector<8x8xbf16>
    %cst_31 = arith.constant dense<0.000000e+00> : vector<8x8xf32>
    %82 = tpu.matmul %80, %81, %cst_31 {dimension_numbers = #tpu.dot_dimension_numbers<[1], [1], [0], [0], [0, 0, 1, 0], [], []>} : vector<8x8xbf16>, vector<8x8xbf16>, vector<8x8xf32> -> vector<8x8xf32>
    %83 = arith.cmpi sgt, %19, %18 : vector<8x8xi32>
    %cst_32 = arith.constant -1.000000e+30 : f32
    %84 = vector.broadcast %cst_32 : f32 to vector<8x8xf32>
    %85 = arith.select %83, %84, %82 : vector<8x8xi1>, vector<8x8xf32>
    %cst_33 = arith.constant dense<0xFF800000> : vector<8xf32>
    %86 = vector.multi_reduction <maximumf>, %85, %cst_33 [1] : vector<8x8xf32> to vector<8xf32>
    %87 = vector.shape_cast %86 : vector<8xf32> to vector<8x1xf32>
    %88 = vector.broadcast %87 : vector<8x1xf32> to vector<8x8xf32>
    %89 = arith.subf %85, %88 : vector<8x8xf32>
    %90 = math.exp %89 : vector<8x8xf32>
    %cst_34 = arith.constant dense<0.000000e+00> : vector<8xf32>
    %91 = vector.multi_reduction <add>, %90, %cst_34 [1] : vector<8x8xf32> to vector<8xf32>
    %92 = vector.shape_cast %91 : vector<8xf32> to vector<8x1xf32>
    %93 = tpu.reciprocal %92 {approx = true} : vector<8x1xf32> -> vector<8x1xf32>
    %94 = vector.broadcast %93 : vector<8x1xf32> to vector<8x8xf32>
    %95 = arith.mulf %90, %94 : vector<8x8xf32>
    %96 = arith.truncf %95 : vector<8x8xf32> to vector<8x8xbf16>
    %97 = vector.extract_strided_slice %14 {offsets = [0, 24], sizes = [8, 8], strides = [1, 1]} : vector<8x32xbf16> to vector<8x8xbf16>
    %cst_35 = arith.constant dense<0.000000e+00> : vector<8x8xf32>
    %98 = tpu.matmul %96, %97, %cst_35 {dimension_numbers = #tpu.dot_dimension_numbers<[1], [0], [0], [1], [0, 0, 1, 1], [], []>} : vector<8x8xbf16>, vector<8x8xbf16>, vector<8x8xf32> -> vector<8x8xf32>
    %c0_36 = arith.constant 0 : index
    %c24 = arith.constant 24 : index
    %99 = vector.load %arg17[%c0_36, %c24] : memref<8x32xf32, #tpu.memory_space<vmem>>, vector<8x8xf32>
    tpu.vector_store %arg17[%c0_36, %c24], %98 {strides = array<i32>} : memref<8x32xf32, #tpu.memory_space<vmem>>, vector<8x8xf32>,
    %c0_37 = arith.constant 0 : index
    %c0_38 = arith.constant 0 : index
    %100 = vector.load %arg17[%c0_37, %c0_38] : memref<8x32xf32, #tpu.memory_space<vmem>>, vector<8x32xf32>
    %101 = arith.truncf %100 : vector<8x32xf32> to vector<8x32xbf16>
    %c0_39 = arith.constant 0 : index
    %c0_40 = arith.constant 0 : index
    %102 = vector.load %arg7[%c0_39, %c0_40] : memref<32x32xbf16, #tpu.memory_space<vmem>>, vector<32x32xbf16>
    %cst_41 = arith.constant dense<0.000000e+00> : vector<8x32xf32>
    %103 = tpu.matmul %101, %102, %cst_41 {dimension_numbers = #tpu.dot_dimension_numbers<[1], [0], [0], [1], [0, 0, 1, 1], [], []>} : vector<8x32xbf16>, vector<32x32xbf16>, vector<8x32xf32> -> vector<8x32xf32>
    %c0_42 = arith.constant 0 : index
    %c0_43 = arith.constant 0 : index
    %104 = vector.load %arg11[%c0_42, %c0_43] : memref<1x32xf32, #tpu.memory_space<vmem>>, vector<1x32xf32>
    %105 = vector.broadcast %104 : vector<1x32xf32> to vector<8x32xf32>
    %106 = arith.addf %103, %105 : vector<8x32xf32>
    %107 = arith.extf %4 : vector<8x32xbf16> to vector<8x32xf32>
    %108 = arith.addf %107, %106 : vector<8x32xf32>
    %c0_44 = arith.constant 0 : index
    %c0_45 = arith.constant 0 : index
    %109 = vector.load %arg12[%c0_44, %c0_45] : memref<1x32xf32, #tpu.memory_space<vmem>>, vector<1x32xf32>
    %c0_46 = arith.constant 0 : index
    %c0_47 = arith.constant 0 : index
    %110 = vector.load %arg13[%c0_46, %c0_47] : memref<1x32xf32, #tpu.memory_space<vmem>>, vector<1x32xf32>
    %cst_48 = arith.constant dense<0.000000e+00> : vector<8xf32>
    %111 = vector.multi_reduction <add>, %108, %cst_48 [1] : vector<8x32xf32> to vector<8xf32>
    %112 = vector.shape_cast %111 : vector<8xf32> to vector<8x1xf32>
    %cst_49 = arith.constant 3.200000e+01 : f32
    %113 = vector.broadcast %cst_49 : f32 to vector<8x1xf32>
    %114 = arith.divf %112, %113 : vector<8x1xf32>
    %115 = vector.broadcast %114 : vector<8x1xf32> to vector<8x32xf32>
    %116 = arith.subf %108, %115 : vector<8x32xf32>
    %117 = arith.mulf %116, %116 : vector<8x32xf32>
    %cst_50 = arith.constant dense<0.000000e+00> : vector<8xf32>
    %118 = vector.multi_reduction <add>, %117, %cst_50 [1] : vector<8x32xf32> to vector<8xf32>
    %119 = vector.shape_cast %118 : vector<8xf32> to vector<8x1xf32>
    %cst_51 = arith.constant 3.200000e+01 : f32
    %120 = vector.broadcast %cst_51 : f32 to vector<8x1xf32>
    %121 = arith.divf %119, %120 : vector<8x1xf32>
    %cst_52 = arith.constant 9.99999974E-6 : f32
    %122 = vector.broadcast %cst_52 : f32 to vector<8x1xf32>
    %123 = arith.addf %121, %122 : vector<8x1xf32>
    %124 = math.rsqrt %123 : vector<8x1xf32>
    %125 = vector.broadcast %124 : vector<8x1xf32> to vector<8x32xf32>
    %126 = arith.mulf %116, %125 : vector<8x32xf32>
    %127 = vector.broadcast %109 : vector<1x32xf32> to vector<8x32xf32>
    %128 = arith.mulf %126, %127 : vector<8x32xf32>
    %129 = vector.broadcast %110 : vector<1x32xf32> to vector<8x32xf32>
    %130 = arith.addf %128, %129 : vector<8x32xf32>
    %131 = arith.truncf %130 : vector<8x32xf32> to vector<8x32xbf16>
    %c0_53 = arith.constant 0 : index
    %c0_54 = arith.constant 0 : index
    %c0_55 = arith.constant 0 : index
    %132 = vector.load %arg14[%c0_53, %c0_54, %c0_55] : memref<1x8x32xbf16, #tpu.memory_space<vmem>>, vector<1x8x32xbf16>
    %133 = vector.shape_cast %132 : vector<1x8x32xbf16> to vector<8x32xbf16>
    %134 = vector.shape_cast %131 : vector<8x32xbf16> to vector<1x8x32xbf16>
    tpu.vector_store %arg14[%c0_53, %c0_54, %c0_55], %134 {strides = array<i32>} : memref<1x8x32xbf16, #tpu.memory_space<vmem>>, vector<1x8x32xbf16>,
    return
  }
  func.func @transform_0(%arg0: i32, %arg1: i32) -> (i32, i32, i32) {
    %c0_i32 = arith.constant 0 : i32
    %c0_i32_0 = arith.constant 0 : i32
    return %arg0, %arg1, %c0_i32 : i32, i32, i32
  }
  func.func @transform_1(%arg0: i32, %arg1: i32) -> (i32, i32, i32) {
    %c0_i32 = arith.constant 0 : i32
    %c0_i32_0 = arith.constant 0 : i32
    %c0_i32_1 = arith.constant 0 : i32
    return %arg0, %c0_i32, %c0_i32_0 : i32, i32, i32
  }
  func.func @transform_2(%arg0: i32, %arg1: i32) -> (i32, i32) {
    %c0_i32 = arith.constant 0 : i32
    %c0_i32_0 = arith.constant 0 : i32
    %c0_i32_1 = arith.constant 0 : i32
    return %c0_i32, %c0_i32_0 : i32, i32
  }
  func.func @transform_3(%arg0: i32, %arg1: i32) -> (i32, i32) {
    %c0_i32 = arith.constant 0 : i32
    %c0_i32_0 = arith.constant 0 : i32
    %c0_i32_1 = arith.constant 0 : i32
    return %c0_i32, %c0_i32_0 : i32, i32
  }
  func.func @transform_4(%arg0: i32, %arg1: i32) -> (i32, i32) {
    %c0_i32 = arith.constant 0 : i32
    %c0_i32_0 = arith.constant 0 : i32
    %c0_i32_1 = arith.constant 0 : i32
    return %c0_i32, %c0_i32_0 : i32, i32
  }
  func.func @transform_5(%arg0: i32, %arg1: i32) -> (i32, i32) {
    %c0_i32 = arith.constant 0 : i32
    %c0_i32_0 = arith.constant 0 : i32
    %c0_i32_1 = arith.constant 0 : i32
    return %c0_i32, %c0_i32_0 : i32, i32
  }
  func.func @transform_6(%arg0: i32, %arg1: i32) -> (i32, i32) {
    %c0_i32 = arith.constant 0 : i32
    %c0_i32_0 = arith.constant 0 : i32
    %c0_i32_1 = arith.constant 0 : i32
    return %c0_i32, %c0_i32_0 : i32, i32
  }
  func.func @transform_7(%arg0: i32, %arg1: i32) -> (i32, i32) {
    %c0_i32 = arith.constant 0 : i32
    %c0_i32_0 = arith.constant 0 : i32
    %c0_i32_1 = arith.constant 0 : i32
    return %c0_i32, %c0_i32_0 : i32, i32
  }
  func.func @transform_8(%arg0: i32, %arg1: i32) -> (i32, i32) {
    %c0_i32 = arith.constant 0 : i32
    %c0_i32_0 = arith.constant 0 : i32
    %c0_i32_1 = arith.constant 0 : i32
    return %c0_i32, %c0_i32_0 : i32, i32
  }
  func.func @transform_9(%arg0: i32, %arg1: i32) -> (i32, i32) {
    %c0_i32 = arith.constant 0 : i32
    %c0_i32_0 = arith.constant 0 : i32
    %c0_i32_1 = arith.constant 0 : i32
    return %c0_i32, %c0_i32_0 : i32, i32
  }
  func.func @transform_10(%arg0: i32, %arg1: i32) -> (i32, i32) {
    %c0_i32 = arith.constant 0 : i32
    %c0_i32_0 = arith.constant 0 : i32
    %c0_i32_1 = arith.constant 0 : i32
    return %c0_i32, %c0_i32_0 : i32, i32
  }
  func.func @transform_11(%arg0: i32, %arg1: i32) -> (i32, i32) {
    %c0_i32 = arith.constant 0 : i32
    %c0_i32_0 = arith.constant 0 : i32
    %c0_i32_1 = arith.constant 0 : i32
    return %c0_i32, %c0_i32_0 : i32, i32
  }
  func.func @transform_12(%arg0: i32, %arg1: i32) -> (i32, i32, i32) {
    %c0_i32 = arith.constant 0 : i32
    %c0_i32_0 = arith.constant 0 : i32
    return %arg0, %arg1, %c0_i32 : i32, i32, i32
  }
}

module attributes {stable_mosaic.version = 11 : i64} {
  func.func @_ffn_ln_kernel(%arg0: i32, %arg1: memref<16x32xbf16, #tpu.memory_space<vmem>>, %arg2: memref<32x64xbf16, #tpu.memory_space<vmem>>, %arg3: memref<1x64xf32, #tpu.memory_space<vmem>>, %arg4: memref<64x32xbf16, #tpu.memory_space<vmem>>, %arg5: memref<1x32xf32, #tpu.memory_space<vmem>>, %arg6: memref<1x32xf32, #tpu.memory_space<vmem>>, %arg7: memref<1x32xf32, #tpu.memory_space<vmem>>, %arg8: memref<16x32xbf16, #tpu.memory_space<vmem>>) attributes {dimension_semantics = [#tpu.dimension_semantics<parallel>], iteration_bounds = array<i64: 1>, scalar_prefetch = 0 : i64, scratch_operands = 0 : i64, tpu.core_type = #tpu.core_type<tc>, window_params = [{transform_indices = @transform_0, window_bounds = array<i64: 16, 32>}, {pipeline_mode = #tpu.pipeline_mode<synchronous>, transform_indices = @transform_1, window_bounds = array<i64: 32, 64>}, {pipeline_mode = #tpu.pipeline_mode<synchronous>, transform_indices = @transform_2, window_bounds = array<i64: 1, 64>}, {pipeline_mode = #tpu.pipeline_mode<synchronous>, transform_indices = @transform_3, window_bounds = array<i64: 64, 32>}, {pipeline_mode = #tpu.pipeline_mode<synchronous>, transform_indices = @transform_4, window_bounds = array<i64: 1, 32>}, {pipeline_mode = #tpu.pipeline_mode<synchronous>, transform_indices = @transform_5, window_bounds = array<i64: 1, 32>}, {pipeline_mode = #tpu.pipeline_mode<synchronous>, transform_indices = @transform_6, window_bounds = array<i64: 1, 32>}, {transform_indices = @transform_7, window_bounds = array<i64: 16, 32>}]} {
    %c0 = arith.constant 0 : index
    %c0_0 = arith.constant 0 : index
    %0 = vector.load %arg1[%c0, %c0_0] : memref<16x32xbf16, #tpu.memory_space<vmem>>, vector<16x32xbf16>
    %c0_1 = arith.constant 0 : index
    %c0_2 = arith.constant 0 : index
    %1 = vector.load %arg2[%c0_1, %c0_2] : memref<32x64xbf16, #tpu.memory_space<vmem>>, vector<32x64xbf16>
    %cst = arith.constant dense<0.000000e+00> : vector<16x64xf32>
    %2 = tpu.matmul %0, %1, %cst {dimension_numbers = #tpu.dot_dimension_numbers<[1], [0], [0], [1], [0, 0, 1, 1], [], []>} : vector<16x32xbf16>, vector<32x64xbf16>, vector<16x64xf32> -> vector<16x64xf32>
    %c0_3 = arith.constant 0 : index
    %c0_4 = arith.constant 0 : index
    %3 = vector.load %arg3[%c0_3, %c0_4] : memref<1x64xf32, #tpu.memory_space<vmem>>, vector<1x64xf32>
    %4 = vector.broadcast %3 : vector<1x64xf32> to vector<16x64xf32>
    %5 = arith.addf %2, %4 : vector<16x64xf32>
    %cst_5 = arith.constant 0.000000e+00 : f32
    %6 = vector.broadcast %cst_5 : f32 to vector<16x64xf32>
    %7 = arith.maximumf %5, %6 : vector<16x64xf32>
    %8 = arith.truncf %7 : vector<16x64xf32> to vector<16x64xbf16>
    %c0_6 = arith.constant 0 : index
    %c0_7 = arith.constant 0 : index
    %9 = vector.load %arg4[%c0_6, %c0_7] : memref<64x32xbf16, #tpu.memory_space<vmem>>, vector<64x32xbf16>
    %cst_8 = arith.constant dense<0.000000e+00> : vector<16x32xf32>
    %10 = tpu.matmul %8, %9, %cst_8 {dimension_numbers = #tpu.dot_dimension_numbers<[1], [0], [0], [1], [0, 0, 1, 1], [], []>} : vector<16x64xbf16>, vector<64x32xbf16>, vector<16x32xf32> -> vector<16x32xf32>
    %c0_9 = arith.constant 0 : index
    %c0_10 = arith.constant 0 : index
    %11 = vector.load %arg5[%c0_9, %c0_10] : memref<1x32xf32, #tpu.memory_space<vmem>>, vector<1x32xf32>
    %12 = vector.broadcast %11 : vector<1x32xf32> to vector<16x32xf32>
    %13 = arith.addf %10, %12 : vector<16x32xf32>
    %14 = arith.extf %0 : vector<16x32xbf16> to vector<16x32xf32>
    %15 = arith.addf %14, %13 : vector<16x32xf32>
    %c0_11 = arith.constant 0 : index
    %c0_12 = arith.constant 0 : index
    %16 = vector.load %arg6[%c0_11, %c0_12] : memref<1x32xf32, #tpu.memory_space<vmem>>, vector<1x32xf32>
    %c0_13 = arith.constant 0 : index
    %c0_14 = arith.constant 0 : index
    %17 = vector.load %arg7[%c0_13, %c0_14] : memref<1x32xf32, #tpu.memory_space<vmem>>, vector<1x32xf32>
    %cst_15 = arith.constant dense<0.000000e+00> : vector<16xf32>
    %18 = vector.multi_reduction <add>, %15, %cst_15 [1] : vector<16x32xf32> to vector<16xf32>
    %19 = vector.shape_cast %18 : vector<16xf32> to vector<16x1xf32>
    %cst_16 = arith.constant 3.200000e+01 : f32
    %20 = vector.broadcast %cst_16 : f32 to vector<16x1xf32>
    %21 = arith.divf %19, %20 : vector<16x1xf32>
    %22 = vector.broadcast %21 : vector<16x1xf32> to vector<16x32xf32>
    %23 = arith.subf %15, %22 : vector<16x32xf32>
    %24 = arith.mulf %23, %23 : vector<16x32xf32>
    %cst_17 = arith.constant dense<0.000000e+00> : vector<16xf32>
    %25 = vector.multi_reduction <add>, %24, %cst_17 [1] : vector<16x32xf32> to vector<16xf32>
    %26 = vector.shape_cast %25 : vector<16xf32> to vector<16x1xf32>
    %cst_18 = arith.constant 3.200000e+01 : f32
    %27 = vector.broadcast %cst_18 : f32 to vector<16x1xf32>
    %28 = arith.divf %26, %27 : vector<16x1xf32>
    %cst_19 = arith.constant 9.99999974E-6 : f32
    %29 = vector.broadcast %cst_19 : f32 to vector<16x1xf32>
    %30 = arith.addf %28, %29 : vector<16x1xf32>
    %31 = math.rsqrt %30 : vector<16x1xf32>
    %32 = vector.broadcast %31 : vector<16x1xf32> to vector<16x32xf32>
    %33 = arith.mulf %23, %32 : vector<16x32xf32>
    %34 = vector.broadcast %16 : vector<1x32xf32> to vector<16x32xf32>
    %35 = arith.mulf %33, %34 : vector<16x32xf32>
    %36 = vector.broadcast %17 : vector<1x32xf32> to vector<16x32xf32>
    %37 = arith.addf %35, %36 : vector<16x32xf32>
    %38 = arith.truncf %37 : vector<16x32xf32> to vector<16x32xbf16>
    %c0_20 = arith.constant 0 : index
    %c0_21 = arith.constant 0 : index
    %39 = vector.load %arg8[%c0_20, %c0_21] : memref<16x32xbf16, #tpu.memory_space<vmem>>, vector<16x32xbf16>
    tpu.vector_store %arg8[%c0_20, %c0_21], %38 {strides = array<i32>} : memref<16x32xbf16, #tpu.memory_space<vmem>>, vector<16x32xbf16>,
    return
  }
  func.func @transform_0(%arg0: i32) -> (i32, i32) {
    %c0_i32 = arith.constant 0 : i32
    %c0_i32_0 = arith.constant 0 : i32
    return %arg0, %c0_i32 : i32, i32
  }
  func.func @transform_1(%arg0: i32) -> (i32, i32) {
    %c0_i32 = arith.constant 0 : i32
    %c0_i32_0 = arith.constant 0 : i32
    %c0_i32_1 = arith.constant 0 : i32
    return %c0_i32, %c0_i32_0 : i32, i32
  }
  func.func @transform_2(%arg0: i32) -> (i32, i32) {
    %c0_i32 = arith.constant 0 : i32
    %c0_i32_0 = arith.constant 0 : i32
    %c0_i32_1 = arith.constant 0 : i32
    return %c0_i32, %c0_i32_0 : i32, i32
  }
  func.func @transform_3(%arg0: i32) -> (i32, i32) {
    %c0_i32 = arith.constant 0 : i32
    %c0_i32_0 = arith.constant 0 : i32
    %c0_i32_1 = arith.constant 0 : i32
    return %c0_i32, %c0_i32_0 : i32, i32
  }
  func.func @transform_4(%arg0: i32) -> (i32, i32) {
    %c0_i32 = arith.constant 0 : i32
    %c0_i32_0 = arith.constant 0 : i32
    %c0_i32_1 = arith.constant 0 : i32
    return %c0_i32, %c0_i32_0 : i32, i32
  }
  func.func @transform_5(%arg0: i32) -> (i32, i32) {
    %c0_i32 = arith.constant 0 : i32
    %c0_i32_0 = arith.constant 0 : i32
    %c0_i32_1 = arith.constant 0 : i32
    return %c0_i32, %c0_i32_0 : i32, i32
  }
  func.func @transform_6(%arg0: i32) -> (i32, i32) {
    %c0_i32 = arith.constant 0 : i32
    %c0_i32_0 = arith.constant 0 : i32
    %c0_i32_1 = arith.constant 0 : i32
    return %c0_i32, %c0_i32_0 : i32, i32
  }
  func.func @transform_7(%arg0: i32) -> (i32, i32) {
    %c0_i32 = arith.constant 0 : i32
    %c0_i32_0 = arith.constant 0 : i32
    return %arg0, %c0_i32 : i32, i32
  }
}

module attributes {stable_mosaic.version = 11 : i64} {
  func.func @_ffn_ln_kernel(%arg0: i32, %arg1: memref<16x32xbf16, #tpu.memory_space<vmem>>, %arg2: memref<32x64xbf16, #tpu.memory_space<vmem>>, %arg3: memref<1x64xf32, #tpu.memory_space<vmem>>, %arg4: memref<64x32xbf16, #tpu.memory_space<vmem>>, %arg5: memref<1x32xf32, #tpu.memory_space<vmem>>, %arg6: memref<1x32xf32, #tpu.memory_space<vmem>>, %arg7: memref<1x32xf32, #tpu.memory_space<vmem>>, %arg8: memref<1x32xf32, #tpu.memory_space<vmem>>, %arg9: memref<1x32xf32, #tpu.memory_space<vmem>>, %arg10: memref<16x32xbf16, #tpu.memory_space<vmem>>) attributes {dimension_semantics = [#tpu.dimension_semantics<parallel>], iteration_bounds = array<i64: 1>, scalar_prefetch = 0 : i64, scratch_operands = 0 : i64, tpu.core_type = #tpu.core_type<tc>, window_params = [{transform_indices = @transform_0, window_bounds = array<i64: 16, 32>}, {pipeline_mode = #tpu.pipeline_mode<synchronous>, transform_indices = @transform_1, window_bounds = array<i64: 32, 64>}, {pipeline_mode = #tpu.pipeline_mode<synchronous>, transform_indices = @transform_2, window_bounds = array<i64: 1, 64>}, {pipeline_mode = #tpu.pipeline_mode<synchronous>, transform_indices = @transform_3, window_bounds = array<i64: 64, 32>}, {pipeline_mode = #tpu.pipeline_mode<synchronous>, transform_indices = @transform_4, window_bounds = array<i64: 1, 32>}, {pipeline_mode = #tpu.pipeline_mode<synchronous>, transform_indices = @transform_5, window_bounds = array<i64: 1, 32>}, {pipeline_mode = #tpu.pipeline_mode<synchronous>, transform_indices = @transform_6, window_bounds = array<i64: 1, 32>}, {pipeline_mode = #tpu.pipeline_mode<synchronous>, transform_indices = @transform_7, window_bounds = array<i64: 1, 32>}, {pipeline_mode = #tpu.pipeline_mode<synchronous>, transform_indices = @transform_8, window_bounds = array<i64: 1, 32>}, {transform_indices = @transform_9, window_bounds = array<i64: 16, 32>}]} {
    %c0 = arith.constant 0 : index
    %c0_0 = arith.constant 0 : index
    %0 = vector.load %arg1[%c0, %c0_0] : memref<16x32xbf16, #tpu.memory_space<vmem>>, vector<16x32xbf16>
    %c0_1 = arith.constant 0 : index
    %c0_2 = arith.constant 0 : index
    %1 = vector.load %arg2[%c0_1, %c0_2] : memref<32x64xbf16, #tpu.memory_space<vmem>>, vector<32x64xbf16>
    %cst = arith.constant dense<0.000000e+00> : vector<16x64xf32>
    %2 = tpu.matmul %0, %1, %cst {dimension_numbers = #tpu.dot_dimension_numbers<[1], [0], [0], [1], [0, 0, 1, 1], [], []>} : vector<16x32xbf16>, vector<32x64xbf16>, vector<16x64xf32> -> vector<16x64xf32>
    %c0_3 = arith.constant 0 : index
    %c0_4 = arith.constant 0 : index
    %3 = vector.load %arg3[%c0_3, %c0_4] : memref<1x64xf32, #tpu.memory_space<vmem>>, vector<1x64xf32>
    %4 = vector.broadcast %3 : vector<1x64xf32> to vector<16x64xf32>
    %5 = arith.addf %2, %4 : vector<16x64xf32>
    %cst_5 = arith.constant 0.000000e+00 : f32
    %6 = vector.broadcast %cst_5 : f32 to vector<16x64xf32>
    %7 = arith.maximumf %5, %6 : vector<16x64xf32>
    %8 = arith.truncf %7 : vector<16x64xf32> to vector<16x64xbf16>
    %c0_6 = arith.constant 0 : index
    %c0_7 = arith.constant 0 : index
    %9 = vector.load %arg4[%c0_6, %c0_7] : memref<64x32xbf16, #tpu.memory_space<vmem>>, vector<64x32xbf16>
    %cst_8 = arith.constant dense<0.000000e+00> : vector<16x32xf32>
    %10 = tpu.matmul %8, %9, %cst_8 {dimension_numbers = #tpu.dot_dimension_numbers<[1], [0], [0], [1], [0, 0, 1, 1], [], []>} : vector<16x64xbf16>, vector<64x32xbf16>, vector<16x32xf32> -> vector<16x32xf32>
    %c0_9 = arith.constant 0 : index
    %c0_10 = arith.constant 0 : index
    %11 = vector.load %arg5[%c0_9, %c0_10] : memref<1x32xf32, #tpu.memory_space<vmem>>, vector<1x32xf32>
    %12 = vector.broadcast %11 : vector<1x32xf32> to vector<16x32xf32>
    %13 = arith.addf %10, %12 : vector<16x32xf32>
    %14 = arith.extf %0 : vector<16x32xbf16> to vector<16x32xf32>
    %15 = arith.addf %14, %13 : vector<16x32xf32>
    %c0_11 = arith.constant 0 : index
    %c0_12 = arith.constant 0 : index
    %16 = vector.load %arg6[%c0_11, %c0_12] : memref<1x32xf32, #tpu.memory_space<vmem>>, vector<1x32xf32>
    %c0_13 = arith.constant 0 : index
    %c0_14 = arith.constant 0 : index
    %17 = vector.load %arg7[%c0_13, %c0_14] : memref<1x32xf32, #tpu.memory_space<vmem>>, vector<1x32xf32>
    %cst_15 = arith.constant dense<0.000000e+00> : vector<16xf32>
    %18 = vector.multi_reduction <add>, %15, %cst_15 [1] : vector<16x32xf32> to vector<16xf32>
    %19 = vector.shape_cast %18 : vector<16xf32> to vector<16x1xf32>
    %cst_16 = arith.constant 3.200000e+01 : f32
    %20 = vector.broadcast %cst_16 : f32 to vector<16x1xf32>
    %21 = arith.divf %19, %20 : vector<16x1xf32>
    %22 = vector.broadcast %21 : vector<16x1xf32> to vector<16x32xf32>
    %23 = arith.subf %15, %22 : vector<16x32xf32>
    %24 = arith.mulf %23, %23 : vector<16x32xf32>
    %cst_17 = arith.constant dense<0.000000e+00> : vector<16xf32>
    %25 = vector.multi_reduction <add>, %24, %cst_17 [1] : vector<16x32xf32> to vector<16xf32>
    %26 = vector.shape_cast %25 : vector<16xf32> to vector<16x1xf32>
    %cst_18 = arith.constant 3.200000e+01 : f32
    %27 = vector.broadcast %cst_18 : f32 to vector<16x1xf32>
    %28 = arith.divf %26, %27 : vector<16x1xf32>
    %cst_19 = arith.constant 9.99999974E-6 : f32
    %29 = vector.broadcast %cst_19 : f32 to vector<16x1xf32>
    %30 = arith.addf %28, %29 : vector<16x1xf32>
    %31 = math.rsqrt %30 : vector<16x1xf32>
    %32 = vector.broadcast %31 : vector<16x1xf32> to vector<16x32xf32>
    %33 = arith.mulf %23, %32 : vector<16x32xf32>
    %34 = vector.broadcast %16 : vector<1x32xf32> to vector<16x32xf32>
    %35 = arith.mulf %33, %34 : vector<16x32xf32>
    %36 = vector.broadcast %17 : vector<1x32xf32> to vector<16x32xf32>
    %37 = arith.addf %35, %36 : vector<16x32xf32>
    %c0_20 = arith.constant 0 : index
    %c0_21 = arith.constant 0 : index
    %38 = vector.load %arg8[%c0_20, %c0_21] : memref<1x32xf32, #tpu.memory_space<vmem>>, vector<1x32xf32>
    %c0_22 = arith.constant 0 : index
    %c0_23 = arith.constant 0 : index
    %39 = vector.load %arg9[%c0_22, %c0_23] : memref<1x32xf32, #tpu.memory_space<vmem>>, vector<1x32xf32>
    %cst_24 = arith.constant dense<0.000000e+00> : vector<16xf32>
    %40 = vector.multi_reduction <add>, %37, %cst_24 [1] : vector<16x32xf32> to vector<16xf32>
    %41 = vector.shape_cast %40 : vector<16xf32> to vector<16x1xf32>
    %cst_25 = arith.constant 3.200000e+01 : f32
    %42 = vector.broadcast %cst_25 : f32 to vector<16x1xf32>
    %43 = arith.divf %41, %42 : vector<16x1xf32>
    %44 = vector.broadcast %43 : vector<16x1xf32> to vector<16x32xf32>
    %45 = arith.subf %37, %44 : vector<16x32xf32>
    %46 = arith.mulf %45, %45 : vector<16x32xf32>
    %cst_26 = arith.constant dense<0.000000e+00> : vector<16xf32>
    %47 = vector.multi_reduction <add>, %46, %cst_26 [1] : vector<16x32xf32> to vector<16xf32>
    %48 = vector.shape_cast %47 : vector<16xf32> to vector<16x1xf32>
    %cst_27 = arith.constant 3.200000e+01 : f32
    %49 = vector.broadcast %cst_27 : f32 to vector<16x1xf32>
    %50 = arith.divf %48, %49 : vector<16x1xf32>
    %cst_28 = arith.constant 9.99999974E-6 : f32
    %51 = vector.broadcast %cst_28 : f32 to vector<16x1xf32>
    %52 = arith.addf %50, %51 : vector<16x1xf32>
    %53 = math.rsqrt %52 : vector<16x1xf32>
    %54 = vector.broadcast %53 : vector<16x1xf32> to vector<16x32xf32>
    %55 = arith.mulf %45, %54 : vector<16x32xf32>
    %56 = vector.broadcast %38 : vector<1x32xf32> to vector<16x32xf32>
    %57 = arith.mulf %55, %56 : vector<16x32xf32>
    %58 = vector.broadcast %39 : vector<1x32xf32> to vector<16x32xf32>
    %59 = arith.addf %57, %58 : vector<16x32xf32>
    %60 = arith.truncf %59 : vector<16x32xf32> to vector<16x32xbf16>
    %c0_29 = arith.constant 0 : index
    %c0_30 = arith.constant 0 : index
    %61 = vector.load %arg10[%c0_29, %c0_30] : memref<16x32xbf16, #tpu.memory_space<vmem>>, vector<16x32xbf16>
    tpu.vector_store %arg10[%c0_29, %c0_30], %60 {strides = array<i32>} : memref<16x32xbf16, #tpu.memory_space<vmem>>, vector<16x32xbf16>,
    return
  }
  func.func @transform_0(%arg0: i32) -> (i32, i32) {
    %c0_i32 = arith.constant 0 : i32
    %c0_i32_0 = arith.constant 0 : i32
    return %arg0, %c0_i32 : i32, i32
  }
  func.func @transform_1(%arg0: i32) -> (i32, i32) {
    %c0_i32 = arith.constant 0 : i32
    %c0_i32_0 = arith.constant 0 : i32
    %c0_i32_1 = arith.constant 0 : i32
    return %c0_i32, %c0_i32_0 : i32, i32
  }
  func.func @transform_2(%arg0: i32) -> (i32, i32) {
    %c0_i32 = arith.constant 0 : i32
    %c0_i32_0 = arith.constant 0 : i32
    %c0_i32_1 = arith.constant 0 : i32
    return %c0_i32, %c0_i32_0 : i32, i32
  }
  func.func @transform_3(%arg0: i32) -> (i32, i32) {
    %c0_i32 = arith.constant 0 : i32
    %c0_i32_0 = arith.constant 0 : i32
    %c0_i32_1 = arith.constant 0 : i32
    return %c0_i32, %c0_i32_0 : i32, i32
  }
  func.func @transform_4(%arg0: i32) -> (i32, i32) {
    %c0_i32 = arith.constant 0 : i32
    %c0_i32_0 = arith.constant 0 : i32
    %c0_i32_1 = arith.constant 0 : i32
    return %c0_i32, %c0_i32_0 : i32, i32
  }
  func.func @transform_5(%arg0: i32) -> (i32, i32) {
    %c0_i32 = arith.constant 0 : i32
    %c0_i32_0 = arith.constant 0 : i32
    %c0_i32_1 = arith.constant 0 : i32
    return %c0_i32, %c0_i32_0 : i32, i32
  }
  func.func @transform_6(%arg0: i32) -> (i32, i32) {
    %c0_i32 = arith.constant 0 : i32
    %c0_i32_0 = arith.constant 0 : i32
    %c0_i32_1 = arith.constant 0 : i32
    return %c0_i32, %c0_i32_0 : i32, i32
  }
  func.func @transform_7(%arg0: i32) -> (i32, i32) {
    %c0_i32 = arith.constant 0 : i32
    %c0_i32_0 = arith.constant 0 : i32
    %c0_i32_1 = arith.constant 0 : i32
    return %c0_i32, %c0_i32_0 : i32, i32
  }
  func.func @transform_8(%arg0: i32) -> (i32, i32) {
    %c0_i32 = arith.constant 0 : i32
    %c0_i32_0 = arith.constant 0 : i32
    %c0_i32_1 = arith.constant 0 : i32
    return %c0_i32, %c0_i32_0 : i32, i32
  }
  func.func @transform_9(%arg0: i32) -> (i32, i32) {
    %c0_i32 = arith.constant 0 : i32
    %c0_i32_0 = arith.constant 0 : i32
    return %arg0, %c0_i32 : i32, i32
  }
}

module attributes {stable_mosaic.version = 11 : i64} {
  func.func @_mlp_head_kernel(%arg0: i32, %arg1: memref<16x32xbf16, #tpu.memory_space<vmem>>, %arg2: memref<32x64xbf16, #tpu.memory_space<vmem>>, %arg3: memref<1x64xf32, #tpu.memory_space<vmem>>, %arg4: memref<64x128xbf16, #tpu.memory_space<vmem>>, %arg5: memref<1x128xf32, #tpu.memory_space<vmem>>, %arg6: memref<16x128xf32, #tpu.memory_space<vmem>>) attributes {dimension_semantics = [#tpu.dimension_semantics<parallel>], iteration_bounds = array<i64: 1>, scalar_prefetch = 0 : i64, scratch_operands = 0 : i64, tpu.core_type = #tpu.core_type<tc>, window_params = [{transform_indices = @transform_0, window_bounds = array<i64: 16, 32>}, {pipeline_mode = #tpu.pipeline_mode<synchronous>, transform_indices = @transform_1, window_bounds = array<i64: 32, 64>}, {pipeline_mode = #tpu.pipeline_mode<synchronous>, transform_indices = @transform_2, window_bounds = array<i64: 1, 64>}, {pipeline_mode = #tpu.pipeline_mode<synchronous>, transform_indices = @transform_3, window_bounds = array<i64: 64, 128>}, {pipeline_mode = #tpu.pipeline_mode<synchronous>, transform_indices = @transform_4, window_bounds = array<i64: 1, 128>}, {transform_indices = @transform_5, window_bounds = array<i64: 16, 128>}]} {
    %c0 = arith.constant 0 : index
    %c0_0 = arith.constant 0 : index
    %0 = vector.load %arg1[%c0, %c0_0] : memref<16x32xbf16, #tpu.memory_space<vmem>>, vector<16x32xbf16>
    %c0_1 = arith.constant 0 : index
    %c0_2 = arith.constant 0 : index
    %1 = vector.load %arg2[%c0_1, %c0_2] : memref<32x64xbf16, #tpu.memory_space<vmem>>, vector<32x64xbf16>
    %cst = arith.constant dense<0.000000e+00> : vector<16x64xf32>
    %2 = tpu.matmul %0, %1, %cst {dimension_numbers = #tpu.dot_dimension_numbers<[1], [0], [0], [1], [0, 0, 1, 1], [], []>} : vector<16x32xbf16>, vector<32x64xbf16>, vector<16x64xf32> -> vector<16x64xf32>
    %c0_3 = arith.constant 0 : index
    %c0_4 = arith.constant 0 : index
    %3 = vector.load %arg3[%c0_3, %c0_4] : memref<1x64xf32, #tpu.memory_space<vmem>>, vector<1x64xf32>
    %4 = vector.broadcast %3 : vector<1x64xf32> to vector<16x64xf32>
    %5 = arith.addf %2, %4 : vector<16x64xf32>
    %cst_5 = arith.constant 0.000000e+00 : f32
    %6 = vector.broadcast %cst_5 : f32 to vector<16x64xf32>
    %7 = arith.maximumf %5, %6 : vector<16x64xf32>
    %8 = arith.truncf %7 : vector<16x64xf32> to vector<16x64xbf16>
    %c0_6 = arith.constant 0 : index
    %c0_7 = arith.constant 0 : index
    %9 = vector.load %arg4[%c0_6, %c0_7] : memref<64x128xbf16, #tpu.memory_space<vmem>>, vector<64x128xbf16>
    %cst_8 = arith.constant dense<0.000000e+00> : vector<16x128xf32>
    %10 = tpu.matmul %8, %9, %cst_8 {dimension_numbers = #tpu.dot_dimension_numbers<[1], [0], [0], [1], [0, 0, 1, 1], [], []>} : vector<16x64xbf16>, vector<64x128xbf16>, vector<16x128xf32> -> vector<16x128xf32>
    %c0_9 = arith.constant 0 : index
    %c0_10 = arith.constant 0 : index
    %11 = vector.load %arg5[%c0_9, %c0_10] : memref<1x128xf32, #tpu.memory_space<vmem>>, vector<1x128xf32>
    %12 = vector.broadcast %11 : vector<1x128xf32> to vector<16x128xf32>
    %13 = arith.addf %10, %12 : vector<16x128xf32>
    %c0_11 = arith.constant 0 : index
    %c0_12 = arith.constant 0 : index
    %14 = vector.load %arg6[%c0_11, %c0_12] : memref<16x128xf32, #tpu.memory_space<vmem>>, vector<16x128xf32>
    tpu.vector_store %arg6[%c0_11, %c0_12], %13 {strides = array<i32>} : memref<16x128xf32, #tpu.memory_space<vmem>>, vector<16x128xf32>,
    return
  }
  func.func @transform_0(%arg0: i32) -> (i32, i32) {
    %c0_i32 = arith.constant 0 : i32
    %c0_i32_0 = arith.constant 0 : i32
    return %arg0, %c0_i32 : i32, i32
  }
  func.func @transform_1(%arg0: i32) -> (i32, i32) {
    %c0_i32 = arith.constant 0 : i32
    %c0_i32_0 = arith.constant 0 : i32
    %c0_i32_1 = arith.constant 0 : i32
    return %c0_i32, %c0_i32_0 : i32, i32
  }
  func.func @transform_2(%arg0: i32) -> (i32, i32) {
    %c0_i32 = arith.constant 0 : i32
    %c0_i32_0 = arith.constant 0 : i32
    %c0_i32_1 = arith.constant 0 : i32
    return %c0_i32, %c0_i32_0 : i32, i32
  }
  func.func @transform_3(%arg0: i32) -> (i32, i32) {
    %c0_i32 = arith.constant 0 : i32
    %c0_i32_0 = arith.constant 0 : i32
    %c0_i32_1 = arith.constant 0 : i32
    return %c0_i32, %c0_i32_0 : i32, i32
  }
  func.func @transform_4(%arg0: i32) -> (i32, i32) {
    %c0_i32 = arith.constant 0 : i32
    %c0_i32_0 = arith.constant 0 : i32
    %c0_i32_1 = arith.constant 0 : i32
    return %c0_i32, %c0_i32_0 : i32, i32
  }
  func.func @transform_5(%arg0: i32) -> (i32, i32) {
    %c0_i32 = arith.constant 0 : i32
    %c0_i32_0 = arith.constant 0 : i32
    return %arg0, %c0_i32 : i32, i32
  }
}

module attributes {stable_mosaic.version = 11 : i64} {
  func.func @_mha_kernel(%arg0: i32, %arg1: i32, %arg2: memref<1x8x32xbf16, #tpu.memory_space<vmem>>, %arg3: memref<1x8x32xbf16, #tpu.memory_space<vmem>>, %arg4: memref<32x32xbf16, #tpu.memory_space<vmem>>, %arg5: memref<32x32xbf16, #tpu.memory_space<vmem>>, %arg6: memref<32x32xbf16, #tpu.memory_space<vmem>>, %arg7: memref<32x32xbf16, #tpu.memory_space<vmem>>, %arg8: memref<1x32xf32, #tpu.memory_space<vmem>>, %arg9: memref<1x32xf32, #tpu.memory_space<vmem>>, %arg10: memref<1x32xf32, #tpu.memory_space<vmem>>, %arg11: memref<1x32xf32, #tpu.memory_space<vmem>>, %arg12: memref<1x32xf32, #tpu.memory_space<vmem>>, %arg13: memref<1x32xf32, #tpu.memory_space<vmem>>, %arg14: memref<1x8x32xbf16, #tpu.memory_space<vmem>>, %arg15: memref<8x32xbf16, #tpu.memory_space<vmem>>, %arg16: memref<8x32xbf16, #tpu.memory_space<vmem>>, %arg17: memref<8x32xf32, #tpu.memory_space<vmem>>) attributes {dimension_semantics = [#tpu.dimension_semantics<parallel>, #tpu.dimension_semantics<arbitrary>], iteration_bounds = array<i64: 2, 1>, scalar_prefetch = 0 : i64, scratch_operands = 3 : i64, tpu.core_type = #tpu.core_type<tc>, window_params = [{transform_indices = @transform_0, window_bounds = array<i64: 1, 8, 32>}, {transform_indices = @transform_1, window_bounds = array<i64: 1, 8, 32>}, {pipeline_mode = #tpu.pipeline_mode<synchronous>, transform_indices = @transform_2, window_bounds = array<i64: 32, 32>}, {pipeline_mode = #tpu.pipeline_mode<synchronous>, transform_indices = @transform_3, window_bounds = array<i64: 32, 32>}, {pipeline_mode = #tpu.pipeline_mode<synchronous>, transform_indices = @transform_4, window_bounds = array<i64: 32, 32>}, {pipeline_mode = #tpu.pipeline_mode<synchronous>, transform_indices = @transform_5, window_bounds = array<i64: 32, 32>}, {pipeline_mode = #tpu.pipeline_mode<synchronous>, transform_indices = @transform_6, window_bounds = array<i64: 1, 32>}, {pipeline_mode = #tpu.pipeline_mode<synchronous>, transform_indices = @transform_7, window_bounds = array<i64: 1, 32>}, {pipeline_mode = #tpu.pipeline_mode<synchronous>, transform_indices = @transform_8, window_bounds = array<i64: 1, 32>}, {pipeline_mode = #tpu.pipeline_mode<synchronous>, transform_indices = @transform_9, window_bounds = array<i64: 1, 32>}, {pipeline_mode = #tpu.pipeline_mode<synchronous>, transform_indices = @transform_10, window_bounds = array<i64: 1, 32>}, {pipeline_mode = #tpu.pipeline_mode<synchronous>, transform_indices = @transform_11, window_bounds = array<i64: 1, 32>}, {transform_indices = @transform_12, window_bounds = array<i64: 1, 8, 32>}]} {
    %c0_i32 = arith.constant 0 : i32
    %0 = arith.cmpi eq, %arg1, %c0_i32 : i32
    %1 = arith.extui %0 : i1 to i32
    %c0_i32_0 = arith.constant 0 : i32
    %2 = arith.cmpi ne, %1, %c0_i32_0 : i32
    scf.if %2 {
      %c0_52 = arith.constant 0 : index
      %c0_53 = arith.constant 0 : index
      %c0_54 = arith.constant 0 : index
      %118 = vector.load %arg3[%c0_52, %c0_53, %c0_54] : memref<1x8x32xbf16, #tpu.memory_space<vmem>>, vector<1x8x32xbf16>
      %119 = vector.shape_cast %118 : vector<1x8x32xbf16> to vector<8x32xbf16>
      %c0_55 = arith.constant 0 : index
      %c0_56 = arith.constant 0 : index
      %120 = vector.load %arg5[%c0_55, %c0_56] : memref<32x32xbf16, #tpu.memory_space<vmem>>, vector<32x32xbf16>
      %cst_57 = arith.constant dense<0.000000e+00> : vector<8x32xf32>
      %121 = tpu.matmul %119, %120, %cst_57 {dimension_numbers = #tpu.dot_dimension_numbers<[1], [0], [0], [1], [0, 0, 1, 1], [], []>} : vector<8x32xbf16>, vector<32x32xbf16>, vector<8x32xf32> -> vector<8x32xf32>
      %c0_58 = arith.constant 0 : index
      %c0_59 = arith.constant 0 : index
      %122 = vector.load %arg9[%c0_58, %c0_59] : memref<1x32xf32, #tpu.memory_space<vmem>>, vector<1x32xf32>
      %123 = vector.broadcast %122 : vector<1x32xf32> to vector<8x32xf32>
      %124 = arith.addf %121, %123 : vector<8x32xf32>
      %c0_60 = arith.constant 0 : index
      %c0_61 = arith.constant 0 : index
      %125 = vector.load %arg6[%c0_60, %c0_61] : memref<32x32xbf16, #tpu.memory_space<vmem>>, vector<32x32xbf16>
      %cst_62 = arith.constant dense<0.000000e+00> : vector<8x32xf32>
      %126 = tpu.matmul %119, %125, %cst_62 {dimension_numbers = #tpu.dot_dimension_numbers<[1], [0], [0], [1], [0, 0, 1, 1], [], []>} : vector<8x32xbf16>, vector<32x32xbf16>, vector<8x32xf32> -> vector<8x32xf32>
      %c0_63 = arith.constant 0 : index
      %c0_64 = arith.constant 0 : index
      %127 = vector.load %arg10[%c0_63, %c0_64] : memref<1x32xf32, #tpu.memory_space<vmem>>, vector<1x32xf32>
      %128 = vector.broadcast %127 : vector<1x32xf32> to vector<8x32xf32>
      %129 = arith.addf %126, %128 : vector<8x32xf32>
      %130 = arith.truncf %124 : vector<8x32xf32> to vector<8x32xbf16>
      %c0_65 = arith.constant 0 : index
      %c0_66 = arith.constant 0 : index
      %131 = vector.load %arg15[%c0_65, %c0_66] : memref<8x32xbf16, #tpu.memory_space<vmem>>, vector<8x32xbf16>
      tpu.vector_store %arg15[%c0_65, %c0_66], %130 {strides = array<i32>} : memref<8x32xbf16, #tpu.memory_space<vmem>>, vector<8x32xbf16>,
      %132 = arith.truncf %129 : vector<8x32xf32> to vector<8x32xbf16>
      %c0_67 = arith.constant 0 : index
      %c0_68 = arith.constant 0 : index
      %133 = vector.load %arg16[%c0_67, %c0_68] : memref<8x32xbf16, #tpu.memory_space<vmem>>, vector<8x32xbf16>
      tpu.vector_store %arg16[%c0_67, %c0_68], %132 {strides = array<i32>} : memref<8x32xbf16, #tpu.memory_space<vmem>>, vector<8x32xbf16>,
    } else {
    }
    %c0 = arith.constant 0 : index
    %c0_1 = arith.constant 0 : index
    %c0_2 = arith.constant 0 : index
    %3 = vector.load %arg2[%c0, %c0_1, %c0_2] : memref<1x8x32xbf16, #tpu.memory_space<vmem>>, vector<1x8x32xbf16>
    %4 = vector.shape_cast %3 : vector<1x8x32xbf16> to vector<8x32xbf16>
    %c0_3 = arith.constant 0 : index
    %c0_4 = arith.constant 0 : index
    %5 = vector.load %arg4[%c0_3, %c0_4] : memref<32x32xbf16, #tpu.memory_space<vmem>>, vector<32x32xbf16>
    %cst = arith.constant dense<0.000000e+00> : vector<8x32xf32>
    %6 = tpu.matmul %4, %5, %cst {dimension_numbers = #tpu.dot_dimension_numbers<[1], [0], [0], [1], [0, 0, 1, 1], [], []>} : vector<8x32xbf16>, vector<32x32xbf16>, vector<8x32xf32> -> vector<8x32xf32>
    %c0_5 = arith.constant 0 : index
    %c0_6 = arith.constant 0 : index
    %7 = vector.load %arg8[%c0_5, %c0_6] : memref<1x32xf32, #tpu.memory_space<vmem>>, vector<1x32xf32>
    %8 = vector.broadcast %7 : vector<1x32xf32> to vector<8x32xf32>
    %9 = arith.addf %6, %8 : vector<8x32xf32>
    %cst_7 = arith.constant 0.353553385 : f32
    %10 = vector.broadcast %cst_7 : f32 to vector<8x32xf32>
    %11 = arith.mulf %9, %10 : vector<8x32xf32>
    %12 = arith.truncf %11 : vector<8x32xf32> to vector<8x32xbf16>
    %c0_8 = arith.constant 0 : index
    %c0_9 = arith.constant 0 : index
    %13 = vector.load %arg15[%c0_8, %c0_9] : memref<8x32xbf16, #tpu.memory_space<vmem>>, vector<8x32xbf16>
    %c0_10 = arith.constant 0 : index
    %c0_11 = arith.constant 0 : index
    %14 = vector.load %arg16[%c0_10, %c0_11] : memref<8x32xbf16, #tpu.memory_space<vmem>>, vector<8x32xbf16>
    %15 = vector.extract_strided_slice %12 {offsets = [0, 0], sizes = [8, 8], strides = [1, 1]} : vector<8x32xbf16> to vector<8x8xbf16>
    %16 = vector.extract_strided_slice %13 {offsets = [0, 0], sizes = [8, 8], strides = [1, 1]} : vector<8x32xbf16> to vector<8x8xbf16>
    %cst_12 = arith.constant dense<0.000000e+00> : vector<8x8xf32>
    %17 = tpu.matmul %15, %16, %cst_12 {dimension_numbers = #tpu.dot_dimension_numbers<[1], [1], [0], [0], [0, 0, 1, 0], [], []>} : vector<8x8xbf16>, vector<8x8xbf16>, vector<8x8xf32> -> vector<8x8xf32>
    %cst_13 = arith.constant dense<0xFF800000> : vector<8xf32>
    %18 = vector.multi_reduction <maximumf>, %17, %cst_13 [1] : vector<8x8xf32> to vector<8xf32>
    %19 = vector.shape_cast %18 : vector<8xf32> to vector<8x1xf32>
    %20 = vector.broadcast %19 : vector<8x1xf32> to vector<8x8xf32>
    %21 = arith.subf %17, %20 : vector<8x8xf32>
    %22 = math.exp %21 : vector<8x8xf32>
    %cst_14 = arith.constant dense<0.000000e+00> : vector<8xf32>
    %23 = vector.multi_reduction <add>, %22, %cst_14 [1] : vector<8x8xf32> to vector<8xf32>
    %24 = vector.shape_cast %23 : vector<8xf32> to vector<8x1xf32>
    %25 = tpu.reciprocal %24 {approx = true} : vector<8x1xf32> -> vector<8x1xf32>
    %26 = vector.broadcast %25 : vector<8x1xf32> to vector<8x8xf32>
    %27 = arith.mulf %22, %26 : vector<8x8xf32>
    %28 = arith.truncf %27 : vector<8x8xf32> to vector<8x8xbf16>
    %29 = vector.extract_strided_slice %14 {offsets = [0, 0], sizes = [8, 8], strides = [1, 1]} : vector<8x32xbf16> to vector<8x8xbf16>
    %cst_15 = arith.constant dense<0.000000e+00> : vector<8x8xf32>
    %30 = tpu.matmul %28, %29, %cst_15 {dimension_numbers = #tpu.dot_dimension_numbers<[1], [0], [0], [1], [0, 0, 1, 1], [], []>} : vector<8x8xbf16>, vector<8x8xbf16>, vector<8x8xf32> -> vector<8x8xf32>
    %c0_16 = arith.constant 0 : index
    %c0_17 = arith.constant 0 : index
    %31 = vector.load %arg17[%c0_16, %c0_17] : memref<8x32xf32, #tpu.memory_space<vmem>>, vector<8x8xf32>
    tpu.vector_store %arg17[%c0_16, %c0_17], %30 {strides = array<i32>} : memref<8x32xf32, #tpu.memory_space<vmem>>, vector<8x8xf32>,
    %32 = vector.extract_strided_slice %12 {offsets = [0, 8], sizes = [8, 8], strides = [1, 1]} : vector<8x32xbf16> to vector<8x8xbf16>
    %33 = vector.extract_strided_slice %13 {offsets = [0, 8], sizes = [8, 8], strides = [1, 1]} : vector<8x32xbf16> to vector<8x8xbf16>
    %cst_18 = arith.constant dense<0.000000e+00> : vector<8x8xf32>
    %34 = tpu.matmul %32, %33, %cst_18 {dimension_numbers = #tpu.dot_dimension_numbers<[1], [1], [0], [0], [0, 0, 1, 0], [], []>} : vector<8x8xbf16>, vector<8x8xbf16>, vector<8x8xf32> -> vector<8x8xf32>
    %cst_19 = arith.constant dense<0xFF800000> : vector<8xf32>
    %35 = vector.multi_reduction <maximumf>, %34, %cst_19 [1] : vector<8x8xf32> to vector<8xf32>
    %36 = vector.shape_cast %35 : vector<8xf32> to vector<8x1xf32>
    %37 = vector.broadcast %36 : vector<8x1xf32> to vector<8x8xf32>
    %38 = arith.subf %34, %37 : vector<8x8xf32>
    %39 = math.exp %38 : vector<8x8xf32>
    %cst_20 = arith.constant dense<0.000000e+00> : vector<8xf32>
    %40 = vector.multi_reduction <add>, %39, %cst_20 [1] : vector<8x8xf32> to vector<8xf32>
    %41 = vector.shape_cast %40 : vector<8xf32> to vector<8x1xf32>
    %42 = tpu.reciprocal %41 {approx = true} : vector<8x1xf32> -> vector<8x1xf32>
    %43 = vector.broadcast %42 : vector<8x1xf32> to vector<8x8xf32>
    %44 = arith.mulf %39, %43 : vector<8x8xf32>
    %45 = arith.truncf %44 : vector<8x8xf32> to vector<8x8xbf16>
    %46 = vector.extract_strided_slice %14 {offsets = [0, 8], sizes = [8, 8], strides = [1, 1]} : vector<8x32xbf16> to vector<8x8xbf16>
    %cst_21 = arith.constant dense<0.000000e+00> : vector<8x8xf32>
    %47 = tpu.matmul %45, %46, %cst_21 {dimension_numbers = #tpu.dot_dimension_numbers<[1], [0], [0], [1], [0, 0, 1, 1], [], []>} : vector<8x8xbf16>, vector<8x8xbf16>, vector<8x8xf32> -> vector<8x8xf32>
    %c0_22 = arith.constant 0 : index
    %c8 = arith.constant 8 : index
    %48 = vector.load %arg17[%c0_22, %c8] : memref<8x32xf32, #tpu.memory_space<vmem>>, vector<8x8xf32>
    tpu.vector_store %arg17[%c0_22, %c8], %47 {strides = array<i32>} : memref<8x32xf32, #tpu.memory_space<vmem>>, vector<8x8xf32>,
    %49 = vector.extract_strided_slice %12 {offsets = [0, 16], sizes = [8, 8], strides = [1, 1]} : vector<8x32xbf16> to vector<8x8xbf16>
    %50 = vector.extract_strided_slice %13 {offsets = [0, 16], sizes = [8, 8], strides = [1, 1]} : vector<8x32xbf16> to vector<8x8xbf16>
    %cst_23 = arith.constant dense<0.000000e+00> : vector<8x8xf32>
    %51 = tpu.matmul %49, %50, %cst_23 {dimension_numbers = #tpu.dot_dimension_numbers<[1], [1], [0], [0], [0, 0, 1, 0], [], []>} : vector<8x8xbf16>, vector<8x8xbf16>, vector<8x8xf32> -> vector<8x8xf32>
    %cst_24 = arith.constant dense<0xFF800000> : vector<8xf32>
    %52 = vector.multi_reduction <maximumf>, %51, %cst_24 [1] : vector<8x8xf32> to vector<8xf32>
    %53 = vector.shape_cast %52 : vector<8xf32> to vector<8x1xf32>
    %54 = vector.broadcast %53 : vector<8x1xf32> to vector<8x8xf32>
    %55 = arith.subf %51, %54 : vector<8x8xf32>
    %56 = math.exp %55 : vector<8x8xf32>
    %cst_25 = arith.constant dense<0.000000e+00> : vector<8xf32>
    %57 = vector.multi_reduction <add>, %56, %cst_25 [1] : vector<8x8xf32> to vector<8xf32>
    %58 = vector.shape_cast %57 : vector<8xf32> to vector<8x1xf32>
    %59 = tpu.reciprocal %58 {approx = true} : vector<8x1xf32> -> vector<8x1xf32>
    %60 = vector.broadcast %59 : vector<8x1xf32> to vector<8x8xf32>
    %61 = arith.mulf %56, %60 : vector<8x8xf32>
    %62 = arith.truncf %61 : vector<8x8xf32> to vector<8x8xbf16>
    %63 = vector.extract_strided_slice %14 {offsets = [0, 16], sizes = [8, 8], strides = [1, 1]} : vector<8x32xbf16> to vector<8x8xbf16>
    %cst_26 = arith.constant dense<0.000000e+00> : vector<8x8xf32>
    %64 = tpu.matmul %62, %63, %cst_26 {dimension_numbers = #tpu.dot_dimension_numbers<[1], [0], [0], [1], [0, 0, 1, 1], [], []>} : vector<8x8xbf16>, vector<8x8xbf16>, vector<8x8xf32> -> vector<8x8xf32>
    %c0_27 = arith.constant 0 : index
    %c16 = arith.constant 16 : index
    %65 = vector.load %arg17[%c0_27, %c16] : memref<8x32xf32, #tpu.memory_space<vmem>>, vector<8x8xf32>
    tpu.vector_store %arg17[%c0_27, %c16], %64 {strides = array<i32>} : memref<8x32xf32, #tpu.memory_space<vmem>>, vector<8x8xf32>,
    %66 = vector.extract_strided_slice %12 {offsets = [0, 24], sizes = [8, 8], strides = [1, 1]} : vector<8x32xbf16> to vector<8x8xbf16>
    %67 = vector.extract_strided_slice %13 {offsets = [0, 24], sizes = [8, 8], strides = [1, 1]} : vector<8x32xbf16> to vector<8x8xbf16>
    %cst_28 = arith.constant dense<0.000000e+00> : vector<8x8xf32>
    %68 = tpu.matmul %66, %67, %cst_28 {dimension_numbers = #tpu.dot_dimension_numbers<[1], [1], [0], [0], [0, 0, 1, 0], [], []>} : vector<8x8xbf16>, vector<8x8xbf16>, vector<8x8xf32> -> vector<8x8xf32>
    %cst_29 = arith.constant dense<0xFF800000> : vector<8xf32>
    %69 = vector.multi_reduction <maximumf>, %68, %cst_29 [1] : vector<8x8xf32> to vector<8xf32>
    %70 = vector.shape_cast %69 : vector<8xf32> to vector<8x1xf32>
    %71 = vector.broadcast %70 : vector<8x1xf32> to vector<8x8xf32>
    %72 = arith.subf %68, %71 : vector<8x8xf32>
    %73 = math.exp %72 : vector<8x8xf32>
    %cst_30 = arith.constant dense<0.000000e+00> : vector<8xf32>
    %74 = vector.multi_reduction <add>, %73, %cst_30 [1] : vector<8x8xf32> to vector<8xf32>
    %75 = vector.shape_cast %74 : vector<8xf32> to vector<8x1xf32>
    %76 = tpu.reciprocal %75 {approx = true} : vector<8x1xf32> -> vector<8x1xf32>
    %77 = vector.broadcast %76 : vector<8x1xf32> to vector<8x8xf32>
    %78 = arith.mulf %73, %77 : vector<8x8xf32>
    %79 = arith.truncf %78 : vector<8x8xf32> to vector<8x8xbf16>
    %80 = vector.extract_strided_slice %14 {offsets = [0, 24], sizes = [8, 8], strides = [1, 1]} : vector<8x32xbf16> to vector<8x8xbf16>
    %cst_31 = arith.constant dense<0.000000e+00> : vector<8x8xf32>
    %81 = tpu.matmul %79, %80, %cst_31 {dimension_numbers = #tpu.dot_dimension_numbers<[1], [0], [0], [1], [0, 0, 1, 1], [], []>} : vector<8x8xbf16>, vector<8x8xbf16>, vector<8x8xf32> -> vector<8x8xf32>
    %c0_32 = arith.constant 0 : index
    %c24 = arith.constant 24 : index
    %82 = vector.load %arg17[%c0_32, %c24] : memref<8x32xf32, #tpu.memory_space<vmem>>, vector<8x8xf32>
    tpu.vector_store %arg17[%c0_32, %c24], %81 {strides = array<i32>} : memref<8x32xf32, #tpu.memory_space<vmem>>, vector<8x8xf32>,
    %c0_33 = arith.constant 0 : index
    %c0_34 = arith.constant 0 : index
    %83 = vector.load %arg17[%c0_33, %c0_34] : memref<8x32xf32, #tpu.memory_space<vmem>>, vector<8x32xf32>
    %84 = arith.truncf %83 : vector<8x32xf32> to vector<8x32xbf16>
    %c0_35 = arith.constant 0 : index
    %c0_36 = arith.constant 0 : index
    %85 = vector.load %arg7[%c0_35, %c0_36] : memref<32x32xbf16, #tpu.memory_space<vmem>>, vector<32x32xbf16>
    %cst_37 = arith.constant dense<0.000000e+00> : vector<8x32xf32>
    %86 = tpu.matmul %84, %85, %cst_37 {dimension_numbers = #tpu.dot_dimension_numbers<[1], [0], [0], [1], [0, 0, 1, 1], [], []>} : vector<8x32xbf16>, vector<32x32xbf16>, vector<8x32xf32> -> vector<8x32xf32>
    %c0_38 = arith.constant 0 : index
    %c0_39 = arith.constant 0 : index
    %87 = vector.load %arg11[%c0_38, %c0_39] : memref<1x32xf32, #tpu.memory_space<vmem>>, vector<1x32xf32>
    %88 = vector.broadcast %87 : vector<1x32xf32> to vector<8x32xf32>
    %89 = arith.addf %86, %88 : vector<8x32xf32>
    %90 = arith.extf %4 : vector<8x32xbf16> to vector<8x32xf32>
    %91 = arith.addf %90, %89 : vector<8x32xf32>
    %c0_40 = arith.constant 0 : index
    %c0_41 = arith.constant 0 : index
    %92 = vector.load %arg12[%c0_40, %c0_41] : memref<1x32xf32, #tpu.memory_space<vmem>>, vector<1x32xf32>
    %c0_42 = arith.constant 0 : index
    %c0_43 = arith.constant 0 : index
    %93 = vector.load %arg13[%c0_42, %c0_43] : memref<1x32xf32, #tpu.memory_space<vmem>>, vector<1x32xf32>
    %cst_44 = arith.constant dense<0.000000e+00> : vector<8xf32>
    %94 = vector.multi_reduction <add>, %91, %cst_44 [1] : vector<8x32xf32> to vector<8xf32>
    %95 = vector.shape_cast %94 : vector<8xf32> to vector<8x1xf32>
    %cst_45 = arith.constant 3.200000e+01 : f32
    %96 = vector.broadcast %cst_45 : f32 to vector<8x1xf32>
    %97 = arith.divf %95, %96 : vector<8x1xf32>
    %98 = vector.broadcast %97 : vector<8x1xf32> to vector<8x32xf32>
    %99 = arith.subf %91, %98 : vector<8x32xf32>
    %100 = arith.mulf %99, %99 : vector<8x32xf32>
    %cst_46 = arith.constant dense<0.000000e+00> : vector<8xf32>
    %101 = vector.multi_reduction <add>, %100, %cst_46 [1] : vector<8x32xf32> to vector<8xf32>
    %102 = vector.shape_cast %101 : vector<8xf32> to vector<8x1xf32>
    %cst_47 = arith.constant 3.200000e+01 : f32
    %103 = vector.broadcast %cst_47 : f32 to vector<8x1xf32>
    %104 = arith.divf %102, %103 : vector<8x1xf32>
    %cst_48 = arith.constant 9.99999974E-6 : f32
    %105 = vector.broadcast %cst_48 : f32 to vector<8x1xf32>
    %106 = arith.addf %104, %105 : vector<8x1xf32>
    %107 = math.rsqrt %106 : vector<8x1xf32>
    %108 = vector.broadcast %107 : vector<8x1xf32> to vector<8x32xf32>
    %109 = arith.mulf %99, %108 : vector<8x32xf32>
    %110 = vector.broadcast %92 : vector<1x32xf32> to vector<8x32xf32>
    %111 = arith.mulf %109, %110 : vector<8x32xf32>
    %112 = vector.broadcast %93 : vector<1x32xf32> to vector<8x32xf32>
    %113 = arith.addf %111, %112 : vector<8x32xf32>
    %114 = arith.truncf %113 : vector<8x32xf32> to vector<8x32xbf16>
    %c0_49 = arith.constant 0 : index
    %c0_50 = arith.constant 0 : index
    %c0_51 = arith.constant 0 : index
    %115 = vector.load %arg14[%c0_49, %c0_50, %c0_51] : memref<1x8x32xbf16, #tpu.memory_space<vmem>>, vector<1x8x32xbf16>
    %116 = vector.shape_cast %115 : vector<1x8x32xbf16> to vector<8x32xbf16>
    %117 = vector.shape_cast %114 : vector<8x32xbf16> to vector<1x8x32xbf16>
    tpu.vector_store %arg14[%c0_49, %c0_50, %c0_51], %117 {strides = array<i32>} : memref<1x8x32xbf16, #tpu.memory_space<vmem>>, vector<1x8x32xbf16>,
    return
  }
  func.func @transform_0(%arg0: i32, %arg1: i32) -> (i32, i32, i32) {
    %c0_i32 = arith.constant 0 : i32
    %c0_i32_0 = arith.constant 0 : i32
    return %arg0, %arg1, %c0_i32 : i32, i32, i32
  }
  func.func @transform_1(%arg0: i32, %arg1: i32) -> (i32, i32, i32) {
    %c0_i32 = arith.constant 0 : i32
    %c0_i32_0 = arith.constant 0 : i32
    %c0_i32_1 = arith.constant 0 : i32
    return %arg0, %c0_i32, %c0_i32_0 : i32, i32, i32
  }
  func.func @transform_2(%arg0: i32, %arg1: i32) -> (i32, i32) {
    %c0_i32 = arith.constant 0 : i32
    %c0_i32_0 = arith.constant 0 : i32
    %c0_i32_1 = arith.constant 0 : i32
    return %c0_i32, %c0_i32_0 : i32, i32
  }
  func.func @transform_3(%arg0: i32, %arg1: i32) -> (i32, i32) {
    %c0_i32 = arith.constant 0 : i32
    %c0_i32_0 = arith.constant 0 : i32
    %c0_i32_1 = arith.constant 0 : i32
    return %c0_i32, %c0_i32_0 : i32, i32
  }
  func.func @transform_4(%arg0: i32, %arg1: i32) -> (i32, i32) {
    %c0_i32 = arith.constant 0 : i32
    %c0_i32_0 = arith.constant 0 : i32
    %c0_i32_1 = arith.constant 0 : i32
    return %c0_i32, %c0_i32_0 : i32, i32
  }
  func.func @transform_5(%arg0: i32, %arg1: i32) -> (i32, i32) {
    %c0_i32 = arith.constant 0 : i32
    %c0_i32_0 = arith.constant 0 : i32
    %c0_i32_1 = arith.constant 0 : i32
    return %c0_i32, %c0_i32_0 : i32, i32
  }
  func.func @transform_6(%arg0: i32, %arg1: i32) -> (i32, i32) {
    %c0_i32 = arith.constant 0 : i32
    %c0_i32_0 = arith.constant 0 : i32
    %c0_i32_1 = arith.constant 0 : i32
    return %c0_i32, %c0_i32_0 : i32, i32
  }
  func.func @transform_7(%arg0: i32, %arg1: i32) -> (i32, i32) {
    %c0_i32 = arith.constant 0 : i32
    %c0_i32_0 = arith.constant 0 : i32
    %c0_i32_1 = arith.constant 0 : i32
    return %c0_i32, %c0_i32_0 : i32, i32
  }
  func.func @transform_8(%arg0: i32, %arg1: i32) -> (i32, i32) {
    %c0_i32 = arith.constant 0 : i32
    %c0_i32_0 = arith.constant 0 : i32
    %c0_i32_1 = arith.constant 0 : i32
    return %c0_i32, %c0_i32_0 : i32, i32
  }
  func.func @transform_9(%arg0: i32, %arg1: i32) -> (i32, i32) {
    %c0_i32 = arith.constant 0 : i32
    %c0_i32_0 = arith.constant 0 : i32
    %c0_i32_1 = arith.constant 0 : i32
    return %c0_i32, %c0_i32_0 : i32, i32
  }
  func.func @transform_10(%arg0: i32, %arg1: i32) -> (i32, i32) {
    %c0_i32 = arith.constant 0 : i32
    %c0_i32_0 = arith.constant 0 : i32
    %c0_i32_1 = arith.constant 0 : i32
    return %c0_i32, %c0_i32_0 : i32, i32
  }
  func.func @transform_11(%arg0: i32, %arg1: i32) -> (i32, i32) {
    %c0_i32 = arith.constant 0 : i32
    %c0_i32_0 = arith.constant 0 : i32
    %c0_i32_1 = arith.constant 0 : i32
    return %c0_i32, %c0_i32_0 : i32, i32
  }
  func.func @transform_12(%arg0: i32, %arg1: i32) -> (i32, i32, i32) {
    %c0_i32 = arith.constant 0 : i32
    %c0_i32_0 = arith.constant 0 : i32
    return %arg0, %arg1, %c0_i32 : i32, i32, i32
  }
}

</mosaic_0001>

<llo_original>
// kernel: vanilla_transformer_forward.13
$region0: #{vanilla_transformer_forward.13}
  #allocation0 [shape = 'u32[]', space=smem, size = 0x4, offset = 0x4, fixed_abs, tag = 'smem constant byte address 0x4 - core index']
  #allocation1 [shape = 'u32[144,128]{1,0:T(1,128)}', space=vmem, size = 0x12000, scoped, tag = 'internal scratch']
  %s0 = inlined_call_operand.vmem [shape: f32[2,8,4], index: 0, kind: input, shape index: {}]
  %s1 = inlined_call_operand.vmem [shape: f32[4,32], index: 1, kind: input, shape index: {}]
  %s2 = inlined_call_operand.vmem [shape: f32[1,32], index: 2, kind: input, shape index: {}]
  %s3 = inlined_call_operand.vmem [shape: f32[8,32], index: 3, kind: input, shape index: {}]
  %s4 = inlined_call_operand.vmem [shape: bf16[2,8,32], index: 4, kind: output, shape index: {}]
  %s5 = sld [smem:[#allocation0]]
  $region49: #{vanilla_transformer_forward.13} parent=0
    _
  %s7 = ssub.s32 1, %s5
  %s8 = scalar_select 0, %s7, %s5
  loop: start=0, step=1, limit=4
  $region2: #{vanilla_transformer_forward.13} parent=0 // loop_pre_header
    _
  $region3: #{vanilla_transformer_forward.13} parent=0 // loop_header
    %s10 = sphi 0, %s14
    %p11 = scmp.ge.s32.totalorder %s10, 4
    %s17 = sphi 0, %s29
    %s18 = sphi 0, %s25
    %s19 = sphi 0, %s17
    %s20 = sphi 0, %s18
    %s21 = sphi 0, %s19
    %s22 = sphi 0, %s20
    %s34 = sphi 0, %s36
    %s37 = sphi 0, %s34
    %s38 = sphi 0, %s37
    %s54 = sphi 0, %s38
    %s58 = sphi 0, %s58
    %s60 = sphi 0, %s58
    %s61 = sphi 0, %s60
    %s75 = sphi 0, %s61
    %s79 = sphi 0, %s79
    %s81 = sphi 0, %s79
    %s82 = sphi 0, %s81
    %s96 = sphi 0, %s82
    %s102 = sphi 0, %s104
    %s105 = sphi 0, %s102
    %s106 = sphi 0, %s105
    %s122 = sphi 0, %s106
    %s130 = sphi 0, %s132
    %s133 = sphi 0, %s130
    %s134 = sphi 0, %s133
    %s150 = sphi 0, %s134
  $region4: #{vanilla_transformer_forward.13} parent=0 // loop_header_branch
    %13 = sbr.rel (%p11) target = $region8
  $region5: #{vanilla_transformer_forward.13} parent=0 // loop_body
    %s15 = ssub.s32 %s10, 1
    %s16 = ssub.s32 %s10, 2
    %s23 = sadd.s32 1, %s18
    %p24 = scmp.ge.s32.totalorder %s23, 1
    %s25 = scalar_select %p24, 0, %s23
    %s26 = sadd.s32 1, %s17
    %s27 = scalar_select %p24, %s26, %s17
    %p28 = scmp.ge.s32.totalorder %s27, 2
    %s29 = scalar_select %p28, 0, %s27
    %s30 = ssub.s32 %s17, %s29
    %s31 = ssub.s32 %s18, %s25
    %s32 = sor.u32 %s30, %s31
    %p33 = scmp.eq.s32.totalorder %s32, 0
    %s35 = sadd.s32 %s34, 1
    %s36 = scalar_select %p33, %s34, %s35
    %p39 = pneg %p33
    %p40 = scmp.eq.s32.totalorder %s10, 1
    %p41 = por %p39, %p40
    %p42 = scmp.ne.s32.totalorder %s34, %s37
    %p43 = scmp.eq.s32.totalorder %s10, 0
    %p44 = por %p42, %p43
    %p45 = scmp.ne.s32.totalorder %s34, %s37
    %p46 = scmp.eq.s32.totalorder %s15, 1
    %p47 = por %p45, %p46
    %p48 = scmp.ne.s32.totalorder %s37, %s38
    %p49 = scmp.eq.s32.totalorder %s15, 0
    %p50 = por %p48, %p49
    %p51 = scmp.ne.s32.totalorder %s37, %s38
    %p52 = scmp.eq.s32.totalorder %s16, 1
    %p53 = por %p51, %p52
    %p55 = scmp.ne.s32.totalorder %s38, %s54
    %p56 = scmp.eq.s32.totalorder %s16, 0
    %p57 = por %p55, %p56
    %s59 = sadd.s32 %s58, 1
    %p62 = scmp.eq.s32.totalorder %s10, 1
    %p63 = scmp.ne.s32.totalorder %s58, %s60
    %p64 = scmp.eq.s32.totalorder %s10, 0
    %p65 = por %p63, %p64
    %p66 = scmp.ne.s32.totalorder %s58, %s60
    %p67 = scmp.eq.s32.totalorder %s15, 1
    %p68 = por %p66, %p67
    %p69 = scmp.ne.s32.totalorder %s60, %s61
    %p70 = scmp.eq.s32.totalorder %s15, 0
    %p71 = por %p69, %p70
    %p72 = scmp.ne.s32.totalorder %s60, %s61
    %p73 = scmp.eq.s32.totalorder %s16, 1
    %p74 = por %p72, %p73
    %p76 = scmp.ne.s32.totalorder %s61, %s75
    %p77 = scmp.eq.s32.totalorder %s16, 0
    %p78 = por %p76, %p77
    %s80 = sadd.s32 %s79, 1
    %p83 = scmp.eq.s32.totalorder %s10, 1
    %p84 = scmp.ne.s32.totalorder %s79, %s81
    %p85 = scmp.eq.s32.totalorder %s10, 0
    %p86 = por %p84, %p85
    %p87 = scmp.ne.s32.totalorder %s79, %s81
    %p88 = scmp.eq.s32.totalorder %s15, 1
    %p89 = por %p87, %p88
    %p90 = scmp.ne.s32.totalorder %s81, %s82
    %p91 = scmp.eq.s32.totalorder %s15, 0
    %p92 = por %p90, %p91
    %p93 = scmp.ne.s32.totalorder %s81, %s82
    %p94 = scmp.eq.s32.totalorder %s16, 1
    %p95 = por %p93, %p94
    %p97 = scmp.ne.s32.totalorder %s82, %s96
    %p98 = scmp.eq.s32.totalorder %s16, 0
    %p99 = por %p97, %p98
    %s100 = ssub.s32 %s18, %s25
    %p101 = scmp.eq.s32.totalorder %s100, 0
    %s103 = sadd.s32 %s102, 1
    %s104 = scalar_select %p101, %s102, %s103
    %p107 = pneg %p101
    %p108 = scmp.eq.s32.totalorder %s10, 1
    %p109 = por %p107, %p108
    %p110 = scmp.ne.s32.totalorder %s102, %s105
    %p111 = scmp.eq.s32.totalorder %s10, 0
    %p112 = por %p110, %p111
    %p113 = scmp.ne.s32.totalorder %s102, %s105
    %p114 = scmp.eq.s32.totalorder %s15, 1
    %p115 = por %p113, %p114
    %p116 = scmp.ne.s32.totalorder %s105, %s106
    %p117 = scmp.eq.s32.totalorder %s15, 0
    %p118 = por %p116, %p117
    %p119 = scmp.ne.s32.totalorder %s105, %s106
    %p120 = scmp.eq.s32.totalorder %s16, 1
    %p121 = por %p119, %p120
    %p123 = scmp.ne.s32.totalorder %s106, %s122
    %p124 = scmp.eq.s32.totalorder %s16, 0
    %p125 = por %p123, %p124
    %s126 = ssub.s32 %s17, %s29
    %s127 = ssub.s32 %s18, %s25
    %s128 = sor.u32 %s126, %s127
    %p129 = scmp.eq.s32.totalorder %s128, 0
    %s131 = sadd.s32 %s130, 1
    %s132 = scalar_select %p129, %s130, %s131
    %p135 = pneg %p129
    %p136 = scmp.eq.s32.totalorder %s10, 1
    %p137 = por %p135, %p136
    %p138 = scmp.ne.s32.totalorder %s130, %s133
    %p139 = scmp.eq.s32.totalorder %s10, 0
    %p140 = por %p138, %p139
    %p141 = scmp.ne.s32.totalorder %s130, %s133
    %p142 = scmp.eq.s32.totalorder %s15, 1
    %p143 = por %p141, %p142
    %p144 = scmp.ne.s32.totalorder %s133, %s134
    %p145 = scmp.eq.s32.totalorder %s15, 0
    %p146 = por %p144, %p145
    %p147 = scmp.ne.s32.totalorder %s133, %s134
    %p148 = scmp.eq.s32.totalorder %s16, 1
    %p149 = por %p147, %p148
    %p151 = scmp.ne.s32.totalorder %s134, %s150
    %p152 = scmp.eq.s32.totalorder %s16, 0
    %p153 = por %p151, %p152
    %p154 = scmp.le.s32.totalorder 1, %s10
    %p155 = scmp.lt.s32.totalorder %s10, 3
    %p156 = pnand %p154, %p155
    %p157 = pneg %p156
    // Predicated region
    $region9: #{vanilla_transformer_forward.13} parent=5 // pred_check
      _
    $region10: #{vanilla_transformer_forward.13} parent=5 // pred_check_branch
      %159 = sbr.rel (%p156) target = $region12
    $region11: #{vanilla_transformer_forward.13} parent=5 // pred_region
      %s160 = ssub.s32 %s10, 1
      // Predicated region
      $region13: #{vanilla_transformer_forward.13} parent=11 // pred_check
        %p161 = pneg %p71
      $region14: #{vanilla_transformer_forward.13} parent=11 // pred_check_branch
        %163 = sbr.rel (%p161) target = $region16
      $region15: #{vanilla_transformer_forward.13} parent=11 // pred_region
        _
      $region16: #{vanilla_transformer_forward.13} parent=11 // pred_fallthru
        _
      // Predicated region
      $region17: #{vanilla_transformer_forward.13} parent=11 // pred_check
        %p164 = pneg %p92
      $region18: #{vanilla_transformer_forward.13} parent=11 // pred_check_branch
        %166 = sbr.rel (%p164) target = $region20
      $region19: #{vanilla_transformer_forward.13} parent=11 // pred_region
        _
      $region20: #{vanilla_transformer_forward.13} parent=11 // pred_fallthru
        _
      // Predicated region
      $region21: #{vanilla_transformer_forward.13} parent=11 // pred_check
        %p167 = pneg %p118
      $region22: #{vanilla_transformer_forward.13} parent=11 // pred_check_branch
        %169 = sbr.rel (%p167) target = $region24
      $region23: #{vanilla_transformer_forward.13} parent=11 // pred_region
        %p170 = scmp.lt.s32.totalorder %s20, 0
        %s171 = scalar_select %p170, %s20, 0
        %s172 = smul.addr %s171, 8
        %s173 = scalar_lea.vmem %s3, %s172
      $region24: #{vanilla_transformer_forward.13} parent=11 // pred_fallthru
        _
    $region12: #{vanilla_transformer_forward.13} parent=5 // pred_fallthru
      _
    %p174 = scmp.lt.s32.totalorder %s10, 2
    // Predicated region
    $region25: #{vanilla_transformer_forward.13} parent=5 // pred_check
      %p175 = pneg %p174
    $region26: #{vanilla_transformer_forward.13} parent=5 // pred_check_branch
      %177 = sbr.rel (%p175) target = $region28
    $region27: #{vanilla_transformer_forward.13} parent=5 // pred_region
      // Predicated region
      $region29: #{vanilla_transformer_forward.13} parent=27 // pred_check
        %p178 = pneg %p44
      $region30: #{vanilla_transformer_forward.13} parent=27 // pred_check_branch
        %180 = sbr.rel (%p178) target = $region32
      $region31: #{vanilla_transformer_forward.13} parent=27 // pred_region
        %p181 = scmp.lt.s32.totalorder %s17, 1
        %s182 = scalar_select %p181, %s17, 1
        %p183 = scmp.lt.s32.totalorder %s18, 0
        %s184 = scalar_select %p183, %s18, 0
        %s185 = sadd.s32 %s184, %s182
        %s186 = smul.addr %s185, 8
        %s187 = scalar_lea.vmem %s0, %s186
      $region32: #{vanilla_transformer_forward.13} parent=27 // pred_fallthru
        _
    $region28: #{vanilla_transformer_forward.13} parent=5 // pred_fallthru
      _
    %p188 = scmp.le.s32.totalorder 1, %s10
    %p189 = scmp.lt.s32.totalorder %s10, 3
    %p190 = pnand %p188, %p189
    %p191 = pneg %p190
    // Predicated region
    $region33: #{vanilla_transformer_forward.13} parent=5 // pred_check
      _
    $region34: #{vanilla_transformer_forward.13} parent=5 // pred_check_branch
      %193 = sbr.rel (%p190) target = $region36
    $region35: #{vanilla_transformer_forward.13} parent=5 // pred_region
      %s194 = ssub.s32 %s10, 1
      %p195 = scmp.lt.s32.totalorder %s19, 1
      %s196 = scalar_select %p195, %s19, 1
      %p197 = scmp.lt.s32.totalorder %s20, 0
      %s198 = scalar_select %p197, %s20, 0
      %s199 = sadd.s32 %s198, %s196
      %s200 = smul.addr %s199, 8
      %s201 = scalar_lea.vmem %s0, %s200
      %p202 = pneg %p50
      %p203 = pneg %p47
      %p204 = pneg %p71
      %p205 = pneg %p68
      %p206 = pneg %p92
      %p207 = pneg %p89
      %p208 = scmp.lt.s32.totalorder %s20, 0
      %s209 = scalar_select %p208, %s20, 0
      %s210 = smul.addr %s209, 8
      %s211 = scalar_lea.vmem %s3, %s210
      %p212 = pneg %p118
      %p213 = pneg %p115
      %p214 = pneg %p146
      %p215 = pneg %p143
      %p216 = scmp.lt.s32.totalorder %s19, 1
      %s217 = scalar_select %p216, %s19, 1
      %p218 = scmp.lt.s32.totalorder %s20, 0
      %s219 = scalar_select %p218, %s20, 0
      %s220 = sadd.s32 %s219, %s217
      %s221 = smul.addr %s220, 4
      %s222 = scalar_lea.vmem %s4, %s221
      %p223 = scmp.lt.s32.totalorder %s19, 1
      %s224 = scalar_select %p223, %s19, 1
      %p225 = scmp.lt.s32.totalorder %s20, 0
      %s226 = scalar_select %p225, %s20, 0
      %s227 = sadd.s32 %s226, %s224
      %s228 = smul.addr %s227, 8
      %s229 = scalar_lea.vmem %s0, %s228
      %p230 = scmp.lt.s32.totalorder %s20, 0
      %s231 = scalar_select %p230, %s20, 0
      %s232 = smul.addr %s231, 8
      %s233 = scalar_lea.vmem %s3, %s232
      %p234 = scmp.lt.s32.totalorder %s19, 1
      %s235 = scalar_select %p234, %s19, 1
      %p236 = scmp.lt.s32.totalorder %s20, 0
      %s237 = scalar_select %p236, %s20, 0
      %s238 = sadd.s32 %s237, %s235
      %s239 = smul.addr %s238, 4
      %s240 = scalar_lea.vmem %s4, %s239
      %v241 = vld [vmem:[%s229] sm:$0xff]
      %v242 = vld [vmem:[%s2] sm:$0x1]
      %v243 = vld [vmem:[%s233] sm:$0xff]
      %v245 = vlaneseq
      %v246 = vshrl.u32 %v245, 7
      %v247 = vsub.s32 0, %v246
      %v248 = vrot.slane %v242, %v247
      %v250 = vadd.f32 %v248, %v243
      %v251 = vld [vmem:[%s1] sm:$0x1]
      %253 = vset.pattern.permute.xlu0 0
      %254 = vperm.xlu0 %253, %v241
      %v255 = vpop.permute.xlu0 %254
      %v257 = vlaneseq
      %v258 = vshrl.u32 %v257, 7
      %v259 = vsub.s32 0, %v258
      %v260 = vrot.slane %v251, %v259
      %v261 = vmul.f32 %v255, %v260
      %v262 = vadd.f32 %v250, %v261
      %v263 = vld [vmem:[%s1 + $0x1] sm:$0x1]
      %264 = vset.pattern.permute.xlu0 1
      %265 = vperm.xlu0 %264, %v241
      %v266 = vpop.permute.xlu0 %265
      %v268 = vlaneseq
      %v269 = vshrl.u32 %v268, 7
      %v270 = vsub.s32 0, %v269
      %v271 = vrot.slane %v263, %v270
      %v272 = vmul.f32 %v266, %v271
      %v273 = vadd.f32 %v262, %v272
      %v274 = vld [vmem:[%s1 + $0x2] sm:$0x1]
      %275 = vset.pattern.permute.xlu0 2
      %276 = vperm.xlu0 %275, %v241
      %v277 = vpop.permute.xlu0 %276
      %v279 = vlaneseq
      %v280 = vshrl.u32 %v279, 7
      %v281 = vsub.s32 0, %v280
      %v282 = vrot.slane %v274, %v281
      %v283 = vmul.f32 %v277, %v282
      %v284 = vadd.f32 %v273, %v283
      %v285 = vld [vmem:[%s1 + $0x3] sm:$0x1]
      %286 = vset.pattern.permute.xlu0 3
      %287 = vperm.xlu0 %286, %v241
      %v288 = vpop.permute.xlu0 %287
      %v290 = vlaneseq
      %v291 = vshrl.u32 %v290, 7
      %v292 = vsub.s32 0, %v291
      %v293 = vrot.slane %v285, %v292
      %v294 = vmul.f32 %v288, %v293
      %v295 = vadd.f32 %v284, %v294
      %v296 = vpack.c.bf16 %v295, %v295
      %vm297 = vcmask 257024
      %298 = vst.msk [vmem:[%s240] sm:$0xf] %vm297, %v296
      %p299 = scmp.lt.s32.totalorder %s19, 1
      %s300 = scalar_select %p299, %s19, 1
      %p301 = scmp.lt.s32.totalorder %s20, 0
      %s302 = scalar_select %p301, %s20, 0
      %s303 = sadd.s32 %s302, %s300
      %s304 = smul.addr %s303, 4
      %s305 = scalar_lea.vmem %s4, %s304
      // Predicated region
      $region37: #{vanilla_transformer_forward.13} parent=35 // pred_check
        %p306 = pneg %p143
      $region38: #{vanilla_transformer_forward.13} parent=35 // pred_check_branch
        %308 = sbr.rel (%p306) target = $region40
      $region39: #{vanilla_transformer_forward.13} parent=35 // pred_region
        _
      $region40: #{vanilla_transformer_forward.13} parent=35 // pred_fallthru
        _
    $region36: #{vanilla_transformer_forward.13} parent=5 // pred_fallthru
      _
    %p309 = scmp.le.s32.totalorder 2, %s10
    // Predicated region
    $region41: #{vanilla_transformer_forward.13} parent=5 // pred_check
      %p310 = pneg %p309
    $region42: #{vanilla_transformer_forward.13} parent=5 // pred_check_branch
      %312 = sbr.rel (%p310) target = $region44
    $region43: #{vanilla_transformer_forward.13} parent=5 // pred_region
      %s313 = ssub.s32 %s10, 2
      // Predicated region
      $region45: #{vanilla_transformer_forward.13} parent=43 // pred_check
        %p314 = pneg %p149
      $region46: #{vanilla_transformer_forward.13} parent=43 // pred_check_branch
        %316 = sbr.rel (%p314) target = $region48
      $region47: #{vanilla_transformer_forward.13} parent=43 // pred_region
        %p317 = scmp.lt.s32.totalorder %s21, 1
        %s318 = scalar_select %p317, %s21, 1
        %p319 = scmp.lt.s32.totalorder %s22, 0
        %s320 = scalar_select %p319, %s22, 0
        %s321 = sadd.s32 %s320, %s318
        %s322 = smul.addr %s321, 4
        %s323 = scalar_lea.vmem %s4, %s322
      $region48: #{vanilla_transformer_forward.13} parent=43 // pred_fallthru
        _
    $region44: #{vanilla_transformer_forward.13} parent=5 // pred_fallthru
      _
  $region6: #{vanilla_transformer_forward.13} parent=0 // loop_footer
    %s14 = sadd.s32 1, %s10
  $region7: #{vanilla_transformer_forward.13} parent=0 // loop_footer_branch
    %9 = sbr.rel target = $region3
  $region8: #{vanilla_transformer_forward.13} parent=0 // loop_exit
    _

// kernel: vanilla_transformer_forward.18
$region0: #{vanilla_transformer_forward.18}
  #allocation0 [shape = 'u32[]', space=smem, size = 0x4, offset = 0x4, fixed_abs, tag = 'smem constant byte address 0x4 - core index']
  #allocation1 [shape = 'u32[144,128]{1,0:T(1,128)}', space=vmem, size = 0x12000, scoped, tag = 'internal scratch']
  %s0 = inlined_call_operand.vmem [shape: bf16[16,32], index: 0, kind: input, shape index: {}]
  %s1 = inlined_call_operand.vmem [shape: bf16[32,64], index: 1, kind: input, shape index: {}]
  %s2 = inlined_call_operand.vmem [shape: f32[1,64], index: 2, kind: input, shape index: {}]
  %s3 = inlined_call_operand.vmem [shape: bf16[64,32], index: 3, kind: input, shape index: {}]
  %s4 = inlined_call_operand.vmem [shape: f32[1,32], index: 4, kind: input, shape index: {}]
  %s5 = inlined_call_operand.vmem [shape: f32[1,32], index: 5, kind: input, shape index: {}]
  %s6 = inlined_call_operand.vmem [shape: f32[1,32], index: 6, kind: input, shape index: {}]
  %s7 = inlined_call_operand.vmem [shape: f32[1,32], index: 7, kind: input, shape index: {}]
  %s8 = inlined_call_operand.vmem [shape: f32[1,32], index: 8, kind: input, shape index: {}]
  %s9 = inlined_call_operand.vmem [shape: bf16[16,32], index: 9, kind: output, shape index: {}]
  %s10 = sld [smem:[#allocation0]]
  $region46: #{vanilla_transformer_forward.18} parent=0
    _
  %s12 = ssub.s32 1, %s10
  %s13 = scalar_select 0, %s12, %s10
  // Predicated region
  $region2: #{vanilla_transformer_forward.18} parent=0 // pred_check
    _
  $region3: #{vanilla_transformer_forward.18} parent=0 // pred_check_branch
    %15 = sbr.rel (0) target = $region5
  $region4: #{vanilla_transformer_forward.18} parent=0 // pred_region
    _
  $region5: #{vanilla_transformer_forward.18} parent=0 // pred_fallthru
    _
  // Predicated region
  $region6: #{vanilla_transformer_forward.18} parent=0 // pred_check
    _
  $region7: #{vanilla_transformer_forward.18} parent=0 // pred_check_branch
    %17 = sbr.rel (0) target = $region9
  $region8: #{vanilla_transformer_forward.18} parent=0 // pred_region
    _
  $region9: #{vanilla_transformer_forward.18} parent=0 // pred_fallthru
    _
  // Predicated region
  $region10: #{vanilla_transformer_forward.18} parent=0 // pred_check
    _
  $region11: #{vanilla_transformer_forward.18} parent=0 // pred_check_branch
    %19 = sbr.rel (0) target = $region13
  $region12: #{vanilla_transformer_forward.18} parent=0 // pred_region
    _
  $region13: #{vanilla_transformer_forward.18} parent=0 // pred_fallthru
    _
  // Predicated region
  $region14: #{vanilla_transformer_forward.18} parent=0 // pred_check
    _
  $region15: #{vanilla_transformer_forward.18} parent=0 // pred_check_branch
    %21 = sbr.rel (0) target = $region17
  $region16: #{vanilla_transformer_forward.18} parent=0 // pred_region
    _
  $region17: #{vanilla_transformer_forward.18} parent=0 // pred_fallthru
    _
  // Predicated region
  $region18: #{vanilla_transformer_forward.18} parent=0 // pred_check
    _
  $region19: #{vanilla_transformer_forward.18} parent=0 // pred_check_branch
    %23 = sbr.rel (0) target = $region21
  $region20: #{vanilla_transformer_forward.18} parent=0 // pred_region
    _
  $region21: #{vanilla_transformer_forward.18} parent=0 // pred_fallthru
    _
  // Predicated region
  $region22: #{vanilla_transformer_forward.18} parent=0 // pred_check
    _
  $region23: #{vanilla_transformer_forward.18} parent=0 // pred_check_branch
    %25 = sbr.rel (0) target = $region25
  $region24: #{vanilla_transformer_forward.18} parent=0 // pred_region
    _
  $region25: #{vanilla_transformer_forward.18} parent=0 // pred_fallthru
    _
  // Predicated region
  $region26: #{vanilla_transformer_forward.18} parent=0 // pred_check
    _
  $region27: #{vanilla_transformer_forward.18} parent=0 // pred_check_branch
    %27 = sbr.rel (0) target = $region29
  $region28: #{vanilla_transformer_forward.18} parent=0 // pred_region
    _
  $region29: #{vanilla_transformer_forward.18} parent=0 // pred_fallthru
    _
  // Predicated region
  $region30: #{vanilla_transformer_forward.18} parent=0 // pred_check
    _
  $region31: #{vanilla_transformer_forward.18} parent=0 // pred_check_branch
    %29 = sbr.rel (0) target = $region33
  $region32: #{vanilla_transformer_forward.18} parent=0 // pred_region
    _
  $region33: #{vanilla_transformer_forward.18} parent=0 // pred_fallthru
    _
  // Predicated region
  $region34: #{vanilla_transformer_forward.18} parent=0 // pred_check
    _
  $region35: #{vanilla_transformer_forward.18} parent=0 // pred_check_branch
    %31 = sbr.rel (0) target = $region37
  $region36: #{vanilla_transformer_forward.18} parent=0 // pred_region
    _
  $region37: #{vanilla_transformer_forward.18} parent=0 // pred_fallthru
    _
  %v33 = vld [vmem:[%s0] sm:$0xf]
  %v34 = vld [vmem:[%s0 + $0x4] sm:$0xf]
  %v35 = vld [vmem:[%s1] sm:$0xf]
  %v36 = vld [vmem:[%s1 + $0x4] sm:$0xf]
  %v37 = vld [vmem:[%s1 + $0x8] sm:$0xf]
  %v38 = vld [vmem:[%s1 + $0xc] sm:$0xf]
  %v39 = vld [vmem:[%s2] sm:$0x1]
  %v41 = vlaneseq
  %v42 = vshrl.u32 %v41, 7
  %v43 = vsub.s32 0, %v42
  %v44 = vrot.slane %v39, %v43
  %v48 = vunpack.c.l.b16 %v33
  %v49 = vunpack.c.l.b16 %v34
  %v50 = vpack.c.b16 %v49, %v48
  %v55 = vunpack.c.l.b16 %v35
  %v56 = vunpack.c.l.b16 %v36
  %v57 = vunpack.c.l.b16 %v37
  %v58 = vunpack.c.l.b16 %v38
  %v59 = vpack.c.b16 %v56, %v55
  %v60 = vpack.c.b16 %v58, %v57
  %vm63 = vcmask 261120
  %v65 = vsel %vm63, %v50, 0
  %67 = vmatprep.subr.bf16.mxu0 0
  %68 = vmatpush1.bf16.msra.mxu0 %v59
  %69 = vmatprep.subr.bf16.mxu0 0
  %70 = vmatpush1.bf16.msra.mxu0 %v60
  %71 = vmatprep.subr.bf16.mxu0 0
  %72 = vmatpush1.bf16.msra.mxu0 0
  %73 = vmatprep.subr.bf16.mxu0 0
  %74 = vmatpush1.bf16.msra.mxu0 0
  %75 = vmatprep.subr.bf16.mxu0 0
  %76 = vmatpush1.bf16.msra.mxu0 0
  %77 = vmatprep.subr.bf16.mxu0 0
  %78 = vmatpush1.bf16.msra.mxu0 0
  %79 = vmatprep.subr.bf16.mxu0 0
  %80 = vmatpush1.bf16.msra.mxu0 0
  %81 = vmatprep.subr.bf16.mxu0 0
  %82 = vmatpush1.bf16.msra.mxu0 0
  %83 = vmatprep.subr.bf16.mxu0 0
  %84 = vmatpush1.bf16.msra.mxu0 0
  %85 = vmatprep.subr.bf16.mxu0 0
  %86 = vmatpush1.bf16.msra.mxu0 0
  %87 = vmatprep.subr.bf16.mxu0 0
  %88 = vmatpush1.bf16.msra.mxu0 0
  %89 = vmatprep.subr.bf16.mxu0 0
  %90 = vmatpush1.bf16.msra.mxu0 0
  %91 = vmatprep.subr.bf16.mxu0 0
  %92 = vmatpush1.bf16.msra.mxu0 0
  %93 = vmatprep.subr.bf16.mxu0 0
  %94 = vmatpush1.bf16.msra.mxu0 0
  %95 = vmatprep.subr.bf16.mxu0 0
  %96 = vmatpush1.bf16.msra.mxu0 0
  %97 = vmatprep.subr.bf16.mxu0 0
  %98 = vmatpush1.bf16.msra.mxu0 0
  %99 = vmatprep.mubr.bf16.mxu0 0
  %100 = vmatmul.mubr.bf16.gmra.mrb[0].mxu0 %v65
  %v101 = vpop.f32.mrb[0].mxu0
  %v102 = vadd.f32 %v44, %v101
  %v103 = vpop.f32.mrb[0].mxu0
  %v104 = vpop.f32.mrb[0].mxu0
  %v105 = vadd.f32 %v44, %v104
  %v106 = vpop.f32.mrb[0].mxu0
  %107 = vdwg.mxu0
  %v108 = vmax.f32 %v102, 0.0
  %v109 = vmax.f32 %v105, 0.0
  %v110 = vpack.c.bf16 %v109, %v108
  %v111 = vld [vmem:[%s3] sm:$0xf]
  %v112 = vld [vmem:[%s3 + $0x4] sm:$0xf]
  %v113 = vld [vmem:[%s3 + $0x8] sm:$0xf]
  %v114 = vld [vmem:[%s3 + $0xc] sm:$0xf]
  %v115 = vld [vmem:[%s3 + $0x10] sm:$0xf]
  %v116 = vld [vmem:[%s3 + $0x14] sm:$0xf]
  %v117 = vld [vmem:[%s3 + $0x18] sm:$0xf]
  %v118 = vld [vmem:[%s3 + $0x1c] sm:$0xf]
  %v119 = vld [vmem:[%s4] sm:$0x1]
  %v121 = vlaneseq
  %v122 = vshrl.u32 %v121, 7
  %v123 = vsub.s32 0, %v122
  %v124 = vrot.slane %v119, %v123
  %v134 = vunpack.c.l.b16 %v111
  %v135 = vunpack.c.l.b16 %v112
  %v136 = vunpack.c.l.b16 %v113
  %v137 = vunpack.c.l.b16 %v114
  %v138 = vunpack.c.l.b16 %v115
  %v139 = vunpack.c.l.b16 %v116
  %v140 = vunpack.c.l.b16 %v117
  %v141 = vunpack.c.l.b16 %v118
  %v142 = vpack.c.b16 %v135, %v134
  %v143 = vpack.c.b16 %v137, %v136
  %v144 = vpack.c.b16 %v139, %v138
  %v145 = vpack.c.b16 %v141, %v140
  %vm150 = vcmask 523264
  %v152 = vsel %vm150, %v110, 0
  %154 = vmatprep.subr.bf16.mxu0 0
  %155 = vmatpush1.bf16.msra.mxu0 %v142
  %156 = vmatprep.subr.bf16.mxu0 0
  %157 = vmatpush1.bf16.msra.mxu0 %v143
  %158 = vmatprep.subr.bf16.mxu0 0
  %159 = vmatpush1.bf16.msra.mxu0 %v144
  %160 = vmatprep.subr.bf16.mxu0 0
  %161 = vmatpush1.bf16.msra.mxu0 %v145
  %162 = vmatprep.subr.bf16.mxu0 0
  %163 = vmatpush1.bf16.msra.mxu0 0
  %164 = vmatprep.subr.bf16.mxu0 0
  %165 = vmatpush1.bf16.msra.mxu0 0
  %166 = vmatprep.subr.bf16.mxu0 0
  %167 = vmatpush1.bf16.msra.mxu0 0
  %168 = vmatprep.subr.bf16.mxu0 0
  %169 = vmatpush1.bf16.msra.mxu0 0
  %170 = vmatprep.subr.bf16.mxu0 0
  %171 = vmatpush1.bf16.msra.mxu0 0
  %172 = vmatprep.subr.bf16.mxu0 0
  %173 = vmatpush1.bf16.msra.mxu0 0
  %174 = vmatprep.subr.bf16.mxu0 0
  %175 = vmatpush1.bf16.msra.mxu0 0
  %176 = vmatprep.subr.bf16.mxu0 0
  %177 = vmatpush1.bf16.msra.mxu0 0
  %178 = vmatprep.subr.bf16.mxu0 0
  %179 = vmatpush1.bf16.msra.mxu0 0
  %180 = vmatprep.subr.bf16.mxu0 0
  %181 = vmatpush1.bf16.msra.mxu0 0
  %182 = vmatprep.subr.bf16.mxu0 0
  %183 = vmatpush1.bf16.msra.mxu0 0
  %184 = vmatprep.subr.bf16.mxu0 0
  %185 = vmatpush1.bf16.msra.mxu0 0
  %186 = vmatprep.mubr.bf16.mxu0 0
  %187 = vmatmul.mubr.bf16.gmra.mrb[0].mxu0 %v152
  %v188 = vpop.f32.mrb[0].mxu0
  %v189 = vadd.f32 %v124, %v188
  %v190 = vpop.f32.mrb[0].mxu0
  %v191 = vpop.f32.mrb[0].mxu0
  %v192 = vadd.f32 %v124, %v191
  %v193 = vpop.f32.mrb[0].mxu0
  %194 = vdwg.mxu0
  %v195 = vunpack.c.l.bf16 %v33
  %v196 = vunpack.c.l.bf16 %v34
  %v197 = vadd.f32 %v195, %v189
  %v198 = vadd.f32 %v196, %v192
  %v199 = vld [vmem:[%s5] sm:$0x1]
  %v200 = vld [vmem:[%s6] sm:$0x1]
  %v201 = vsel %vm63, %v197, 0.0
  %202 = vadd.xlane.f32.xlu0 %v201
  %v203 = vpop.xlane.xlu0 %202
  %v204 = vsel %vm63, %v198, 0.0
  %205 = vadd.xlane.f32.xlu0 %v204
  %v206 = vpop.xlane.xlu0 %205
  %v207 = vrcp.pop 32.0
  %v208 = vmul.f32 %v203, %v207
  %v209 = vmul.f32 %v206, %v207
  %v210 = vsub.f32 %v197, %v208
  %v211 = vsub.f32 %v198, %v209
  %v212 = vmul.f32 %v210, %v210
  %v213 = vmul.f32 %v211, %v211
  %v214 = vsel %vm63, %v212, 0.0
  %215 = vadd.xlane.f32.xlu0 %v214
  %v216 = vpop.xlane.xlu0 %215
  %v217 = vsel %vm63, %v213, 0.0
  %218 = vadd.xlane.f32.xlu0 %v217
  %v219 = vpop.xlane.xlu0 %218
  %v220 = vmul.f32 %v216, %v207
  %v221 = vmul.f32 %v219, %v207
  %v222 = vadd.f32 %v220, 1e-05
  %v223 = vadd.f32 %v221, 1e-05
  %v224 = vrsqrt.pop %v222
  %v225 = vrsqrt.pop %v223
  %v226 = vmul.f32 %v210, %v224
  %v227 = vmul.f32 %v211, %v225
  %v229 = vlaneseq
  %v230 = vshrl.u32 %v229, 7
  %v231 = vsub.s32 0, %v230
  %v232 = vrot.slane %v199, %v231
  %v234 = vmul.f32 %v226, %v232
  %v235 = vmul.f32 %v227, %v232
  %v237 = vlaneseq
  %v238 = vshrl.u32 %v237, 7
  %v239 = vsub.s32 0, %v238
  %v240 = vrot.slane %v200, %v239
  %v242 = vadd.f32 %v234, %v240
  %v243 = vadd.f32 %v235, %v240
  %v244 = vld [vmem:[%s7] sm:$0x1]
  %v245 = vld [vmem:[%s8] sm:$0x1]
  %v246 = vsel %vm63, %v242, 0.0
  %247 = vadd.xlane.f32.xlu0 %v246
  %v248 = vpop.xlane.xlu0 %247
  %v249 = vsel %vm63, %v243, 0.0
  %250 = vadd.xlane.f32.xlu0 %v249
  %v251 = vpop.xlane.xlu0 %250
  %v252 = vmul.f32 %v248, %v207
  %v253 = vmul.f32 %v251, %v207
  %v254 = vsub.f32 %v242, %v252
  %v255 = vsub.f32 %v243, %v253
  %v256 = vmul.f32 %v254, %v254
  %v257 = vmul.f32 %v255, %v255
  %v258 = vsel %vm63, %v256, 0.0
  %259 = vadd.xlane.f32.xlu0 %v258
  %v260 = vpop.xlane.xlu0 %259
  %v261 = vsel %vm63, %v257, 0.0
  %262 = vadd.xlane.f32.xlu0 %v261
  %v263 = vpop.xlane.xlu0 %262
  %v264 = vmul.f32 %v260, %v207
  %v265 = vmul.f32 %v263, %v207
  %v266 = vadd.f32 %v264, 1e-05
  %v267 = vadd.f32 %v265, 1e-05
  %v268 = vrsqrt.pop %v266
  %v269 = vrsqrt.pop %v267
  %v270 = vmul.f32 %v254, %v268
  %v271 = vmul.f32 %v255, %v269
  %v273 = vlaneseq
  %v274 = vshrl.u32 %v273, 7
  %v275 = vsub.s32 0, %v274
  %v276 = vrot.slane %v244, %v275
  %v278 = vmul.f32 %v270, %v276
  %v279 = vmul.f32 %v271, %v276
  %v281 = vlaneseq
  %v282 = vshrl.u32 %v281, 7
  %v283 = vsub.s32 0, %v282
  %v284 = vrot.slane %v245, %v283
  %v286 = vadd.f32 %v278, %v284
  %v287 = vadd.f32 %v279, %v284
  %v288 = vpack.c.bf16 %v287, %v286
  %v290 = vunpack.c.l.b16 %v288
  %v291 = vunpack.c.h.b16 %v288
  %v292 = vpack.c.b16 %v290, %v290
  %v293 = vpack.c.b16 %v291, %v291
  %vm296 = vcmask 257024
  %297 = vst.msk [vmem:[%s9] sm:$0xf] %vm296, %v292
  %298 = vst.msk [vmem:[%s9 + $0x4] sm:$0xf] %vm296, %v293
  // Predicated region
  $region38: #{vanilla_transformer_forward.18} parent=0 // pred_check
    _
  $region39: #{vanilla_transformer_forward.18} parent=0 // pred_check_branch
    %300 = sbr.rel (0) target = $region41
  $region40: #{vanilla_transformer_forward.18} parent=0 // pred_region
    _
  $region41: #{vanilla_transformer_forward.18} parent=0 // pred_fallthru
    _
  // Predicated region
  $region42: #{vanilla_transformer_forward.18} parent=0 // pred_check
    _
  $region43: #{vanilla_transformer_forward.18} parent=0 // pred_check_branch
    %302 = sbr.rel (0) target = $region45
  $region44: #{vanilla_transformer_forward.18} parent=0 // pred_region
    _
  $region45: #{vanilla_transformer_forward.18} parent=0 // pred_fallthru
    _

// kernel: vanilla_transformer_forward.16
$region0: #{vanilla_transformer_forward.16}
  #allocation0 [shape = 'u32[]', space=smem, size = 0x4, offset = 0x4, fixed_abs, tag = 'smem constant byte address 0x4 - core index']
  #allocation1 [shape = 'u32[144,128]{1,0:T(1,128)}', space=vmem, size = 0x12000, scoped, tag = 'internal scratch']
  %s0 = inlined_call_operand.vmem [shape: bf16[16,32], index: 0, kind: input, shape index: {}]
  %s1 = inlined_call_operand.vmem [shape: bf16[32,64], index: 1, kind: input, shape index: {}]
  %s2 = inlined_call_operand.vmem [shape: f32[1,64], index: 2, kind: input, shape index: {}]
  %s3 = inlined_call_operand.vmem [shape: bf16[64,32], index: 3, kind: input, shape index: {}]
  %s4 = inlined_call_operand.vmem [shape: f32[1,32], index: 4, kind: input, shape index: {}]
  %s5 = inlined_call_operand.vmem [shape: f32[1,32], index: 5, kind: input, shape index: {}]
  %s6 = inlined_call_operand.vmem [shape: f32[1,32], index: 6, kind: input, shape index: {}]
  %s7 = inlined_call_operand.vmem [shape: bf16[16,32], index: 7, kind: output, shape index: {}]
  %s8 = sld [smem:[#allocation0]]
  $region38: #{vanilla_transformer_forward.16} parent=0
    _
  %s10 = ssub.s32 1, %s8
  %s11 = scalar_select 0, %s10, %s8
  // Predicated region
  $region2: #{vanilla_transformer_forward.16} parent=0 // pred_check
    _
  $region3: #{vanilla_transformer_forward.16} parent=0 // pred_check_branch
    %13 = sbr.rel (0) target = $region5
  $region4: #{vanilla_transformer_forward.16} parent=0 // pred_region
    _
  $region5: #{vanilla_transformer_forward.16} parent=0 // pred_fallthru
    _
  // Predicated region
  $region6: #{vanilla_transformer_forward.16} parent=0 // pred_check
    _
  $region7: #{vanilla_transformer_forward.16} parent=0 // pred_check_branch
    %15 = sbr.rel (0) target = $region9
  $region8: #{vanilla_transformer_forward.16} parent=0 // pred_region
    _
  $region9: #{vanilla_transformer_forward.16} parent=0 // pred_fallthru
    _
  // Predicated region
  $region10: #{vanilla_transformer_forward.16} parent=0 // pred_check
    _
  $region11: #{vanilla_transformer_forward.16} parent=0 // pred_check_branch
    %17 = sbr.rel (0) target = $region13
  $region12: #{vanilla_transformer_forward.16} parent=0 // pred_region
    _
  $region13: #{vanilla_transformer_forward.16} parent=0 // pred_fallthru
    _
  // Predicated region
  $region14: #{vanilla_transformer_forward.16} parent=0 // pred_check
    _
  $region15: #{vanilla_transformer_forward.16} parent=0 // pred_check_branch
    %19 = sbr.rel (0) target = $region17
  $region16: #{vanilla_transformer_forward.16} parent=0 // pred_region
    _
  $region17: #{vanilla_transformer_forward.16} parent=0 // pred_fallthru
    _
  // Predicated region
  $region18: #{vanilla_transformer_forward.16} parent=0 // pred_check
    _
  $region19: #{vanilla_transformer_forward.16} parent=0 // pred_check_branch
    %21 = sbr.rel (0) target = $region21
  $region20: #{vanilla_transformer_forward.16} parent=0 // pred_region
    _
  $region21: #{vanilla_transformer_forward.16} parent=0 // pred_fallthru
    _
  // Predicated region
  $region22: #{vanilla_transformer_forward.16} parent=0 // pred_check
    _
  $region23: #{vanilla_transformer_forward.16} parent=0 // pred_check_branch
    %23 = sbr.rel (0) target = $region25
  $region24: #{vanilla_transformer_forward.16} parent=0 // pred_region
    _
  $region25: #{vanilla_transformer_forward.16} parent=0 // pred_fallthru
    _
  // Predicated region
  $region26: #{vanilla_transformer_forward.16} parent=0 // pred_check
    _
  $region27: #{vanilla_transformer_forward.16} parent=0 // pred_check_branch
    %25 = sbr.rel (0) target = $region29
  $region28: #{vanilla_transformer_forward.16} parent=0 // pred_region
    _
  $region29: #{vanilla_transformer_forward.16} parent=0 // pred_fallthru
    _
  %v27 = vld [vmem:[%s0] sm:$0xf]
  %v28 = vld [vmem:[%s0 + $0x4] sm:$0xf]
  %v29 = vld [vmem:[%s1] sm:$0xf]
  %v30 = vld [vmem:[%s1 + $0x4] sm:$0xf]
  %v31 = vld [vmem:[%s1 + $0x8] sm:$0xf]
  %v32 = vld [vmem:[%s1 + $0xc] sm:$0xf]
  %v33 = vld [vmem:[%s2] sm:$0x1]
  %v35 = vlaneseq
  %v36 = vshrl.u32 %v35, 7
  %v37 = vsub.s32 0, %v36
  %v38 = vrot.slane %v33, %v37
  %v42 = vunpack.c.l.b16 %v27
  %v43 = vunpack.c.l.b16 %v28
  %v44 = vpack.c.b16 %v43, %v42
  %v49 = vunpack.c.l.b16 %v29
  %v50 = vunpack.c.l.b16 %v30
  %v51 = vunpack.c.l.b16 %v31
  %v52 = vunpack.c.l.b16 %v32
  %v53 = vpack.c.b16 %v50, %v49
  %v54 = vpack.c.b16 %v52, %v51
  %vm57 = vcmask 261120
  %v59 = vsel %vm57, %v44, 0
  %61 = vmatprep.subr.bf16.mxu0 0
  %62 = vmatpush1.bf16.msra.mxu0 %v53
  %63 = vmatprep.subr.bf16.mxu0 0
  %64 = vmatpush1.bf16.msra.mxu0 %v54
  %65 = vmatprep.subr.bf16.mxu0 0
  %66 = vmatpush1.bf16.msra.mxu0 0
  %67 = vmatprep.subr.bf16.mxu0 0
  %68 = vmatpush1.bf16.msra.mxu0 0
  %69 = vmatprep.subr.bf16.mxu0 0
  %70 = vmatpush1.bf16.msra.mxu0 0
  %71 = vmatprep.subr.bf16.mxu0 0
  %72 = vmatpush1.bf16.msra.mxu0 0
  %73 = vmatprep.subr.bf16.mxu0 0
  %74 = vmatpush1.bf16.msra.mxu0 0
  %75 = vmatprep.subr.bf16.mxu0 0
  %76 = vmatpush1.bf16.msra.mxu0 0
  %77 = vmatprep.subr.bf16.mxu0 0
  %78 = vmatpush1.bf16.msra.mxu0 0
  %79 = vmatprep.subr.bf16.mxu0 0
  %80 = vmatpush1.bf16.msra.mxu0 0
  %81 = vmatprep.subr.bf16.mxu0 0
  %82 = vmatpush1.bf16.msra.mxu0 0
  %83 = vmatprep.subr.bf16.mxu0 0
  %84 = vmatpush1.bf16.msra.mxu0 0
  %85 = vmatprep.subr.bf16.mxu0 0
  %86 = vmatpush1.bf16.msra.mxu0 0
  %87 = vmatprep.subr.bf16.mxu0 0
  %88 = vmatpush1.bf16.msra.mxu0 0
  %89 = vmatprep.subr.bf16.mxu0 0
  %90 = vmatpush1.bf16.msra.mxu0 0
  %91 = vmatprep.subr.bf16.mxu0 0
  %92 = vmatpush1.bf16.msra.mxu0 0
  %93 = vmatprep.mubr.bf16.mxu0 0
  %94 = vmatmul.mubr.bf16.gmra.mrb[0].mxu0 %v59
  %v95 = vpop.f32.mrb[0].mxu0
  %v96 = vadd.f32 %v38, %v95
  %v97 = vpop.f32.mrb[0].mxu0
  %v98 = vpop.f32.mrb[0].mxu0
  %v99 = vadd.f32 %v38, %v98
  %v100 = vpop.f32.mrb[0].mxu0
  %101 = vdwg.mxu0
  %v102 = vmax.f32 %v96, 0.0
  %v103 = vmax.f32 %v99, 0.0
  %v104 = vpack.c.bf16 %v103, %v102
  %v105 = vld [vmem:[%s3] sm:$0xf]
  %v106 = vld [vmem:[%s3 + $0x4] sm:$0xf]
  %v107 = vld [vmem:[%s3 + $0x8] sm:$0xf]
  %v108 = vld [vmem:[%s3 + $0xc] sm:$0xf]
  %v109 = vld [vmem:[%s3 + $0x10] sm:$0xf]
  %v110 = vld [vmem:[%s3 + $0x14] sm:$0xf]
  %v111 = vld [vmem:[%s3 + $0x18] sm:$0xf]
  %v112 = vld [vmem:[%s3 + $0x1c] sm:$0xf]
  %v113 = vld [vmem:[%s4] sm:$0x1]
  %v115 = vlaneseq
  %v116 = vshrl.u32 %v115, 7
  %v117 = vsub.s32 0, %v116
  %v118 = vrot.slane %v113, %v117
  %v128 = vunpack.c.l.b16 %v105
  %v129 = vunpack.c.l.b16 %v106
  %v130 = vunpack.c.l.b16 %v107
  %v131 = vunpack.c.l.b16 %v108
  %v132 = vunpack.c.l.b16 %v109
  %v133 = vunpack.c.l.b16 %v110
  %v134 = vunpack.c.l.b16 %v111
  %v135 = vunpack.c.l.b16 %v112
  %v136 = vpack.c.b16 %v129, %v128
  %v137 = vpack.c.b16 %v131, %v130
  %v138 = vpack.c.b16 %v133, %v132
  %v139 = vpack.c.b16 %v135, %v134
  %vm144 = vcmask 523264
  %v146 = vsel %vm144, %v104, 0
  %148 = vmatprep.subr.bf16.mxu0 0
  %149 = vmatpush1.bf16.msra.mxu0 %v136
  %150 = vmatprep.subr.bf16.mxu0 0
  %151 = vmatpush1.bf16.msra.mxu0 %v137
  %152 = vmatprep.subr.bf16.mxu0 0
  %153 = vmatpush1.bf16.msra.mxu0 %v138
  %154 = vmatprep.subr.bf16.mxu0 0
  %155 = vmatpush1.bf16.msra.mxu0 %v139
  %156 = vmatprep.subr.bf16.mxu0 0
  %157 = vmatpush1.bf16.msra.mxu0 0
  %158 = vmatprep.subr.bf16.mxu0 0
  %159 = vmatpush1.bf16.msra.mxu0 0
  %160 = vmatprep.subr.bf16.mxu0 0
  %161 = vmatpush1.bf16.msra.mxu0 0
  %162 = vmatprep.subr.bf16.mxu0 0
  %163 = vmatpush1.bf16.msra.mxu0 0
  %164 = vmatprep.subr.bf16.mxu0 0
  %165 = vmatpush1.bf16.msra.mxu0 0
  %166 = vmatprep.subr.bf16.mxu0 0
  %167 = vmatpush1.bf16.msra.mxu0 0
  %168 = vmatprep.subr.bf16.mxu0 0
  %169 = vmatpush1.bf16.msra.mxu0 0
  %170 = vmatprep.subr.bf16.mxu0 0
  %171 = vmatpush1.bf16.msra.mxu0 0
  %172 = vmatprep.subr.bf16.mxu0 0
  %173 = vmatpush1.bf16.msra.mxu0 0
  %174 = vmatprep.subr.bf16.mxu0 0
  %175 = vmatpush1.bf16.msra.mxu0 0
  %176 = vmatprep.subr.bf16.mxu0 0
  %177 = vmatpush1.bf16.msra.mxu0 0
  %178 = vmatprep.subr.bf16.mxu0 0
  %179 = vmatpush1.bf16.msra.mxu0 0
  %180 = vmatprep.mubr.bf16.mxu0 0
  %181 = vmatmul.mubr.bf16.gmra.mrb[0].mxu0 %v146
  %v182 = vpop.f32.mrb[0].mxu0
  %v183 = vadd.f32 %v118, %v182
  %v184 = vpop.f32.mrb[0].mxu0
  %v185 = vpop.f32.mrb[0].mxu0
  %v186 = vadd.f32 %v118, %v185
  %v187 = vpop.f32.mrb[0].mxu0
  %188 = vdwg.mxu0
  %v189 = vunpack.c.l.bf16 %v27
  %v190 = vunpack.c.l.bf16 %v28
  %v191 = vadd.f32 %v189, %v183
  %v192 = vadd.f32 %v190, %v186
  %v193 = vld [vmem:[%s5] sm:$0x1]
  %v194 = vld [vmem:[%s6] sm:$0x1]
  %v195 = vsel %vm57, %v191, 0.0
  %196 = vadd.xlane.f32.xlu0 %v195
  %v197 = vpop.xlane.xlu0 %196
  %v198 = vsel %vm57, %v192, 0.0
  %199 = vadd.xlane.f32.xlu0 %v198
  %v200 = vpop.xlane.xlu0 %199
  %v201 = vrcp.pop 32.0
  %v202 = vmul.f32 %v197, %v201
  %v203 = vmul.f32 %v200, %v201
  %v204 = vsub.f32 %v191, %v202
  %v205 = vsub.f32 %v192, %v203
  %v206 = vmul.f32 %v204, %v204
  %v207 = vmul.f32 %v205, %v205
  %v208 = vsel %vm57, %v206, 0.0
  %209 = vadd.xlane.f32.xlu0 %v208
  %v210 = vpop.xlane.xlu0 %209
  %v211 = vsel %vm57, %v207, 0.0
  %212 = vadd.xlane.f32.xlu0 %v211
  %v213 = vpop.xlane.xlu0 %212
  %v214 = vmul.f32 %v210, %v201
  %v215 = vmul.f32 %v213, %v201
  %v216 = vadd.f32 %v214, 1e-05
  %v217 = vadd.f32 %v215, 1e-05
  %v218 = vrsqrt.pop %v216
  %v219 = vrsqrt.pop %v217
  %v220 = vmul.f32 %v204, %v218
  %v221 = vmul.f32 %v205, %v219
  %v223 = vlaneseq
  %v224 = vshrl.u32 %v223, 7
  %v225 = vsub.s32 0, %v224
  %v226 = vrot.slane %v193, %v225
  %v228 = vmul.f32 %v220, %v226
  %v229 = vmul.f32 %v221, %v226
  %v231 = vlaneseq
  %v232 = vshrl.u32 %v231, 7
  %v233 = vsub.s32 0, %v232
  %v234 = vrot.slane %v194, %v233
  %v236 = vadd.f32 %v228, %v234
  %v237 = vadd.f32 %v229, %v234
  %v238 = vpack.c.bf16 %v237, %v236
  %v240 = vunpack.c.l.b16 %v238
  %v241 = vunpack.c.h.b16 %v238
  %v242 = vpack.c.b16 %v240, %v240
  %v243 = vpack.c.b16 %v241, %v241
  %vm246 = vcmask 257024
  %247 = vst.msk [vmem:[%s7] sm:$0xf] %vm246, %v242
  %248 = vst.msk [vmem:[%s7 + $0x4] sm:$0xf] %vm246, %v243
  // Predicated region
  $region30: #{vanilla_transformer_forward.16} parent=0 // pred_check
    _
  $region31: #{vanilla_transformer_forward.16} parent=0 // pred_check_branch
    %250 = sbr.rel (0) target = $region33
  $region32: #{vanilla_transformer_forward.16} parent=0 // pred_region
    _
  $region33: #{vanilla_transformer_forward.16} parent=0 // pred_fallthru
    _
  // Predicated region
  $region34: #{vanilla_transformer_forward.16} parent=0 // pred_check
    _
  $region35: #{vanilla_transformer_forward.16} parent=0 // pred_check_branch
    %252 = sbr.rel (0) target = $region37
  $region36: #{vanilla_transformer_forward.16} parent=0 // pred_region
    _
  $region37: #{vanilla_transformer_forward.16} parent=0 // pred_fallthru
    _

// kernel: vanilla_transformer_forward.15
$region0: #{vanilla_transformer_forward.15}
  #allocation0 [shape = 'u32[]', space=smem, size = 0x4, offset = 0x4, fixed_abs, tag = 'smem constant byte address 0x4 - core index']
  #allocation1 [shape = 'u32[144,128]{1,0:T(1,128)}', space=vmem, size = 0x12000, scoped, tag = 'internal scratch']
  #allocation2 [shape = 'bf16[8,32]{1,0:T(8,128)(2,1)}', space=vmem, size = 0x800, scoped, tag = 'scratch operand']
  #allocation3 [shape = 'bf16[8,32]{1,0:T(8,128)(2,1)}', space=vmem, size = 0x800, scoped, tag = 'scratch operand']
  #allocation4 [shape = 'f32[8,32]{1,0:T(8,128)}', space=vmem, size = 0x1000, scoped, tag = 'scratch operand']
  %s0 = inlined_call_operand.vmem [shape: bf16[2,8,32], index: 0, kind: input, shape index: {}, may-alias: {0,1}]
  %s1 = inlined_call_operand.vmem [shape: bf16[2,8,32], index: 1, kind: input, shape index: {}, may-alias: {0,1}]
  %s2 = inlined_call_operand.vmem [shape: bf16[32,32], index: 2, kind: input, shape index: {}]
  %s3 = inlined_call_operand.vmem [shape: bf16[32,32], index: 3, kind: input, shape index: {}]
  %s4 = inlined_call_operand.vmem [shape: bf16[32,32], index: 4, kind: input, shape index: {}]
  %s5 = inlined_call_operand.vmem [shape: bf16[32,32], index: 5, kind: input, shape index: {}]
  %s6 = inlined_call_operand.vmem [shape: f32[1,32], index: 6, kind: input, shape index: {}]
  %s7 = inlined_call_operand.vmem [shape: f32[1,32], index: 7, kind: input, shape index: {}]
  %s8 = inlined_call_operand.vmem [shape: f32[1,32], index: 8, kind: input, shape index: {}]
  %s9 = inlined_call_operand.vmem [shape: f32[1,32], index: 9, kind: input, shape index: {}]
  %s10 = inlined_call_operand.vmem [shape: f32[1,32], index: 10, kind: input, shape index: {}]
  %s11 = inlined_call_operand.vmem [shape: f32[1,32], index: 11, kind: input, shape index: {}]
  %s12 = inlined_call_operand.vmem [shape: bf16[2,8,32], index: 12, kind: output, shape index: {}]
  %s13 = sld [smem:[#allocation0]]
  $region85: #{vanilla_transformer_forward.15} parent=0
    _
  %s15 = ssub.s32 1, %s13
  %s16 = scalar_select 0, %s15, %s13
  loop: start=0, step=1, limit=4
  $region2: #{vanilla_transformer_forward.15} parent=0 // loop_pre_header
    _
  $region3: #{vanilla_transformer_forward.15} parent=0 // loop_header
    %s18 = sphi 0, %s22
    %p19 = scmp.ge.s32.totalorder %s18, 4
    %s25 = sphi 0, %s37
    %s26 = sphi 0, %s33
    %s27 = sphi 0, %s25
    %s28 = sphi 0, %s26
    %s29 = sphi 0, %s27
    %s30 = sphi 0, %s28
    %s42 = sphi 0, %s44
    %s45 = sphi 0, %s42
    %s46 = sphi 0, %s45
    %s62 = sphi 0, %s46
    %s68 = sphi 0, %s70
    %s71 = sphi 0, %s68
    %s72 = sphi 0, %s71
    %s88 = sphi 0, %s72
    %s92 = sphi 0, %s92
    %s94 = sphi 0, %s92
    %s95 = sphi 0, %s94
    %s109 = sphi 0, %s95
    %s113 = sphi 0, %s113
    %s115 = sphi 0, %s113
    %s116 = sphi 0, %s115
    %s130 = sphi 0, %s116
    %s134 = sphi 0, %s134
    %s136 = sphi 0, %s134
    %s137 = sphi 0, %s136
    %s151 = sphi 0, %s137
    %s155 = sphi 0, %s155
    %s157 = sphi 0, %s155
    %s158 = sphi 0, %s157
    %s172 = sphi 0, %s158
    %s176 = sphi 0, %s176
    %s178 = sphi 0, %s176
    %s179 = sphi 0, %s178
    %s193 = sphi 0, %s179
    %s197 = sphi 0, %s197
    %s199 = sphi 0, %s197
    %s200 = sphi 0, %s199
    %s214 = sphi 0, %s200
    %s218 = sphi 0, %s218
    %s220 = sphi 0, %s218
    %s221 = sphi 0, %s220
    %s235 = sphi 0, %s221
    %s239 = sphi 0, %s239
    %s241 = sphi 0, %s239
    %s242 = sphi 0, %s241
    %s256 = sphi 0, %s242
    %s260 = sphi 0, %s260
    %s262 = sphi 0, %s260
    %s263 = sphi 0, %s262
    %s277 = sphi 0, %s263
    %s281 = sphi 0, %s281
    %s283 = sphi 0, %s281
    %s284 = sphi 0, %s283
    %s298 = sphi 0, %s284
    %s306 = sphi 0, %s308
    %s309 = sphi 0, %s306
    %s310 = sphi 0, %s309
    %s326 = sphi 0, %s310
  $region4: #{vanilla_transformer_forward.15} parent=0 // loop_header_branch
    %21 = sbr.rel (%p19) target = $region8
  $region5: #{vanilla_transformer_forward.15} parent=0 // loop_body
    %s23 = ssub.s32 %s18, 1
    %s24 = ssub.s32 %s18, 2
    %s31 = sadd.s32 1, %s26
    %p32 = scmp.ge.s32.totalorder %s31, 1
    %s33 = scalar_select %p32, 0, %s31
    %s34 = sadd.s32 1, %s25
    %s35 = scalar_select %p32, %s34, %s25
    %p36 = scmp.ge.s32.totalorder %s35, 2
    %s37 = scalar_select %p36, 0, %s35
    %s38 = ssub.s32 %s25, %s37
    %s39 = ssub.s32 %s26, %s33
    %s40 = sor.u32 %s38, %s39
    %p41 = scmp.eq.s32.totalorder %s40, 0
    %s43 = sadd.s32 %s42, 1
    %s44 = scalar_select %p41, %s42, %s43
    %p47 = pneg %p41
    %p48 = scmp.eq.s32.totalorder %s18, 1
    %p49 = por %p47, %p48
    %p50 = scmp.ne.s32.totalorder %s42, %s45
    %p51 = scmp.eq.s32.totalorder %s18, 0
    %p52 = por %p50, %p51
    %p53 = scmp.ne.s32.totalorder %s42, %s45
    %p54 = scmp.eq.s32.totalorder %s23, 1
    %p55 = por %p53, %p54
    %p56 = scmp.ne.s32.totalorder %s45, %s46
    %p57 = scmp.eq.s32.totalorder %s23, 0
    %p58 = por %p56, %p57
    %p59 = scmp.ne.s32.totalorder %s45, %s46
    %p60 = scmp.eq.s32.totalorder %s24, 1
    %p61 = por %p59, %p60
    %p63 = scmp.ne.s32.totalorder %s46, %s62
    %p64 = scmp.eq.s32.totalorder %s24, 0
    %p65 = por %p63, %p64
    %s66 = ssub.s32 %s25, %s37
    %p67 = scmp.eq.s32.totalorder %s66, 0
    %s69 = sadd.s32 %s68, 1
    %s70 = scalar_select %p67, %s68, %s69
    %p73 = pneg %p67
    %p74 = scmp.eq.s32.totalorder %s18, 1
    %p75 = por %p73, %p74
    %p76 = scmp.ne.s32.totalorder %s68, %s71
    %p77 = scmp.eq.s32.totalorder %s18, 0
    %p78 = por %p76, %p77
    %p79 = scmp.ne.s32.totalorder %s68, %s71
    %p80 = scmp.eq.s32.totalorder %s23, 1
    %p81 = por %p79, %p80
    %p82 = scmp.ne.s32.totalorder %s71, %s72
    %p83 = scmp.eq.s32.totalorder %s23, 0
    %p84 = por %p82, %p83
    %p85 = scmp.ne.s32.totalorder %s71, %s72
    %p86 = scmp.eq.s32.totalorder %s24, 1
    %p87 = por %p85, %p86
    %p89 = scmp.ne.s32.totalorder %s72, %s88
    %p90 = scmp.eq.s32.totalorder %s24, 0
    %p91 = por %p89, %p90
    %s93 = sadd.s32 %s92, 1
    %p96 = scmp.eq.s32.totalorder %s18, 1
    %p97 = scmp.ne.s32.totalorder %s92, %s94
    %p98 = scmp.eq.s32.totalorder %s18, 0
    %p99 = por %p97, %p98
    %p100 = scmp.ne.s32.totalorder %s92, %s94
    %p101 = scmp.eq.s32.totalorder %s23, 1
    %p102 = por %p100, %p101
    %p103 = scmp.ne.s32.totalorder %s94, %s95
    %p104 = scmp.eq.s32.totalorder %s23, 0
    %p105 = por %p103, %p104
    %p106 = scmp.ne.s32.totalorder %s94, %s95
    %p107 = scmp.eq.s32.totalorder %s24, 1
    %p108 = por %p106, %p107
    %p110 = scmp.ne.s32.totalorder %s95, %s109
    %p111 = scmp.eq.s32.totalorder %s24, 0
    %p112 = por %p110, %p111
    %s114 = sadd.s32 %s113, 1
    %p117 = scmp.eq.s32.totalorder %s18, 1
    %p118 = scmp.ne.s32.totalorder %s113, %s115
    %p119 = scmp.eq.s32.totalorder %s18, 0
    %p120 = por %p118, %p119
    %p121 = scmp.ne.s32.totalorder %s113, %s115
    %p122 = scmp.eq.s32.totalorder %s23, 1
    %p123 = por %p121, %p122
    %p124 = scmp.ne.s32.totalorder %s115, %s116
    %p125 = scmp.eq.s32.totalorder %s23, 0
    %p126 = por %p124, %p125
    %p127 = scmp.ne.s32.totalorder %s115, %s116
    %p128 = scmp.eq.s32.totalorder %s24, 1
    %p129 = por %p127, %p128
    %p131 = scmp.ne.s32.totalorder %s116, %s130
    %p132 = scmp.eq.s32.totalorder %s24, 0
    %p133 = por %p131, %p132
    %s135 = sadd.s32 %s134, 1
    %p138 = scmp.eq.s32.totalorder %s18, 1
    %p139 = scmp.ne.s32.totalorder %s134, %s136
    %p140 = scmp.eq.s32.totalorder %s18, 0
    %p141 = por %p139, %p140
    %p142 = scmp.ne.s32.totalorder %s134, %s136
    %p143 = scmp.eq.s32.totalorder %s23, 1
    %p144 = por %p142, %p143
    %p145 = scmp.ne.s32.totalorder %s136, %s137
    %p146 = scmp.eq.s32.totalorder %s23, 0
    %p147 = por %p145, %p146
    %p148 = scmp.ne.s32.totalorder %s136, %s137
    %p149 = scmp.eq.s32.totalorder %s24, 1
    %p150 = por %p148, %p149
    %p152 = scmp.ne.s32.totalorder %s137, %s151
    %p153 = scmp.eq.s32.totalorder %s24, 0
    %p154 = por %p152, %p153
    %s156 = sadd.s32 %s155, 1
    %p159 = scmp.eq.s32.totalorder %s18, 1
    %p160 = scmp.ne.s32.totalorder %s155, %s157
    %p161 = scmp.eq.s32.totalorder %s18, 0
    %p162 = por %p160, %p161
    %p163 = scmp.ne.s32.totalorder %s155, %s157
    %p164 = scmp.eq.s32.totalorder %s23, 1
    %p165 = por %p163, %p164
    %p166 = scmp.ne.s32.totalorder %s157, %s158
    %p167 = scmp.eq.s32.totalorder %s23, 0
    %p168 = por %p166, %p167
    %p169 = scmp.ne.s32.totalorder %s157, %s158
    %p170 = scmp.eq.s32.totalorder %s24, 1
    %p171 = por %p169, %p170
    %p173 = scmp.ne.s32.totalorder %s158, %s172
    %p174 = scmp.eq.s32.totalorder %s24, 0
    %p175 = por %p173, %p174
    %s177 = sadd.s32 %s176, 1
    %p180 = scmp.eq.s32.totalorder %s18, 1
    %p181 = scmp.ne.s32.totalorder %s176, %s178
    %p182 = scmp.eq.s32.totalorder %s18, 0
    %p183 = por %p181, %p182
    %p184 = scmp.ne.s32.totalorder %s176, %s178
    %p185 = scmp.eq.s32.totalorder %s23, 1
    %p186 = por %p184, %p185
    %p187 = scmp.ne.s32.totalorder %s178, %s179
    %p188 = scmp.eq.s32.totalorder %s23, 0
    %p189 = por %p187, %p188
    %p190 = scmp.ne.s32.totalorder %s178, %s179
    %p191 = scmp.eq.s32.totalorder %s24, 1
    %p192 = por %p190, %p191
    %p194 = scmp.ne.s32.totalorder %s179, %s193
    %p195 = scmp.eq.s32.totalorder %s24, 0
    %p196 = por %p194, %p195
    %s198 = sadd.s32 %s197, 1
    %p201 = scmp.eq.s32.totalorder %s18, 1
    %p202 = scmp.ne.s32.totalorder %s197, %s199
    %p203 = scmp.eq.s32.totalorder %s18, 0
    %p204 = por %p202, %p203
    %p205 = scmp.ne.s32.totalorder %s197, %s199
    %p206 = scmp.eq.s32.totalorder %s23, 1
    %p207 = por %p205, %p206
    %p208 = scmp.ne.s32.totalorder %s199, %s200
    %p209 = scmp.eq.s32.totalorder %s23, 0
    %p210 = por %p208, %p209
    %p211 = scmp.ne.s32.totalorder %s199, %s200
    %p212 = scmp.eq.s32.totalorder %s24, 1
    %p213 = por %p211, %p212
    %p215 = scmp.ne.s32.totalorder %s200, %s214
    %p216 = scmp.eq.s32.totalorder %s24, 0
    %p217 = por %p215, %p216
    %s219 = sadd.s32 %s218, 1
    %p222 = scmp.eq.s32.totalorder %s18, 1
    %p223 = scmp.ne.s32.totalorder %s218, %s220
    %p224 = scmp.eq.s32.totalorder %s18, 0
    %p225 = por %p223, %p224
    %p226 = scmp.ne.s32.totalorder %s218, %s220
    %p227 = scmp.eq.s32.totalorder %s23, 1
    %p228 = por %p226, %p227
    %p229 = scmp.ne.s32.totalorder %s220, %s221
    %p230 = scmp.eq.s32.totalorder %s23, 0
    %p231 = por %p229, %p230
    %p232 = scmp.ne.s32.totalorder %s220, %s221
    %p233 = scmp.eq.s32.totalorder %s24, 1
    %p234 = por %p232, %p233
    %p236 = scmp.ne.s32.totalorder %s221, %s235
    %p237 = scmp.eq.s32.totalorder %s24, 0
    %p238 = por %p236, %p237
    %s240 = sadd.s32 %s239, 1
    %p243 = scmp.eq.s32.totalorder %s18, 1
    %p244 = scmp.ne.s32.totalorder %s239, %s241
    %p245 = scmp.eq.s32.totalorder %s18, 0
    %p246 = por %p244, %p245
    %p247 = scmp.ne.s32.totalorder %s239, %s241
    %p248 = scmp.eq.s32.totalorder %s23, 1
    %p249 = por %p247, %p248
    %p250 = scmp.ne.s32.totalorder %s241, %s242
    %p251 = scmp.eq.s32.totalorder %s23, 0
    %p252 = por %p250, %p251
    %p253 = scmp.ne.s32.totalorder %s241, %s242
    %p254 = scmp.eq.s32.totalorder %s24, 1
    %p255 = por %p253, %p254
    %p257 = scmp.ne.s32.totalorder %s242, %s256
    %p258 = scmp.eq.s32.totalorder %s24, 0
    %p259 = por %p257, %p258
    %s261 = sadd.s32 %s260, 1
    %p264 = scmp.eq.s32.totalorder %s18, 1
    %p265 = scmp.ne.s32.totalorder %s260, %s262
    %p266 = scmp.eq.s32.totalorder %s18, 0
    %p267 = por %p265, %p266
    %p268 = scmp.ne.s32.totalorder %s260, %s262
    %p269 = scmp.eq.s32.totalorder %s23, 1
    %p270 = por %p268, %p269
    %p271 = scmp.ne.s32.totalorder %s262, %s263
    %p272 = scmp.eq.s32.totalorder %s23, 0
    %p273 = por %p271, %p272
    %p274 = scmp.ne.s32.totalorder %s262, %s263
    %p275 = scmp.eq.s32.totalorder %s24, 1
    %p276 = por %p274, %p275
    %p278 = scmp.ne.s32.totalorder %s263, %s277
    %p279 = scmp.eq.s32.totalorder %s24, 0
    %p280 = por %p278, %p279
    %s282 = sadd.s32 %s281, 1
    %p285 = scmp.eq.s32.totalorder %s18, 1
    %p286 = scmp.ne.s32.totalorder %s281, %s283
    %p287 = scmp.eq.s32.totalorder %s18, 0
    %p288 = por %p286, %p287
    %p289 = scmp.ne.s32.totalorder %s281, %s283
    %p290 = scmp.eq.s32.totalorder %s23, 1
    %p291 = por %p289, %p290
    %p292 = scmp.ne.s32.totalorder %s283, %s284
    %p293 = scmp.eq.s32.totalorder %s23, 0
    %p294 = por %p292, %p293
    %p295 = scmp.ne.s32.totalorder %s283, %s284
    %p296 = scmp.eq.s32.totalorder %s24, 1
    %p297 = por %p295, %p296
    %p299 = scmp.ne.s32.totalorder %s284, %s298
    %p300 = scmp.eq.s32.totalorder %s24, 0
    %p301 = por %p299, %p300
    %s302 = ssub.s32 %s25, %s37
    %s303 = ssub.s32 %s26, %s33
    %s304 = sor.u32 %s302, %s303
    %p305 = scmp.eq.s32.totalorder %s304, 0
    %s307 = sadd.s32 %s306, 1
    %s308 = scalar_select %p305, %s306, %s307
    %p311 = pneg %p305
    %p312 = scmp.eq.s32.totalorder %s18, 1
    %p313 = por %p311, %p312
    %p314 = scmp.ne.s32.totalorder %s306, %s309
    %p315 = scmp.eq.s32.totalorder %s18, 0
    %p316 = por %p314, %p315
    %p317 = scmp.ne.s32.totalorder %s306, %s309
    %p318 = scmp.eq.s32.totalorder %s23, 1
    %p319 = por %p317, %p318
    %p320 = scmp.ne.s32.totalorder %s309, %s310
    %p321 = scmp.eq.s32.totalorder %s23, 0
    %p322 = por %p320, %p321
    %p323 = scmp.ne.s32.totalorder %s309, %s310
    %p324 = scmp.eq.s32.totalorder %s24, 1
    %p325 = por %p323, %p324
    %p327 = scmp.ne.s32.totalorder %s310, %s326
    %p328 = scmp.eq.s32.totalorder %s24, 0
    %p329 = por %p327, %p328
    %p330 = scmp.le.s32.totalorder 1, %s18
    %p331 = scmp.lt.s32.totalorder %s18, 3
    %p332 = pnand %p330, %p331
    %p333 = pneg %p332
    // Predicated region
    $region9: #{vanilla_transformer_forward.15} parent=5 // pred_check
      _
    $region10: #{vanilla_transformer_forward.15} parent=5 // pred_check_branch
      %335 = sbr.rel (%p332) target = $region12
    $region11: #{vanilla_transformer_forward.15} parent=5 // pred_region
      %s336 = ssub.s32 %s18, 1
      // Predicated region
      $region13: #{vanilla_transformer_forward.15} parent=11 // pred_check
        %p337 = pneg %p105
      $region14: #{vanilla_transformer_forward.15} parent=11 // pred_check_branch
        %339 = sbr.rel (%p337) target = $region16
      $region15: #{vanilla_transformer_forward.15} parent=11 // pred_region
        _
      $region16: #{vanilla_transformer_forward.15} parent=11 // pred_fallthru
        _
      // Predicated region
      $region17: #{vanilla_transformer_forward.15} parent=11 // pred_check
        %p340 = pneg %p126
      $region18: #{vanilla_transformer_forward.15} parent=11 // pred_check_branch
        %342 = sbr.rel (%p340) target = $region20
      $region19: #{vanilla_transformer_forward.15} parent=11 // pred_region
        _
      $region20: #{vanilla_transformer_forward.15} parent=11 // pred_fallthru
        _
      // Predicated region
      $region21: #{vanilla_transformer_forward.15} parent=11 // pred_check
        %p343 = pneg %p147
      $region22: #{vanilla_transformer_forward.15} parent=11 // pred_check_branch
        %345 = sbr.rel (%p343) target = $region24
      $region23: #{vanilla_transformer_forward.15} parent=11 // pred_region
        _
      $region24: #{vanilla_transformer_forward.15} parent=11 // pred_fallthru
        _
      // Predicated region
      $region25: #{vanilla_transformer_forward.15} parent=11 // pred_check
        %p346 = pneg %p168
      $region26: #{vanilla_transformer_forward.15} parent=11 // pred_check_branch
        %348 = sbr.rel (%p346) target = $region28
      $region27: #{vanilla_transformer_forward.15} parent=11 // pred_region
        _
      $region28: #{vanilla_transformer_forward.15} parent=11 // pred_fallthru
        _
      // Predicated region
      $region29: #{vanilla_transformer_forward.15} parent=11 // pred_check
        %p349 = pneg %p189
      $region30: #{vanilla_transformer_forward.15} parent=11 // pred_check_branch
        %351 = sbr.rel (%p349) target = $region32
      $region31: #{vanilla_transformer_forward.15} parent=11 // pred_region
        _
      $region32: #{vanilla_transformer_forward.15} parent=11 // pred_fallthru
        _
      // Predicated region
      $region33: #{vanilla_transformer_forward.15} parent=11 // pred_check
        %p352 = pneg %p210
      $region34: #{vanilla_transformer_forward.15} parent=11 // pred_check_branch
        %354 = sbr.rel (%p352) target = $region36
      $region35: #{vanilla_transformer_forward.15} parent=11 // pred_region
        _
      $region36: #{vanilla_transformer_forward.15} parent=11 // pred_fallthru
        _
      // Predicated region
      $region37: #{vanilla_transformer_forward.15} parent=11 // pred_check
        %p355 = pneg %p231
      $region38: #{vanilla_transformer_forward.15} parent=11 // pred_check_branch
        %357 = sbr.rel (%p355) target = $region40
      $region39: #{vanilla_transformer_forward.15} parent=11 // pred_region
        _
      $region40: #{vanilla_transformer_forward.15} parent=11 // pred_fallthru
        _
      // Predicated region
      $region41: #{vanilla_transformer_forward.15} parent=11 // pred_check
        %p358 = pneg %p252
      $region42: #{vanilla_transformer_forward.15} parent=11 // pred_check_branch
        %360 = sbr.rel (%p358) target = $region44
      $region43: #{vanilla_transformer_forward.15} parent=11 // pred_region
        _
      $region44: #{vanilla_transformer_forward.15} parent=11 // pred_fallthru
        _
      // Predicated region
      $region45: #{vanilla_transformer_forward.15} parent=11 // pred_check
        %p361 = pneg %p273
      $region46: #{vanilla_transformer_forward.15} parent=11 // pred_check_branch
        %363 = sbr.rel (%p361) target = $region48
      $region47: #{vanilla_transformer_forward.15} parent=11 // pred_region
        _
      $region48: #{vanilla_transformer_forward.15} parent=11 // pred_fallthru
        _
      // Predicated region
      $region49: #{vanilla_transformer_forward.15} parent=11 // pred_check
        %p364 = pneg %p294
      $region50: #{vanilla_transformer_forward.15} parent=11 // pred_check_branch
        %366 = sbr.rel (%p364) target = $region52
      $region51: #{vanilla_transformer_forward.15} parent=11 // pred_region
        _
      $region52: #{vanilla_transformer_forward.15} parent=11 // pred_fallthru
        _
    $region12: #{vanilla_transformer_forward.15} parent=5 // pred_fallthru
      _
    %p367 = scmp.lt.s32.totalorder %s18, 2
    // Predicated region
    $region53: #{vanilla_transformer_forward.15} parent=5 // pred_check
      %p368 = pneg %p367
    $region54: #{vanilla_transformer_forward.15} parent=5 // pred_check_branch
      %370 = sbr.rel (%p368) target = $region56
    $region55: #{vanilla_transformer_forward.15} parent=5 // pred_region
      // Predicated region
      $region57: #{vanilla_transformer_forward.15} parent=55 // pred_check
        %p371 = pneg %p52
      $region58: #{vanilla_transformer_forward.15} parent=55 // pred_check_branch
        %373 = sbr.rel (%p371) target = $region60
      $region59: #{vanilla_transformer_forward.15} parent=55 // pred_region
        %p374 = scmp.lt.s32.totalorder %s25, 1
        %s375 = scalar_select %p374, %s25, 1
        %p376 = scmp.lt.s32.totalorder %s26, 0
        %s377 = scalar_select %p376, %s26, 0
        %s378 = sadd.s32 %s377, %s375
        %s379 = smul.addr %s378, 4
        %s380 = scalar_lea.vmem %s0, %s379
      $region60: #{vanilla_transformer_forward.15} parent=55 // pred_fallthru
        _
      // Predicated region
      $region61: #{vanilla_transformer_forward.15} parent=55 // pred_check
        %p381 = pneg %p78
      $region62: #{vanilla_transformer_forward.15} parent=55 // pred_check_branch
        %383 = sbr.rel (%p381) target = $region64
      $region63: #{vanilla_transformer_forward.15} parent=55 // pred_region
        %p384 = scmp.lt.s32.totalorder %s25, 1
        %s385 = scalar_select %p384, %s25, 1
        %s386 = smul.addr %s385, 4
        %s387 = scalar_lea.vmem %s1, %s386
      $region64: #{vanilla_transformer_forward.15} parent=55 // pred_fallthru
        _
    $region56: #{vanilla_transformer_forward.15} parent=5 // pred_fallthru
      _
    %p388 = scmp.le.s32.totalorder 1, %s18
    %p389 = scmp.lt.s32.totalorder %s18, 3
    %p390 = pnand %p388, %p389
    %p391 = pneg %p390
    // Predicated region
    $region65: #{vanilla_transformer_forward.15} parent=5 // pred_check
      _
    $region66: #{vanilla_transformer_forward.15} parent=5 // pred_check_branch
      %393 = sbr.rel (%p390) target = $region68
    $region67: #{vanilla_transformer_forward.15} parent=5 // pred_region
      %s394 = ssub.s32 %s18, 1
      %p395 = scmp.lt.s32.totalorder %s27, 1
      %s396 = scalar_select %p395, %s27, 1
      %p397 = scmp.lt.s32.totalorder %s28, 0
      %s398 = scalar_select %p397, %s28, 0
      %s399 = sadd.s32 %s398, %s396
      %s400 = smul.addr %s399, 4
      %s401 = scalar_lea.vmem %s0, %s400
      %p402 = pneg %p58
      %p403 = pneg %p55
      %p404 = scmp.lt.s32.totalorder %s27, 1
      %s405 = scalar_select %p404, %s27, 1
      %s406 = smul.addr %s405, 4
      %s407 = scalar_lea.vmem %s1, %s406
      %p408 = pneg %p84
      %p409 = pneg %p81
      %p410 = pneg %p105
      %p411 = pneg %p102
      %p412 = pneg %p126
      %p413 = pneg %p123
      %p414 = pneg %p147
      %p415 = pneg %p144
      %p416 = pneg %p168
      %p417 = pneg %p165
      %p418 = pneg %p189
      %p419 = pneg %p186
      %p420 = pneg %p210
      %p421 = pneg %p207
      %p422 = pneg %p231
      %p423 = pneg %p228
      %p424 = pneg %p252
      %p425 = pneg %p249
      %p426 = pneg %p273
      %p427 = pneg %p270
      %p428 = pneg %p294
      %p429 = pneg %p291
      %p430 = pneg %p322
      %p431 = pneg %p319
      %p432 = scmp.lt.s32.totalorder %s27, 1
      %s433 = scalar_select %p432, %s27, 1
      %p434 = scmp.lt.s32.totalorder %s28, 0
      %s435 = scalar_select %p434, %s28, 0
      %s436 = sadd.s32 %s435, %s433
      %s437 = smul.addr %s436, 4
      %s438 = scalar_lea.vmem %s12, %s437
      %p439 = scmp.lt.s32.totalorder %s27, 1
      %s440 = scalar_select %p439, %s27, 1
      %p441 = scmp.lt.s32.totalorder %s28, 0
      %s442 = scalar_select %p441, %s28, 0
      %s443 = sadd.s32 %s442, %s440
      %s444 = smul.addr %s443, 4
      %s445 = scalar_lea.vmem %s0, %s444
      %p446 = scmp.lt.s32.totalorder %s27, 1
      %s447 = scalar_select %p446, %s27, 1
      %s448 = smul.addr %s447, 4
      %s449 = scalar_lea.vmem %s1, %s448
      %p450 = scmp.lt.s32.totalorder %s27, 1
      %s451 = scalar_select %p450, %s27, 1
      %p452 = scmp.lt.s32.totalorder %s28, 0
      %s453 = scalar_select %p452, %s28, 0
      %s454 = sadd.s32 %s453, %s451
      %s455 = smul.addr %s454, 4
      %s456 = scalar_lea.vmem %s12, %s455
      %p458 = scmp.eq.s32.totalorder %s28, 0
      // Predicated region
      $region69: #{vanilla_transformer_forward.15} parent=67 // pred_check
        %p459 = pneg %p458
      $region70: #{vanilla_transformer_forward.15} parent=67 // pred_check_branch
        %461 = sbr.rel (%p459) target = $region72
      $region71: #{vanilla_transformer_forward.15} parent=67 // pred_region
        %v462 = vld [vmem:[%s449] sm:$0xf]
        %v463 = vld [vmem:[%s3] sm:$0xf]
        %v464 = vld [vmem:[%s3 + $0x4] sm:$0xf]
        %v465 = vld [vmem:[%s3 + $0x8] sm:$0xf]
        %v466 = vld [vmem:[%s3 + $0xc] sm:$0xf]
        %v467 = vld [vmem:[%s7] sm:$0x1]
        %v469 = vlaneseq
        %v470 = vshrl.u32 %v469, 7
        %v471 = vsub.s32 0, %v470
        %v472 = vrot.slane %v467, %v471
        %v478 = vunpack.c.l.b16 %v463
        %v479 = vunpack.c.l.b16 %v464
        %v480 = vunpack.c.l.b16 %v465
        %v481 = vunpack.c.l.b16 %v466
        %v482 = vpack.c.b16 %v479, %v478
        %v483 = vpack.c.b16 %v481, %v480
        %vm486 = vcmask 261120
        %v488 = vsel %vm486, %v462, 0
        %490 = vmatprep.subr.bf16.mxu0 0
        %491 = vmatpush1.bf16.msra.mxu0 %v482
        %492 = vmatprep.subr.bf16.mxu0 0
        %493 = vmatpush1.bf16.msra.mxu0 %v483
        %494 = vmatprep.subr.bf16.mxu0 0
        %495 = vmatpush1.bf16.msra.mxu0 0
        %496 = vmatprep.subr.bf16.mxu0 0
        %497 = vmatpush1.bf16.msra.mxu0 0
        %498 = vmatprep.subr.bf16.mxu0 0
        %499 = vmatpush1.bf16.msra.mxu0 0
        %500 = vmatprep.subr.bf16.mxu0 0
        %501 = vmatpush1.bf16.msra.mxu0 0
        %502 = vmatprep.subr.bf16.mxu0 0
        %503 = vmatpush1.bf16.msra.mxu0 0
        %504 = vmatprep.subr.bf16.mxu0 0
        %505 = vmatpush1.bf16.msra.mxu0 0
        %506 = vmatprep.subr.bf16.mxu0 0
        %507 = vmatpush1.bf16.msra.mxu0 0
        %508 = vmatprep.subr.bf16.mxu0 0
        %509 = vmatpush1.bf16.msra.mxu0 0
        %510 = vmatprep.subr.bf16.mxu0 0
        %511 = vmatpush1.bf16.msra.mxu0 0
        %512 = vmatprep.subr.bf16.mxu0 0
        %513 = vmatpush1.bf16.msra.mxu0 0
        %514 = vmatprep.subr.bf16.mxu0 0
        %515 = vmatpush1.bf16.msra.mxu0 0
        %516 = vmatprep.subr.bf16.mxu0 0
        %517 = vmatpush1.bf16.msra.mxu0 0
        %518 = vmatprep.subr.bf16.mxu0 0
        %519 = vmatpush1.bf16.msra.mxu0 0
        %520 = vmatprep.subr.bf16.mxu0 0
        %521 = vmatpush1.bf16.msra.mxu0 0
        %522 = vmatprep.mubr.bf16.mxu0 0
        %523 = vmatmul.mubr.bf16.gmra.mrb[0].mxu0 %v488
        %v524 = vpop.f32.mrb[0].mxu0
        %v525 = vadd.f32 %v472, %v524
        %v526 = vpop.f32.mrb[0].mxu0
        %v527 = vpop.f32.mrb[0].mxu0
        %v528 = vpop.f32.mrb[0].mxu0
        %529 = vdwg.mxu0
        %v530 = vld [vmem:[%s4] sm:$0xf]
        %v531 = vld [vmem:[%s4 + $0x4] sm:$0xf]
        %v532 = vld [vmem:[%s4 + $0x8] sm:$0xf]
        %v533 = vld [vmem:[%s4 + $0xc] sm:$0xf]
        %v534 = vld [vmem:[%s8] sm:$0x1]
        %v536 = vlaneseq
        %v537 = vshrl.u32 %v536, 7
        %v538 = vsub.s32 0, %v537
        %v539 = vrot.slane %v534, %v538
        %v545 = vunpack.c.l.b16 %v530
        %v546 = vunpack.c.l.b16 %v531
        %v547 = vunpack.c.l.b16 %v532
        %v548 = vunpack.c.l.b16 %v533
        %v549 = vpack.c.b16 %v546, %v545
        %v550 = vpack.c.b16 %v548, %v547
        %553 = vmatprep.subr.bf16.mxu0 0
        %554 = vmatpush1.bf16.msra.mxu0 %v549
        %555 = vmatprep.subr.bf16.mxu0 0
        %556 = vmatpush1.bf16.msra.mxu0 %v550
        %557 = vmatprep.subr.bf16.mxu0 0
        %558 = vmatpush1.bf16.msra.mxu0 0
        %559 = vmatprep.subr.bf16.mxu0 0
        %560 = vmatpush1.bf16.msra.mxu0 0
        %561 = vmatprep.subr.bf16.mxu0 0
        %562 = vmatpush1.bf16.msra.mxu0 0
        %563 = vmatprep.subr.bf16.mxu0 0
        %564 = vmatpush1.bf16.msra.mxu0 0
        %565 = vmatprep.subr.bf16.mxu0 0
        %566 = vmatpush1.bf16.msra.mxu0 0
        %567 = vmatprep.subr.bf16.mxu0 0
        %568 = vmatpush1.bf16.msra.mxu0 0
        %569 = vmatprep.subr.bf16.mxu0 0
        %570 = vmatpush1.bf16.msra.mxu0 0
        %571 = vmatprep.subr.bf16.mxu0 0
        %572 = vmatpush1.bf16.msra.mxu0 0
        %573 = vmatprep.subr.bf16.mxu0 0
        %574 = vmatpush1.bf16.msra.mxu0 0
        %575 = vmatprep.subr.bf16.mxu0 0
        %576 = vmatpush1.bf16.msra.mxu0 0
        %577 = vmatprep.subr.bf16.mxu0 0
        %578 = vmatpush1.bf16.msra.mxu0 0
        %579 = vmatprep.subr.bf16.mxu0 0
        %580 = vmatpush1.bf16.msra.mxu0 0
        %581 = vmatprep.subr.bf16.mxu0 0
        %582 = vmatpush1.bf16.msra.mxu0 0
        %583 = vmatprep.subr.bf16.mxu0 0
        %584 = vmatpush1.bf16.msra.mxu0 0
        %585 = vmatprep.mubr.bf16.mxu0 0
        %586 = vmatmul.mubr.bf16.gmra.mrb[0].mxu0 %v488
        %v587 = vpop.f32.mrb[0].mxu0
        %v588 = vadd.f32 %v539, %v587
        %v589 = vpop.f32.mrb[0].mxu0
        %v590 = vpop.f32.mrb[0].mxu0
        %v591 = vpop.f32.mrb[0].mxu0
        %592 = vdwg.mxu0
        %v593 = vpack.c.bf16 %v525, %v525
        %vm594 = vcmask 257024
        %595 = vst.msk [vmem:[#allocation2] sm:$0xf] %vm594, %v593
        %v596 = vpack.c.bf16 %v588, %v588
        %597 = vst.msk [vmem:[#allocation3] sm:$0xf] %vm594, %v596
      $region72: #{vanilla_transformer_forward.15} parent=67 // pred_fallthru
        _
      %v598 = vld [vmem:[%s445] sm:$0xf]
      %v599 = vld [vmem:[%s2] sm:$0xf]
      %v600 = vld [vmem:[%s2 + $0x4] sm:$0xf]
      %v601 = vld [vmem:[%s2 + $0x8] sm:$0xf]
      %v602 = vld [vmem:[%s2 + $0xc] sm:$0xf]
      %v603 = vld [vmem:[%s6] sm:$0x1]
      %v605 = vlaneseq
      %v606 = vshrl.u32 %v605, 7
      %v607 = vsub.s32 0, %v606
      %v608 = vrot.slane %v603, %v607
      %v614 = vunpack.c.l.b16 %v599
      %v615 = vunpack.c.l.b16 %v600
      %v616 = vunpack.c.l.b16 %v601
      %v617 = vunpack.c.l.b16 %v602
      %v618 = vpack.c.b16 %v615, %v614
      %v619 = vpack.c.b16 %v617, %v616
      %vm622 = vcmask 261120
      %v624 = vsel %vm622, %v598, 0
      %626 = vmatprep.subr.bf16.mxu0 0
      %627 = vmatpush1.bf16.msra.mxu0 %v618
      %628 = vmatprep.subr.bf16.mxu0 0
      %629 = vmatpush1.bf16.msra.mxu0 %v619
      %630 = vmatprep.subr.bf16.mxu0 0
      %631 = vmatpush1.bf16.msra.mxu0 0
      %632 = vmatprep.subr.bf16.mxu0 0
      %633 = vmatpush1.bf16.msra.mxu0 0
      %634 = vmatprep.subr.bf16.mxu0 0
      %635 = vmatpush1.bf16.msra.mxu0 0
      %636 = vmatprep.subr.bf16.mxu0 0
      %637 = vmatpush1.bf16.msra.mxu0 0
      %638 = vmatprep.subr.bf16.mxu0 0
      %639 = vmatpush1.bf16.msra.mxu0 0
      %640 = vmatprep.subr.bf16.mxu0 0
      %641 = vmatpush1.bf16.msra.mxu0 0
      %642 = vmatprep.subr.bf16.mxu0 0
      %643 = vmatpush1.bf16.msra.mxu0 0
      %644 = vmatprep.subr.bf16.mxu0 0
      %645 = vmatpush1.bf16.msra.mxu0 0
      %646 = vmatprep.subr.bf16.mxu0 0
      %647 = vmatpush1.bf16.msra.mxu0 0
      %648 = vmatprep.subr.bf16.mxu0 0
      %649 = vmatpush1.bf16.msra.mxu0 0
      %650 = vmatprep.subr.bf16.mxu0 0
      %651 = vmatpush1.bf16.msra.mxu0 0
      %652 = vmatprep.subr.bf16.mxu0 0
      %653 = vmatpush1.bf16.msra.mxu0 0
      %654 = vmatprep.subr.bf16.mxu0 0
      %655 = vmatpush1.bf16.msra.mxu0 0
      %656 = vmatprep.subr.bf16.mxu0 0
      %657 = vmatpush1.bf16.msra.mxu0 0
      %658 = vmatprep.mubr.bf16.mxu0 0
      %659 = vmatmul.mubr.bf16.gmra.mrb[0].mxu0 %v624
      %v660 = vpop.f32.mrb[0].mxu0
      %v661 = vadd.f32 %v608, %v660
      %v662 = vpop.f32.mrb[0].mxu0
      %v663 = vpop.f32.mrb[0].mxu0
      %v664 = vpop.f32.mrb[0].mxu0
      %665 = vdwg.mxu0
      %v666 = vmul.f32 %v661, 0.35355338
      %v667 = vpack.c.bf16 %v666, %v666
      %v668 = vld [vmem:[#allocation2] sm:$0xf]
      %v669 = vld [vmem:[#allocation3] sm:$0xf]
      %v670 = vlaneseq
      %v671 = vshrl.u32 %v670, 7
      %s672 = smul.u32 %s28, 8
      %v673 = vstv %s672
      %v674 = vadd.s32 %v671, %v673
      %v675 = vlaneseq
      %v676 = vand.u32 %v675, 127
      %vm677 = vcmask 64512
      %v679 = vsel %vm677, %v667, 0
      %v682 = vsel %vm677, %v668, 0
      %684 = vmatprep.subr.bf16.mxu0 0
      %685 = vmatpush1.bf16.xpose.msra.mxu0 %v682
      %686 = vmatprep.subr.bf16.mxu0 0
      %687 = vmatpush1.bf16.xpose.msra.mxu0 0
      %688 = vmatprep.subr.bf16.mxu0 0
      %689 = vmatpush1.bf16.xpose.msra.mxu0 0
      %690 = vmatprep.subr.bf16.mxu0 0
      %691 = vmatpush1.bf16.xpose.msra.mxu0 0
      %692 = vmatprep.subr.bf16.mxu0 0
      %693 = vmatpush1.bf16.xpose.msra.mxu0 0
      %694 = vmatprep.subr.bf16.mxu0 0
      %695 = vmatpush1.bf16.xpose.msra.mxu0 0
      %696 = vmatprep.subr.bf16.mxu0 0
      %697 = vmatpush1.bf16.xpose.msra.mxu0 0
      %698 = vmatprep.subr.bf16.mxu0 0
      %699 = vmatpush1.bf16.xpose.msra.mxu0 0
      %700 = vmatprep.subr.bf16.mxu0 0
      %701 = vmatpush1.bf16.xpose.msra.mxu0 0
      %702 = vmatprep.subr.bf16.mxu0 0
      %703 = vmatpush1.bf16.xpose.msra.mxu0 0
      %704 = vmatprep.subr.bf16.mxu0 0
      %705 = vmatpush1.bf16.xpose.msra.mxu0 0
      %706 = vmatprep.subr.bf16.mxu0 0
      %707 = vmatpush1.bf16.xpose.msra.mxu0 0
      %708 = vmatprep.subr.bf16.mxu0 0
      %709 = vmatpush1.bf16.xpose.msra.mxu0 0
      %710 = vmatprep.subr.bf16.mxu0 0
      %711 = vmatpush1.bf16.xpose.msra.mxu0 0
      %712 = vmatprep.subr.bf16.mxu0 0
      %713 = vmatpush1.bf16.xpose.msra.mxu0 0
      %714 = vmatprep.subr.bf16.mxu0 0
      %715 = vmatpush1.bf16.xpose.msra.mxu0 0
      %716 = vmatprep.mubr.bf16.mxu0 0
      %717 = vmatmul.mubr.bf16.gmra.mrb[0].mxu0 %v679
      %v718 = vpop.f32.mrb[0].mxu0
      %v719 = vadd.f32 0.0, %v718
      %v720 = vpop.f32.mrb[0].mxu0
      %v721 = vpop.f32.mrb[0].mxu0
      %v722 = vpop.f32.mrb[0].mxu0
      %723 = vdwg.mxu0
      %vm724 = vcmp.gt.s32.totalorder %v676, %v674
      %v725 = vsel %vm724, -1e+30, %v719
      %v726 = vsel %vm677, %v725, -inf
      %727 = vmax.xlane.f32.xlu0 %v726
      %v728 = vpop.xlane.xlu0 %727
      %v729 = vsub.f32 %v725, %v728
      %v730 = vmul.f32 %v729, 1.442695
      %v731 = vpow.pop %v730
      %v732 = vsel %vm677, %v731, 0.0
      %733 = vadd.xlane.f32.xlu0 %v732
      %v734 = vpop.xlane.xlu0 %733
      %v735 = vrcp.pop %v734
      %v736 = vmul.f32 %v731, %v735
      %v737 = vpack.c.bf16 %v736, %v736
      %v739 = vsel %vm677, %v737, 0
      %vm741 = vcmask 1043456
      %v743 = vsel %vm741, %v669, 0
      %745 = vmatprep.subr.bf16.mxu0 0
      %746 = vmatpush1.bf16.msra.mxu0 %v743
      %747 = vmatprep.subr.bf16.mxu0 0
      %748 = vmatpush1.bf16.msra.mxu0 0
      %749 = vmatprep.subr.bf16.mxu0 0
      %750 = vmatpush1.bf16.msra.mxu0 0
      %751 = vmatprep.subr.bf16.mxu0 0
      %752 = vmatpush1.bf16.msra.mxu0 0
      %753 = vmatprep.subr.bf16.mxu0 0
      %754 = vmatpush1.bf16.msra.mxu0 0
      %755 = vmatprep.subr.bf16.mxu0 0
      %756 = vmatpush1.bf16.msra.mxu0 0
      %757 = vmatprep.subr.bf16.mxu0 0
      %758 = vmatpush1.bf16.msra.mxu0 0
      %759 = vmatprep.subr.bf16.mxu0 0
      %760 = vmatpush1.bf16.msra.mxu0 0
      %761 = vmatprep.subr.bf16.mxu0 0
      %762 = vmatpush1.bf16.msra.mxu0 0
      %763 = vmatprep.subr.bf16.mxu0 0
      %764 = vmatpush1.bf16.msra.mxu0 0
      %765 = vmatprep.subr.bf16.mxu0 0
      %766 = vmatpush1.bf16.msra.mxu0 0
      %767 = vmatprep.subr.bf16.mxu0 0
      %768 = vmatpush1.bf16.msra.mxu0 0
      %769 = vmatprep.subr.bf16.mxu0 0
      %770 = vmatpush1.bf16.msra.mxu0 0
      %771 = vmatprep.subr.bf16.mxu0 0
      %772 = vmatpush1.bf16.msra.mxu0 0
      %773 = vmatprep.subr.bf16.mxu0 0
      %774 = vmatpush1.bf16.msra.mxu0 0
      %775 = vmatprep.subr.bf16.mxu0 0
      %776 = vmatpush1.bf16.msra.mxu0 0
      %777 = vmatprep.mubr.bf16.mxu0 0
      %778 = vmatmul.mubr.bf16.gmra.mrb[0].mxu0 %v739
      %v779 = vpop.f32.mrb[0].mxu0
      %v780 = vadd.f32 0.0, %v779
      %v781 = vpop.f32.mrb[0].mxu0
      %v782 = vpop.f32.mrb[0].mxu0
      %v783 = vpop.f32.mrb[0].mxu0
      %784 = vdwg.mxu0
      %785 = vst.msk [vmem:[#allocation4] sm:$0xff] %vm677, %v780
      %787 = vrot.lane.b32.xlu0 %v667, 120
      %v788 = vpop.permute.xlu0 %787
      %v790 = vunpack.c.l.b16 %v668
      %v791 = vpack.c.b16 %v790, %v790
      %792 = vrot.lane.b32.xlu0 %v791, 120
      %v793 = vpop.permute.xlu0 %792
      %v795 = vsel %vm677, %v788, 0
      %v798 = vsel %vm677, %v793, 0
      %800 = vmatprep.subr.bf16.mxu0 0
      %801 = vmatpush1.bf16.xpose.msra.mxu0 %v798
      %802 = vmatprep.subr.bf16.mxu0 0
      %803 = vmatpush1.bf16.xpose.msra.mxu0 0
      %804 = vmatprep.subr.bf16.mxu0 0
      %805 = vmatpush1.bf16.xpose.msra.mxu0 0
      %806 = vmatprep.subr.bf16.mxu0 0
      %807 = vmatpush1.bf16.xpose.msra.mxu0 0
      %808 = vmatprep.subr.bf16.mxu0 0
      %809 = vmatpush1.bf16.xpose.msra.mxu0 0
      %810 = vmatprep.subr.bf16.mxu0 0
      %811 = vmatpush1.bf16.xpose.msra.mxu0 0
      %812 = vmatprep.subr.bf16.mxu0 0
      %813 = vmatpush1.bf16.xpose.msra.mxu0 0
      %814 = vmatprep.subr.bf16.mxu0 0
      %815 = vmatpush1.bf16.xpose.msra.mxu0 0
      %816 = vmatprep.subr.bf16.mxu0 0
      %817 = vmatpush1.bf16.xpose.msra.mxu0 0
      %818 = vmatprep.subr.bf16.mxu0 0
      %819 = vmatpush1.bf16.xpose.msra.mxu0 0
      %820 = vmatprep.subr.bf16.mxu0 0
      %821 = vmatpush1.bf16.xpose.msra.mxu0 0
      %822 = vmatprep.subr.bf16.mxu0 0
      %823 = vmatpush1.bf16.xpose.msra.mxu0 0
      %824 = vmatprep.subr.bf16.mxu0 0
      %825 = vmatpush1.bf16.xpose.msra.mxu0 0
      %826 = vmatprep.subr.bf16.mxu0 0
      %827 = vmatpush1.bf16.xpose.msra.mxu0 0
      %828 = vmatprep.subr.bf16.mxu0 0
      %829 = vmatpush1.bf16.xpose.msra.mxu0 0
      %830 = vmatprep.subr.bf16.mxu0 0
      %831 = vmatpush1.bf16.xpose.msra.mxu0 0
      %832 = vmatprep.mubr.bf16.mxu0 0
      %833 = vmatmul.mubr.bf16.gmra.mrb[0].mxu0 %v795
      %v834 = vpop.f32.mrb[0].mxu0
      %v835 = vadd.f32 0.0, %v834
      %v836 = vpop.f32.mrb[0].mxu0
      %v837 = vpop.f32.mrb[0].mxu0
      %v838 = vpop.f32.mrb[0].mxu0
      %839 = vdwg.mxu0
      %v840 = vsel %vm724, -1e+30, %v835
      %v841 = vsel %vm677, %v840, -inf
      %842 = vmax.xlane.f32.xlu0 %v841
      %v843 = vpop.xlane.xlu0 %842
      %v844 = vsub.f32 %v840, %v843
      %v845 = vmul.f32 %v844, 1.442695
      %v846 = vpow.pop %v845
      %v847 = vsel %vm677, %v846, 0.0
      %848 = vadd.xlane.f32.xlu0 %v847
      %v849 = vpop.xlane.xlu0 %848
      %v850 = vrcp.pop %v849
      %v851 = vmul.f32 %v846, %v850
      %v852 = vpack.c.bf16 %v851, %v851
      %v854 = vunpack.c.l.b16 %v669
      %v855 = vpack.c.b16 %v854, %v854
      %856 = vrot.lane.b32.xlu0 %v855, 120
      %v857 = vpop.permute.xlu0 %856
      %v859 = vsel %vm677, %v852, 0
      %v862 = vsel %vm741, %v857, 0
      %864 = vmatprep.subr.bf16.mxu0 0
      %865 = vmatpush1.bf16.msra.mxu0 %v862
      %866 = vmatprep.subr.bf16.mxu0 0
      %867 = vmatpush1.bf16.msra.mxu0 0
      %868 = vmatprep.subr.bf16.mxu0 0
      %869 = vmatpush1.bf16.msra.mxu0 0
      %870 = vmatprep.subr.bf16.mxu0 0
      %871 = vmatpush1.bf16.msra.mxu0 0
      %872 = vmatprep.subr.bf16.mxu0 0
      %873 = vmatpush1.bf16.msra.mxu0 0
      %874 = vmatprep.subr.bf16.mxu0 0
      %875 = vmatpush1.bf16.msra.mxu0 0
      %876 = vmatprep.subr.bf16.mxu0 0
      %877 = vmatpush1.bf16.msra.mxu0 0
      %878 = vmatprep.subr.bf16.mxu0 0
      %879 = vmatpush1.bf16.msra.mxu0 0
      %880 = vmatprep.subr.bf16.mxu0 0
      %881 = vmatpush1.bf16.msra.mxu0 0
      %882 = vmatprep.subr.bf16.mxu0 0
      %883 = vmatpush1.bf16.msra.mxu0 0
      %884 = vmatprep.subr.bf16.mxu0 0
      %885 = vmatpush1.bf16.msra.mxu0 0
      %886 = vmatprep.subr.bf16.mxu0 0
      %887 = vmatpush1.bf16.msra.mxu0 0
      %888 = vmatprep.subr.bf16.mxu0 0
      %889 = vmatpush1.bf16.msra.mxu0 0
      %890 = vmatprep.subr.bf16.mxu0 0
      %891 = vmatpush1.bf16.msra.mxu0 0
      %892 = vmatprep.subr.bf16.mxu0 0
      %893 = vmatpush1.bf16.msra.mxu0 0
      %894 = vmatprep.subr.bf16.mxu0 0
      %895 = vmatpush1.bf16.msra.mxu0 0
      %896 = vmatprep.mubr.bf16.mxu0 0
      %897 = vmatmul.mubr.bf16.gmra.mrb[0].mxu0 %v859
      %v898 = vpop.f32.mrb[0].mxu0
      %v899 = vadd.f32 0.0, %v898
      %v900 = vpop.f32.mrb[0].mxu0
      %v901 = vpop.f32.mrb[0].mxu0
      %v902 = vpop.f32.mrb[0].mxu0
      %903 = vdwg.mxu0
      %905 = vrot.lane.b32.xlu0 %v899, 8
      %v906 = vpop.permute.xlu0 %905
      %vm908 = vcmask 130112
      %909 = vst.msk [vmem:[#allocation4] sm:$0xff] %vm908, %v906
      %910 = vrot.lane.b32.xlu0 %v667, 112
      %v911 = vpop.permute.xlu0 %910
      %912 = vrot.lane.b32.xlu0 %v791, 112
      %v913 = vpop.permute.xlu0 %912
      %v915 = vsel %vm677, %v911, 0
      %v918 = vsel %vm677, %v913, 0
      %920 = vmatprep.subr.bf16.mxu0 0
      %921 = vmatpush1.bf16.xpose.msra.mxu0 %v918
      %922 = vmatprep.subr.bf16.mxu0 0
      %923 = vmatpush1.bf16.xpose.msra.mxu0 0
      %924 = vmatprep.subr.bf16.mxu0 0
      %925 = vmatpush1.bf16.xpose.msra.mxu0 0
      %926 = vmatprep.subr.bf16.mxu0 0
      %927 = vmatpush1.bf16.xpose.msra.mxu0 0
      %928 = vmatprep.subr.bf16.mxu0 0
      %929 = vmatpush1.bf16.xpose.msra.mxu0 0
      %930 = vmatprep.subr.bf16.mxu0 0
      %931 = vmatpush1.bf16.xpose.msra.mxu0 0
      %932 = vmatprep.subr.bf16.mxu0 0
      %933 = vmatpush1.bf16.xpose.msra.mxu0 0
      %934 = vmatprep.subr.bf16.mxu0 0
      %935 = vmatpush1.bf16.xpose.msra.mxu0 0
      %936 = vmatprep.subr.bf16.mxu0 0
      %937 = vmatpush1.bf16.xpose.msra.mxu0 0
      %938 = vmatprep.subr.bf16.mxu0 0
      %939 = vmatpush1.bf16.xpose.msra.mxu0 0
      %940 = vmatprep.subr.bf16.mxu0 0
      %941 = vmatpush1.bf16.xpose.msra.mxu0 0
      %942 = vmatprep.subr.bf16.mxu0 0
      %943 = vmatpush1.bf16.xpose.msra.mxu0 0
      %944 = vmatprep.subr.bf16.mxu0 0
      %945 = vmatpush1.bf16.xpose.msra.mxu0 0
      %946 = vmatprep.subr.bf16.mxu0 0
      %947 = vmatpush1.bf16.xpose.msra.mxu0 0
      %948 = vmatprep.subr.bf16.mxu0 0
      %949 = vmatpush1.bf16.xpose.msra.mxu0 0
      %950 = vmatprep.subr.bf16.mxu0 0
      %951 = vmatpush1.bf16.xpose.msra.mxu0 0
      %952 = vmatprep.mubr.bf16.mxu0 0
      %953 = vmatmul.mubr.bf16.gmra.mrb[0].mxu0 %v915
      %v954 = vpop.f32.mrb[0].mxu0
      %v955 = vadd.f32 0.0, %v954
      %v956 = vpop.f32.mrb[0].mxu0
      %v957 = vpop.f32.mrb[0].mxu0
      %v958 = vpop.f32.mrb[0].mxu0
      %959 = vdwg.mxu0
      %v960 = vsel %vm724, -1e+30, %v955
      %v961 = vsel %vm677, %v960, -inf
      %962 = vmax.xlane.f32.xlu0 %v961
      %v963 = vpop.xlane.xlu0 %962
      %v964 = vsub.f32 %v960, %v963
      %v965 = vmul.f32 %v964, 1.442695
      %v966 = vpow.pop %v965
      %v967 = vsel %vm677, %v966, 0.0
      %968 = vadd.xlane.f32.xlu0 %v967
      %v969 = vpop.xlane.xlu0 %968
      %v970 = vrcp.pop %v969
      %v971 = vmul.f32 %v966, %v970
      %v972 = vpack.c.bf16 %v971, %v971
      %973 = vrot.lane.b32.xlu0 %v855, 112
      %v974 = vpop.permute.xlu0 %973
      %v976 = vsel %vm677, %v972, 0
      %v979 = vsel %vm741, %v974, 0
      %981 = vmatprep.subr.bf16.mxu0 0
      %982 = vmatpush1.bf16.msra.mxu0 %v979
      %983 = vmatprep.subr.bf16.mxu0 0
      %984 = vmatpush1.bf16.msra.mxu0 0
      %985 = vmatprep.subr.bf16.mxu0 0
      %986 = vmatpush1.bf16.msra.mxu0 0
      %987 = vmatprep.subr.bf16.mxu0 0
      %988 = vmatpush1.bf16.msra.mxu0 0
      %989 = vmatprep.subr.bf16.mxu0 0
      %990 = vmatpush1.bf16.msra.mxu0 0
      %991 = vmatprep.subr.bf16.mxu0 0
      %992 = vmatpush1.bf16.msra.mxu0 0
      %993 = vmatprep.subr.bf16.mxu0 0
      %994 = vmatpush1.bf16.msra.mxu0 0
      %995 = vmatprep.subr.bf16.mxu0 0
      %996 = vmatpush1.bf16.msra.mxu0 0
      %997 = vmatprep.subr.bf16.mxu0 0
      %998 = vmatpush1.bf16.msra.mxu0 0
      %999 = vmatprep.subr.bf16.mxu0 0
      %1000 = vmatpush1.bf16.msra.mxu0 0
      %1001 = vmatprep.subr.bf16.mxu0 0
      %1002 = vmatpush1.bf16.msra.mxu0 0
      %1003 = vmatprep.subr.bf16.mxu0 0
      %1004 = vmatpush1.bf16.msra.mxu0 0
      %1005 = vmatprep.subr.bf16.mxu0 0
      %1006 = vmatpush1.bf16.msra.mxu0 0
      %1007 = vmatprep.subr.bf16.mxu0 0
      %1008 = vmatpush1.bf16.msra.mxu0 0
      %1009 = vmatprep.subr.bf16.mxu0 0
      %1010 = vmatpush1.bf16.msra.mxu0 0
      %1011 = vmatprep.subr.bf16.mxu0 0
      %1012 = vmatpush1.bf16.msra.mxu0 0
      %1013 = vmatprep.mubr.bf16.mxu0 0
      %1014 = vmatmul.mubr.bf16.gmra.mrb[0].mxu0 %v976
      %v1015 = vpop.f32.mrb[0].mxu0
      %v1016 = vadd.f32 0.0, %v1015
      %v1017 = vpop.f32.mrb[0].mxu0
      %v1018 = vpop.f32.mrb[0].mxu0
      %v1019 = vpop.f32.mrb[0].mxu0
      %1020 = vdwg.mxu0
      %1022 = vrot.lane.b32.xlu0 %v1016, 16
      %v1023 = vpop.permute.xlu0 %1022
      %vm1025 = vcmask 195712
      %1026 = vst.msk [vmem:[#allocation4] sm:$0xff] %vm1025, %v1023
      %1027 = vrot.lane.b32.xlu0 %v667, 104
      %v1028 = vpop.permute.xlu0 %1027
      %1029 = vrot.lane.b32.xlu0 %v791, 104
      %v1030 = vpop.permute.xlu0 %1029
      %v1032 = vsel %vm677, %v1028, 0
      %v1035 = vsel %vm677, %v1030, 0
      %1037 = vmatprep.subr.bf16.mxu0 0
      %1038 = vmatpush1.bf16.xpose.msra.mxu0 %v1035
      %1039 = vmatprep.subr.bf16.mxu0 0
      %1040 = vmatpush1.bf16.xpose.msra.mxu0 0
      %1041 = vmatprep.subr.bf16.mxu0 0
      %1042 = vmatpush1.bf16.xpose.msra.mxu0 0
      %1043 = vmatprep.subr.bf16.mxu0 0
      %1044 = vmatpush1.bf16.xpose.msra.mxu0 0
      %1045 = vmatprep.subr.bf16.mxu0 0
      %1046 = vmatpush1.bf16.xpose.msra.mxu0 0
      %1047 = vmatprep.subr.bf16.mxu0 0
      %1048 = vmatpush1.bf16.xpose.msra.mxu0 0
      %1049 = vmatprep.subr.bf16.mxu0 0
      %1050 = vmatpush1.bf16.xpose.msra.mxu0 0
      %1051 = vmatprep.subr.bf16.mxu0 0
      %1052 = vmatpush1.bf16.xpose.msra.mxu0 0
      %1053 = vmatprep.subr.bf16.mxu0 0
      %1054 = vmatpush1.bf16.xpose.msra.mxu0 0
      %1055 = vmatprep.subr.bf16.mxu0 0
      %1056 = vmatpush1.bf16.xpose.msra.mxu0 0
      %1057 = vmatprep.subr.bf16.mxu0 0
      %1058 = vmatpush1.bf16.xpose.msra.mxu0 0
      %1059 = vmatprep.subr.bf16.mxu0 0
      %1060 = vmatpush1.bf16.xpose.msra.mxu0 0
      %1061 = vmatprep.subr.bf16.mxu0 0
      %1062 = vmatpush1.bf16.xpose.msra.mxu0 0
      %1063 = vmatprep.subr.bf16.mxu0 0
      %1064 = vmatpush1.bf16.xpose.msra.mxu0 0
      %1065 = vmatprep.subr.bf16.mxu0 0
      %1066 = vmatpush1.bf16.xpose.msra.mxu0 0
      %1067 = vmatprep.subr.bf16.mxu0 0
      %1068 = vmatpush1.bf16.xpose.msra.mxu0 0
      %1069 = vmatprep.mubr.bf16.mxu0 0
      %1070 = vmatmul.mubr.bf16.gmra.mrb[0].mxu0 %v1032
      %v1071 = vpop.f32.mrb[0].mxu0
      %v1072 = vadd.f32 0.0, %v1071
      %v1073 = vpop.f32.mrb[0].mxu0
      %v1074 = vpop.f32.mrb[0].mxu0
      %v1075 = vpop.f32.mrb[0].mxu0
      %1076 = vdwg.mxu0
      %v1077 = vsel %vm724, -1e+30, %v1072
      %v1078 = vsel %vm677, %v1077, -inf
      %1079 = vmax.xlane.f32.xlu0 %v1078
      %v1080 = vpop.xlane.xlu0 %1079
      %v1081 = vsub.f32 %v1077, %v1080
      %v1082 = vmul.f32 %v1081, 1.442695
      %v1083 = vpow.pop %v1082
      %v1084 = vsel %vm677, %v1083, 0.0
      %1085 = vadd.xlane.f32.xlu0 %v1084
      %v1086 = vpop.xlane.xlu0 %1085
      %v1087 = vrcp.pop %v1086
      %v1088 = vmul.f32 %v1083, %v1087
      %v1089 = vpack.c.bf16 %v1088, %v1088
      %1090 = vrot.lane.b32.xlu0 %v855, 104
      %v1091 = vpop.permute.xlu0 %1090
      %v1093 = vsel %vm677, %v1089, 0
      %v1096 = vsel %vm741, %v1091, 0
      %1098 = vmatprep.subr.bf16.mxu0 0
      %1099 = vmatpush1.bf16.msra.mxu0 %v1096
      %1100 = vmatprep.subr.bf16.mxu0 0
      %1101 = vmatpush1.bf16.msra.mxu0 0
      %1102 = vmatprep.subr.bf16.mxu0 0
      %1103 = vmatpush1.bf16.msra.mxu0 0
      %1104 = vmatprep.subr.bf16.mxu0 0
      %1105 = vmatpush1.bf16.msra.mxu0 0
      %1106 = vmatprep.subr.bf16.mxu0 0
      %1107 = vmatpush1.bf16.msra.mxu0 0
      %1108 = vmatprep.subr.bf16.mxu0 0
      %1109 = vmatpush1.bf16.msra.mxu0 0
      %1110 = vmatprep.subr.bf16.mxu0 0
      %1111 = vmatpush1.bf16.msra.mxu0 0
      %1112 = vmatprep.subr.bf16.mxu0 0
      %1113 = vmatpush1.bf16.msra.mxu0 0
      %1114 = vmatprep.subr.bf16.mxu0 0
      %1115 = vmatpush1.bf16.msra.mxu0 0
      %1116 = vmatprep.subr.bf16.mxu0 0
      %1117 = vmatpush1.bf16.msra.mxu0 0
      %1118 = vmatprep.subr.bf16.mxu0 0
      %1119 = vmatpush1.bf16.msra.mxu0 0
      %1120 = vmatprep.subr.bf16.mxu0 0
      %1121 = vmatpush1.bf16.msra.mxu0 0
      %1122 = vmatprep.subr.bf16.mxu0 0
      %1123 = vmatpush1.bf16.msra.mxu0 0
      %1124 = vmatprep.subr.bf16.mxu0 0
      %1125 = vmatpush1.bf16.msra.mxu0 0
      %1126 = vmatprep.subr.bf16.mxu0 0
      %1127 = vmatpush1.bf16.msra.mxu0 0
      %1128 = vmatprep.subr.bf16.mxu0 0
      %1129 = vmatpush1.bf16.msra.mxu0 0
      %1130 = vmatprep.mubr.bf16.mxu0 0
      %1131 = vmatmul.mubr.bf16.gmra.mrb[0].mxu0 %v1093
      %v1132 = vpop.f32.mrb[0].mxu0
      %v1133 = vadd.f32 0.0, %v1132
      %v1134 = vpop.f32.mrb[0].mxu0
      %v1135 = vpop.f32.mrb[0].mxu0
      %v1136 = vpop.f32.mrb[0].mxu0
      %1137 = vdwg.mxu0
      %1139 = vrot.lane.b32.xlu0 %v1133, 24
      %v1140 = vpop.permute.xlu0 %1139
      %vm1142 = vcmask 261312
      %1143 = vst.msk [vmem:[#allocation4] sm:$0xff] %vm1142, %v1140
      %v1144 = vld [vmem:[#allocation4] sm:$0xff]
      %v1145 = vpack.c.bf16 %v1144, %v1144
      %v1146 = vld [vmem:[%s5] sm:$0xf]
      %v1147 = vld [vmem:[%s5 + $0x4] sm:$0xf]
      %v1148 = vld [vmem:[%s5 + $0x8] sm:$0xf]
      %v1149 = vld [vmem:[%s5 + $0xc] sm:$0xf]
      %v1150 = vld [vmem:[%s9] sm:$0x1]
      %v1152 = vlaneseq
      %v1153 = vshrl.u32 %v1152, 7
      %v1154 = vsub.s32 0, %v1153
      %v1155 = vrot.slane %v1150, %v1154
      %v1161 = vunpack.c.l.b16 %v1146
      %v1162 = vunpack.c.l.b16 %v1147
      %v1163 = vunpack.c.l.b16 %v1148
      %v1164 = vunpack.c.l.b16 %v1149
      %v1165 = vpack.c.b16 %v1162, %v1161
      %v1166 = vpack.c.b16 %v1164, %v1163
      %v1170 = vsel %vm622, %v1145, 0
      %1172 = vmatprep.subr.bf16.mxu0 0
      %1173 = vmatpush1.bf16.msra.mxu0 %v1165
      %1174 = vmatprep.subr.bf16.mxu0 0
      %1175 = vmatpush1.bf16.msra.mxu0 %v1166
      %1176 = vmatprep.subr.bf16.mxu0 0
      %1177 = vmatpush1.bf16.msra.mxu0 0
      %1178 = vmatprep.subr.bf16.mxu0 0
      %1179 = vmatpush1.bf16.msra.mxu0 0
      %1180 = vmatprep.subr.bf16.mxu0 0
      %1181 = vmatpush1.bf16.msra.mxu0 0
      %1182 = vmatprep.subr.bf16.mxu0 0
      %1183 = vmatpush1.bf16.msra.mxu0 0
      %1184 = vmatprep.subr.bf16.mxu0 0
      %1185 = vmatpush1.bf16.msra.mxu0 0
      %1186 = vmatprep.subr.bf16.mxu0 0
      %1187 = vmatpush1.bf16.msra.mxu0 0
      %1188 = vmatprep.subr.bf16.mxu0 0
      %1189 = vmatpush1.bf16.msra.mxu0 0
      %1190 = vmatprep.subr.bf16.mxu0 0
      %1191 = vmatpush1.bf16.msra.mxu0 0
      %1192 = vmatprep.subr.bf16.mxu0 0
      %1193 = vmatpush1.bf16.msra.mxu0 0
      %1194 = vmatprep.subr.bf16.mxu0 0
      %1195 = vmatpush1.bf16.msra.mxu0 0
      %1196 = vmatprep.subr.bf16.mxu0 0
      %1197 = vmatpush1.bf16.msra.mxu0 0
      %1198 = vmatprep.subr.bf16.mxu0 0
      %1199 = vmatpush1.bf16.msra.mxu0 0
      %1200 = vmatprep.subr.bf16.mxu0 0
      %1201 = vmatpush1.bf16.msra.mxu0 0
      %1202 = vmatprep.subr.bf16.mxu0 0
      %1203 = vmatpush1.bf16.msra.mxu0 0
      %1204 = vmatprep.mubr.bf16.mxu0 0
      %1205 = vmatmul.mubr.bf16.gmra.mrb[0].mxu0 %v1170
      %v1206 = vpop.f32.mrb[0].mxu0
      %v1207 = vadd.f32 %v1155, %v1206
      %v1208 = vpop.f32.mrb[0].mxu0
      %v1209 = vpop.f32.mrb[0].mxu0
      %v1210 = vpop.f32.mrb[0].mxu0
      %1211 = vdwg.mxu0
      %v1212 = vunpack.c.l.bf16 %v598
      %v1213 = vadd.f32 %v1212, %v1207
      %v1214 = vld [vmem:[%s10] sm:$0x1]
      %v1215 = vld [vmem:[%s11] sm:$0x1]
      %v1216 = vsel %vm622, %v1213, 0.0
      %1217 = vadd.xlane.f32.xlu0 %v1216
      %v1218 = vpop.xlane.xlu0 %1217
      %v1219 = vrcp.pop 32.0
      %v1220 = vmul.f32 %v1218, %v1219
      %v1221 = vsub.f32 %v1213, %v1220
      %v1222 = vmul.f32 %v1221, %v1221
      %v1223 = vsel %vm622, %v1222, 0.0
      %1224 = vadd.xlane.f32.xlu0 %v1223
      %v1225 = vpop.xlane.xlu0 %1224
      %v1226 = vmul.f32 %v1225, %v1219
      %v1227 = vadd.f32 %v1226, 1e-05
      %v1228 = vrsqrt.pop %v1227
      %v1229 = vmul.f32 %v1221, %v1228
      %v1231 = vlaneseq
      %v1232 = vshrl.u32 %v1231, 7
      %v1233 = vsub.s32 0, %v1232
      %v1234 = vrot.slane %v1214, %v1233
      %v1236 = vmul.f32 %v1229, %v1234
      %v1238 = vlaneseq
      %v1239 = vshrl.u32 %v1238, 7
      %v1240 = vsub.s32 0, %v1239
      %v1241 = vrot.slane %v1215, %v1240
      %v1243 = vadd.f32 %v1236, %v1241
      %v1244 = vpack.c.bf16 %v1243, %v1243
      %vm1245 = vcmask 257024
      %1246 = vst.msk [vmem:[%s456] sm:$0xf] %vm1245, %v1244
      %p1247 = scmp.lt.s32.totalorder %s27, 1
      %s1248 = scalar_select %p1247, %s27, 1
      %p1249 = scmp.lt.s32.totalorder %s28, 0
      %s1250 = scalar_select %p1249, %s28, 0
      %s1251 = sadd.s32 %s1250, %s1248
      %s1252 = smul.addr %s1251, 4
      %s1253 = scalar_lea.vmem %s12, %s1252
      // Predicated region
      $region73: #{vanilla_transformer_forward.15} parent=67 // pred_check
        %p1254 = pneg %p319
      $region74: #{vanilla_transformer_forward.15} parent=67 // pred_check_branch
        %1256 = sbr.rel (%p1254) target = $region76
      $region75: #{vanilla_transformer_forward.15} parent=67 // pred_region
        _
      $region76: #{vanilla_transformer_forward.15} parent=67 // pred_fallthru
        _
    $region68: #{vanilla_transformer_forward.15} parent=5 // pred_fallthru
      _
    %p1257 = scmp.le.s32.totalorder 2, %s18
    // Predicated region
    $region77: #{vanilla_transformer_forward.15} parent=5 // pred_check
      %p1258 = pneg %p1257
    $region78: #{vanilla_transformer_forward.15} parent=5 // pred_check_branch
      %1260 = sbr.rel (%p1258) target = $region80
    $region79: #{vanilla_transformer_forward.15} parent=5 // pred_region
      %s1261 = ssub.s32 %s18, 2
      // Predicated region
      $region81: #{vanilla_transformer_forward.15} parent=79 // pred_check
        %p1262 = pneg %p325
      $region82: #{vanilla_transformer_forward.15} parent=79 // pred_check_branch
        %1264 = sbr.rel (%p1262) target = $region84
      $region83: #{vanilla_transformer_forward.15} parent=79 // pred_region
        %p1265 = scmp.lt.s32.totalorder %s29, 1
        %s1266 = scalar_select %p1265, %s29, 1
        %p1267 = scmp.lt.s32.totalorder %s30, 0
        %s1268 = scalar_select %p1267, %s30, 0
        %s1269 = sadd.s32 %s1268, %s1266
        %s1270 = smul.addr %s1269, 4
        %s1271 = scalar_lea.vmem %s12, %s1270
      $region84: #{vanilla_transformer_forward.15} parent=79 // pred_fallthru
        _
    $region80: #{vanilla_transformer_forward.15} parent=5 // pred_fallthru
      _
  $region6: #{vanilla_transformer_forward.15} parent=0 // loop_footer
    %s22 = sadd.s32 1, %s18
  $region7: #{vanilla_transformer_forward.15} parent=0 // loop_footer_branch
    %17 = sbr.rel target = $region3
  $region8: #{vanilla_transformer_forward.15} parent=0 // loop_exit
    _

// kernel: vanilla_transformer_forward.25
$region0: #{vanilla_transformer_forward.25}
  #allocation0 [shape = 'u32[]', space=smem, size = 0x4, offset = 0x4, fixed_abs, tag = 'smem constant byte address 0x4 - core index']
  #allocation1 [shape = 'u32[144,128]{1,0:T(1,128)}', space=vmem, size = 0x12000, scoped, tag = 'internal scratch']
  %s0 = inlined_call_operand.vmem [shape: bf16[16,32], index: 0, kind: input, shape index: {}]
  %s1 = inlined_call_operand.vmem [shape: bf16[32,64], index: 1, kind: input, shape index: {}]
  %s2 = inlined_call_operand.vmem [shape: f32[1,64], index: 2, kind: input, shape index: {}]
  %s3 = inlined_call_operand.vmem [shape: bf16[64,128], index: 3, kind: input, shape index: {}]
  %s4 = inlined_call_operand.vmem [shape: f32[1,128], index: 4, kind: input, shape index: {}]
  %s5 = inlined_call_operand.vmem [shape: f32[16,128], index: 5, kind: output, shape index: {}]
  %s6 = sld [smem:[#allocation0]]
  $region30: #{vanilla_transformer_forward.25} parent=0
    _
  %s8 = ssub.s32 1, %s6
  %s9 = scalar_select 0, %s8, %s6
  // Predicated region
  $region2: #{vanilla_transformer_forward.25} parent=0 // pred_check
    _
  $region3: #{vanilla_transformer_forward.25} parent=0 // pred_check_branch
    %11 = sbr.rel (0) target = $region5
  $region4: #{vanilla_transformer_forward.25} parent=0 // pred_region
    _
  $region5: #{vanilla_transformer_forward.25} parent=0 // pred_fallthru
    _
  // Predicated region
  $region6: #{vanilla_transformer_forward.25} parent=0 // pred_check
    _
  $region7: #{vanilla_transformer_forward.25} parent=0 // pred_check_branch
    %13 = sbr.rel (0) target = $region9
  $region8: #{vanilla_transformer_forward.25} parent=0 // pred_region
    _
  $region9: #{vanilla_transformer_forward.25} parent=0 // pred_fallthru
    _
  // Predicated region
  $region10: #{vanilla_transformer_forward.25} parent=0 // pred_check
    _
  $region11: #{vanilla_transformer_forward.25} parent=0 // pred_check_branch
    %15 = sbr.rel (0) target = $region13
  $region12: #{vanilla_transformer_forward.25} parent=0 // pred_region
    _
  $region13: #{vanilla_transformer_forward.25} parent=0 // pred_fallthru
    _
  // Predicated region
  $region14: #{vanilla_transformer_forward.25} parent=0 // pred_check
    _
  $region15: #{vanilla_transformer_forward.25} parent=0 // pred_check_branch
    %17 = sbr.rel (0) target = $region17
  $region16: #{vanilla_transformer_forward.25} parent=0 // pred_region
    _
  $region17: #{vanilla_transformer_forward.25} parent=0 // pred_fallthru
    _
  // Predicated region
  $region18: #{vanilla_transformer_forward.25} parent=0 // pred_check
    _
  $region19: #{vanilla_transformer_forward.25} parent=0 // pred_check_branch
    %19 = sbr.rel (0) target = $region21
  $region20: #{vanilla_transformer_forward.25} parent=0 // pred_region
    _
  $region21: #{vanilla_transformer_forward.25} parent=0 // pred_fallthru
    _
  %v21 = vld [vmem:[%s0] sm:$0xf]
  %v22 = vld [vmem:[%s0 + $0x4] sm:$0xf]
  %v23 = vld [vmem:[%s1] sm:$0xf]
  %v24 = vld [vmem:[%s1 + $0x4] sm:$0xf]
  %v25 = vld [vmem:[%s1 + $0x8] sm:$0xf]
  %v26 = vld [vmem:[%s1 + $0xc] sm:$0xf]
  %v27 = vld [vmem:[%s2] sm:$0x1]
  %v29 = vlaneseq
  %v30 = vshrl.u32 %v29, 7
  %v31 = vsub.s32 0, %v30
  %v32 = vrot.slane %v27, %v31
  %v36 = vunpack.c.l.b16 %v21
  %v37 = vunpack.c.l.b16 %v22
  %v38 = vpack.c.b16 %v37, %v36
  %v43 = vunpack.c.l.b16 %v23
  %v44 = vunpack.c.l.b16 %v24
  %v45 = vunpack.c.l.b16 %v25
  %v46 = vunpack.c.l.b16 %v26
  %v47 = vpack.c.b16 %v44, %v43
  %v48 = vpack.c.b16 %v46, %v45
  %vm51 = vcmask 261120
  %v53 = vsel %vm51, %v38, 0
  %55 = vmatprep.subr.bf16.mxu0 0
  %56 = vmatpush1.bf16.msra.mxu0 %v47
  %57 = vmatprep.subr.bf16.mxu0 0
  %58 = vmatpush1.bf16.msra.mxu0 %v48
  %59 = vmatprep.subr.bf16.mxu0 0
  %60 = vmatpush1.bf16.msra.mxu0 0
  %61 = vmatprep.subr.bf16.mxu0 0
  %62 = vmatpush1.bf16.msra.mxu0 0
  %63 = vmatprep.subr.bf16.mxu0 0
  %64 = vmatpush1.bf16.msra.mxu0 0
  %65 = vmatprep.subr.bf16.mxu0 0
  %66 = vmatpush1.bf16.msra.mxu0 0
  %67 = vmatprep.subr.bf16.mxu0 0
  %68 = vmatpush1.bf16.msra.mxu0 0
  %69 = vmatprep.subr.bf16.mxu0 0
  %70 = vmatpush1.bf16.msra.mxu0 0
  %71 = vmatprep.subr.bf16.mxu0 0
  %72 = vmatpush1.bf16.msra.mxu0 0
  %73 = vmatprep.subr.bf16.mxu0 0
  %74 = vmatpush1.bf16.msra.mxu0 0
  %75 = vmatprep.subr.bf16.mxu0 0
  %76 = vmatpush1.bf16.msra.mxu0 0
  %77 = vmatprep.subr.bf16.mxu0 0
  %78 = vmatpush1.bf16.msra.mxu0 0
  %79 = vmatprep.subr.bf16.mxu0 0
  %80 = vmatpush1.bf16.msra.mxu0 0
  %81 = vmatprep.subr.bf16.mxu0 0
  %82 = vmatpush1.bf16.msra.mxu0 0
  %83 = vmatprep.subr.bf16.mxu0 0
  %84 = vmatpush1.bf16.msra.mxu0 0
  %85 = vmatprep.subr.bf16.mxu0 0
  %86 = vmatpush1.bf16.msra.mxu0 0
  %87 = vmatprep.mubr.bf16.mxu0 0
  %88 = vmatmul.mubr.bf16.gmra.mrb[0].mxu0 %v53
  %v89 = vpop.f32.mrb[0].mxu0
  %v90 = vadd.f32 %v32, %v89
  %v91 = vpop.f32.mrb[0].mxu0
  %v92 = vpop.f32.mrb[0].mxu0
  %v93 = vadd.f32 %v32, %v92
  %v94 = vpop.f32.mrb[0].mxu0
  %95 = vdwg.mxu0
  %v96 = vmax.f32 %v90, 0.0
  %v97 = vmax.f32 %v93, 0.0
  %v98 = vpack.c.bf16 %v97, %v96
  %v99 = vld [vmem:[%s3] sm:$0xf]
  %v100 = vld [vmem:[%s3 + $0x4] sm:$0xf]
  %v101 = vld [vmem:[%s3 + $0x8] sm:$0xf]
  %v102 = vld [vmem:[%s3 + $0xc] sm:$0xf]
  %v103 = vld [vmem:[%s3 + $0x10] sm:$0xf]
  %v104 = vld [vmem:[%s3 + $0x14] sm:$0xf]
  %v105 = vld [vmem:[%s3 + $0x18] sm:$0xf]
  %v106 = vld [vmem:[%s3 + $0x1c] sm:$0xf]
  %v107 = vld [vmem:[%s4] sm:$0x1]
  %v109 = vlaneseq
  %v110 = vshrl.u32 %v109, 7
  %v111 = vsub.s32 0, %v110
  %v112 = vrot.slane %v107, %v111
  %v122 = vunpack.c.l.b16 %v99
  %v123 = vunpack.c.l.b16 %v100
  %v124 = vunpack.c.l.b16 %v101
  %v125 = vunpack.c.l.b16 %v102
  %v126 = vunpack.c.l.b16 %v103
  %v127 = vunpack.c.l.b16 %v104
  %v128 = vunpack.c.l.b16 %v105
  %v129 = vunpack.c.l.b16 %v106
  %v130 = vpack.c.b16 %v123, %v122
  %v131 = vpack.c.b16 %v125, %v124
  %v132 = vpack.c.b16 %v127, %v126
  %v133 = vpack.c.b16 %v129, %v128
  %vm138 = vcmask 523264
  %v140 = vsel %vm138, %v98, 0
  %142 = vmatprep.subr.bf16.mxu0 0
  %143 = vmatpush1.bf16.msra.mxu0 %v130
  %144 = vmatprep.subr.bf16.mxu0 0
  %145 = vmatpush1.bf16.msra.mxu0 %v131
  %146 = vmatprep.subr.bf16.mxu0 0
  %147 = vmatpush1.bf16.msra.mxu0 %v132
  %148 = vmatprep.subr.bf16.mxu0 0
  %149 = vmatpush1.bf16.msra.mxu0 %v133
  %150 = vmatprep.subr.bf16.mxu0 0
  %151 = vmatpush1.bf16.msra.mxu0 0
  %152 = vmatprep.subr.bf16.mxu0 0
  %153 = vmatpush1.bf16.msra.mxu0 0
  %154 = vmatprep.subr.bf16.mxu0 0
  %155 = vmatpush1.bf16.msra.mxu0 0
  %156 = vmatprep.subr.bf16.mxu0 0
  %157 = vmatpush1.bf16.msra.mxu0 0
  %158 = vmatprep.subr.bf16.mxu0 0
  %159 = vmatpush1.bf16.msra.mxu0 0
  %160 = vmatprep.subr.bf16.mxu0 0
  %161 = vmatpush1.bf16.msra.mxu0 0
  %162 = vmatprep.subr.bf16.mxu0 0
  %163 = vmatpush1.bf16.msra.mxu0 0
  %164 = vmatprep.subr.bf16.mxu0 0
  %165 = vmatpush1.bf16.msra.mxu0 0
  %166 = vmatprep.subr.bf16.mxu0 0
  %167 = vmatpush1.bf16.msra.mxu0 0
  %168 = vmatprep.subr.bf16.mxu0 0
  %169 = vmatpush1.bf16.msra.mxu0 0
  %170 = vmatprep.subr.bf16.mxu0 0
  %171 = vmatpush1.bf16.msra.mxu0 0
  %172 = vmatprep.subr.bf16.mxu0 0
  %173 = vmatpush1.bf16.msra.mxu0 0
  %174 = vmatprep.mubr.bf16.mxu0 0
  %175 = vmatmul.mubr.bf16.gmra.mrb[0].mxu0 %v140
  %v176 = vpop.f32.mrb[0].mxu0
  %v177 = vadd.f32 %v112, %v176
  %v178 = vpop.f32.mrb[0].mxu0
  %v179 = vpop.f32.mrb[0].mxu0
  %v180 = vadd.f32 %v112, %v179
  %v181 = vpop.f32.mrb[0].mxu0
  %182 = vdwg.mxu0
  %183 = vst [vmem:[%s5] sm:$0xff] %v177
  %184 = vst [vmem:[%s5 + $0x8] sm:$0xff] %v180
  // Predicated region
  $region22: #{vanilla_transformer_forward.25} parent=0 // pred_check
    _
  $region23: #{vanilla_transformer_forward.25} parent=0 // pred_check_branch
    %186 = sbr.rel (0) target = $region25
  $region24: #{vanilla_transformer_forward.25} parent=0 // pred_region
    _
  $region25: #{vanilla_transformer_forward.25} parent=0 // pred_fallthru
    _
  // Predicated region
  $region26: #{vanilla_transformer_forward.25} parent=0 // pred_check
    _
  $region27: #{vanilla_transformer_forward.25} parent=0 // pred_check_branch
    %188 = sbr.rel (0) target = $region29
  $region28: #{vanilla_transformer_forward.25} parent=0 // pred_region
    _
  $region29: #{vanilla_transformer_forward.25} parent=0 // pred_fallthru
    _

// kernel: vanilla_transformer_forward.20
$region0: #{vanilla_transformer_forward.20}
  #allocation0 [shape = 'u32[]', space=smem, size = 0x4, offset = 0x4, fixed_abs, tag = 'smem constant byte address 0x4 - core index']
  #allocation1 [shape = 'u32[144,128]{1,0:T(1,128)}', space=vmem, size = 0x12000, scoped, tag = 'internal scratch']
  #allocation2 [shape = 'bf16[8,32]{1,0:T(8,128)(2,1)}', space=vmem, size = 0x800, scoped, tag = 'scratch operand']
  #allocation3 [shape = 'bf16[8,32]{1,0:T(8,128)(2,1)}', space=vmem, size = 0x800, scoped, tag = 'scratch operand']
  #allocation4 [shape = 'f32[8,32]{1,0:T(8,128)}', space=vmem, size = 0x1000, scoped, tag = 'scratch operand']
  %s0 = inlined_call_operand.vmem [shape: bf16[2,8,32], index: 0, kind: input, shape index: {}]
  %s1 = inlined_call_operand.vmem [shape: bf16[2,8,32], index: 1, kind: input, shape index: {}]
  %s2 = inlined_call_operand.vmem [shape: bf16[32,32], index: 2, kind: input, shape index: {}]
  %s3 = inlined_call_operand.vmem [shape: bf16[32,32], index: 3, kind: input, shape index: {}]
  %s4 = inlined_call_operand.vmem [shape: bf16[32,32], index: 4, kind: input, shape index: {}]
  %s5 = inlined_call_operand.vmem [shape: bf16[32,32], index: 5, kind: input, shape index: {}]
  %s6 = inlined_call_operand.vmem [shape: f32[1,32], index: 6, kind: input, shape index: {}]
  %s7 = inlined_call_operand.vmem [shape: f32[1,32], index: 7, kind: input, shape index: {}]
  %s8 = inlined_call_operand.vmem [shape: f32[1,32], index: 8, kind: input, shape index: {}]
  %s9 = inlined_call_operand.vmem [shape: f32[1,32], index: 9, kind: input, shape index: {}]
  %s10 = inlined_call_operand.vmem [shape: f32[1,32], index: 10, kind: input, shape index: {}]
  %s11 = inlined_call_operand.vmem [shape: f32[1,32], index: 11, kind: input, shape index: {}]
  %s12 = inlined_call_operand.vmem [shape: bf16[2,8,32], index: 12, kind: output, shape index: {}]
  %s13 = sld [smem:[#allocation0]]
  $region85: #{vanilla_transformer_forward.20} parent=0
    _
  %s15 = ssub.s32 1, %s13
  %s16 = scalar_select 0, %s15, %s13
  loop: start=0, step=1, limit=4
  $region2: #{vanilla_transformer_forward.20} parent=0 // loop_pre_header
    _
  $region3: #{vanilla_transformer_forward.20} parent=0 // loop_header
    %s18 = sphi 0, %s22
    %p19 = scmp.ge.s32.totalorder %s18, 4
    %s25 = sphi 0, %s37
    %s26 = sphi 0, %s33
    %s27 = sphi 0, %s25
    %s28 = sphi 0, %s26
    %s29 = sphi 0, %s27
    %s30 = sphi 0, %s28
    %s42 = sphi 0, %s44
    %s45 = sphi 0, %s42
    %s46 = sphi 0, %s45
    %s62 = sphi 0, %s46
    %s68 = sphi 0, %s70
    %s71 = sphi 0, %s68
    %s72 = sphi 0, %s71
    %s88 = sphi 0, %s72
    %s92 = sphi 0, %s92
    %s94 = sphi 0, %s92
    %s95 = sphi 0, %s94
    %s109 = sphi 0, %s95
    %s113 = sphi 0, %s113
    %s115 = sphi 0, %s113
    %s116 = sphi 0, %s115
    %s130 = sphi 0, %s116
    %s134 = sphi 0, %s134
    %s136 = sphi 0, %s134
    %s137 = sphi 0, %s136
    %s151 = sphi 0, %s137
    %s155 = sphi 0, %s155
    %s157 = sphi 0, %s155
    %s158 = sphi 0, %s157
    %s172 = sphi 0, %s158
    %s176 = sphi 0, %s176
    %s178 = sphi 0, %s176
    %s179 = sphi 0, %s178
    %s193 = sphi 0, %s179
    %s197 = sphi 0, %s197
    %s199 = sphi 0, %s197
    %s200 = sphi 0, %s199
    %s214 = sphi 0, %s200
    %s218 = sphi 0, %s218
    %s220 = sphi 0, %s218
    %s221 = sphi 0, %s220
    %s235 = sphi 0, %s221
    %s239 = sphi 0, %s239
    %s241 = sphi 0, %s239
    %s242 = sphi 0, %s241
    %s256 = sphi 0, %s242
    %s260 = sphi 0, %s260
    %s262 = sphi 0, %s260
    %s263 = sphi 0, %s262
    %s277 = sphi 0, %s263
    %s281 = sphi 0, %s281
    %s283 = sphi 0, %s281
    %s284 = sphi 0, %s283
    %s298 = sphi 0, %s284
    %s306 = sphi 0, %s308
    %s309 = sphi 0, %s306
    %s310 = sphi 0, %s309
    %s326 = sphi 0, %s310
  $region4: #{vanilla_transformer_forward.20} parent=0 // loop_header_branch
    %21 = sbr.rel (%p19) target = $region8
  $region5: #{vanilla_transformer_forward.20} parent=0 // loop_body
    %s23 = ssub.s32 %s18, 1
    %s24 = ssub.s32 %s18, 2
    %s31 = sadd.s32 1, %s26
    %p32 = scmp.ge.s32.totalorder %s31, 1
    %s33 = scalar_select %p32, 0, %s31
    %s34 = sadd.s32 1, %s25
    %s35 = scalar_select %p32, %s34, %s25
    %p36 = scmp.ge.s32.totalorder %s35, 2
    %s37 = scalar_select %p36, 0, %s35
    %s38 = ssub.s32 %s25, %s37
    %s39 = ssub.s32 %s26, %s33
    %s40 = sor.u32 %s38, %s39
    %p41 = scmp.eq.s32.totalorder %s40, 0
    %s43 = sadd.s32 %s42, 1
    %s44 = scalar_select %p41, %s42, %s43
    %p47 = pneg %p41
    %p48 = scmp.eq.s32.totalorder %s18, 1
    %p49 = por %p47, %p48
    %p50 = scmp.ne.s32.totalorder %s42, %s45
    %p51 = scmp.eq.s32.totalorder %s18, 0
    %p52 = por %p50, %p51
    %p53 = scmp.ne.s32.totalorder %s42, %s45
    %p54 = scmp.eq.s32.totalorder %s23, 1
    %p55 = por %p53, %p54
    %p56 = scmp.ne.s32.totalorder %s45, %s46
    %p57 = scmp.eq.s32.totalorder %s23, 0
    %p58 = por %p56, %p57
    %p59 = scmp.ne.s32.totalorder %s45, %s46
    %p60 = scmp.eq.s32.totalorder %s24, 1
    %p61 = por %p59, %p60
    %p63 = scmp.ne.s32.totalorder %s46, %s62
    %p64 = scmp.eq.s32.totalorder %s24, 0
    %p65 = por %p63, %p64
    %s66 = ssub.s32 %s25, %s37
    %p67 = scmp.eq.s32.totalorder %s66, 0
    %s69 = sadd.s32 %s68, 1
    %s70 = scalar_select %p67, %s68, %s69
    %p73 = pneg %p67
    %p74 = scmp.eq.s32.totalorder %s18, 1
    %p75 = por %p73, %p74
    %p76 = scmp.ne.s32.totalorder %s68, %s71
    %p77 = scmp.eq.s32.totalorder %s18, 0
    %p78 = por %p76, %p77
    %p79 = scmp.ne.s32.totalorder %s68, %s71
    %p80 = scmp.eq.s32.totalorder %s23, 1
    %p81 = por %p79, %p80
    %p82 = scmp.ne.s32.totalorder %s71, %s72
    %p83 = scmp.eq.s32.totalorder %s23, 0
    %p84 = por %p82, %p83
    %p85 = scmp.ne.s32.totalorder %s71, %s72
    %p86 = scmp.eq.s32.totalorder %s24, 1
    %p87 = por %p85, %p86
    %p89 = scmp.ne.s32.totalorder %s72, %s88
    %p90 = scmp.eq.s32.totalorder %s24, 0
    %p91 = por %p89, %p90
    %s93 = sadd.s32 %s92, 1
    %p96 = scmp.eq.s32.totalorder %s18, 1
    %p97 = scmp.ne.s32.totalorder %s92, %s94
    %p98 = scmp.eq.s32.totalorder %s18, 0
    %p99 = por %p97, %p98
    %p100 = scmp.ne.s32.totalorder %s92, %s94
    %p101 = scmp.eq.s32.totalorder %s23, 1
    %p102 = por %p100, %p101
    %p103 = scmp.ne.s32.totalorder %s94, %s95
    %p104 = scmp.eq.s32.totalorder %s23, 0
    %p105 = por %p103, %p104
    %p106 = scmp.ne.s32.totalorder %s94, %s95
    %p107 = scmp.eq.s32.totalorder %s24, 1
    %p108 = por %p106, %p107
    %p110 = scmp.ne.s32.totalorder %s95, %s109
    %p111 = scmp.eq.s32.totalorder %s24, 0
    %p112 = por %p110, %p111
    %s114 = sadd.s32 %s113, 1
    %p117 = scmp.eq.s32.totalorder %s18, 1
    %p118 = scmp.ne.s32.totalorder %s113, %s115
    %p119 = scmp.eq.s32.totalorder %s18, 0
    %p120 = por %p118, %p119
    %p121 = scmp.ne.s32.totalorder %s113, %s115
    %p122 = scmp.eq.s32.totalorder %s23, 1
    %p123 = por %p121, %p122
    %p124 = scmp.ne.s32.totalorder %s115, %s116
    %p125 = scmp.eq.s32.totalorder %s23, 0
    %p126 = por %p124, %p125
    %p127 = scmp.ne.s32.totalorder %s115, %s116
    %p128 = scmp.eq.s32.totalorder %s24, 1
    %p129 = por %p127, %p128
    %p131 = scmp.ne.s32.totalorder %s116, %s130
    %p132 = scmp.eq.s32.totalorder %s24, 0
    %p133 = por %p131, %p132
    %s135 = sadd.s32 %s134, 1
    %p138 = scmp.eq.s32.totalorder %s18, 1
    %p139 = scmp.ne.s32.totalorder %s134, %s136
    %p140 = scmp.eq.s32.totalorder %s18, 0
    %p141 = por %p139, %p140
    %p142 = scmp.ne.s32.totalorder %s134, %s136
    %p143 = scmp.eq.s32.totalorder %s23, 1
    %p144 = por %p142, %p143
    %p145 = scmp.ne.s32.totalorder %s136, %s137
    %p146 = scmp.eq.s32.totalorder %s23, 0
    %p147 = por %p145, %p146
    %p148 = scmp.ne.s32.totalorder %s136, %s137
    %p149 = scmp.eq.s32.totalorder %s24, 1
    %p150 = por %p148, %p149
    %p152 = scmp.ne.s32.totalorder %s137, %s151
    %p153 = scmp.eq.s32.totalorder %s24, 0
    %p154 = por %p152, %p153
    %s156 = sadd.s32 %s155, 1
    %p159 = scmp.eq.s32.totalorder %s18, 1
    %p160 = scmp.ne.s32.totalorder %s155, %s157
    %p161 = scmp.eq.s32.totalorder %s18, 0
    %p162 = por %p160, %p161
    %p163 = scmp.ne.s32.totalorder %s155, %s157
    %p164 = scmp.eq.s32.totalorder %s23, 1
    %p165 = por %p163, %p164
    %p166 = scmp.ne.s32.totalorder %s157, %s158
    %p167 = scmp.eq.s32.totalorder %s23, 0
    %p168 = por %p166, %p167
    %p169 = scmp.ne.s32.totalorder %s157, %s158
    %p170 = scmp.eq.s32.totalorder %s24, 1
    %p171 = por %p169, %p170
    %p173 = scmp.ne.s32.totalorder %s158, %s172
    %p174 = scmp.eq.s32.totalorder %s24, 0
    %p175 = por %p173, %p174
    %s177 = sadd.s32 %s176, 1
    %p180 = scmp.eq.s32.totalorder %s18, 1
    %p181 = scmp.ne.s32.totalorder %s176, %s178
    %p182 = scmp.eq.s32.totalorder %s18, 0
    %p183 = por %p181, %p182
    %p184 = scmp.ne.s32.totalorder %s176, %s178
    %p185 = scmp.eq.s32.totalorder %s23, 1
    %p186 = por %p184, %p185
    %p187 = scmp.ne.s32.totalorder %s178, %s179
    %p188 = scmp.eq.s32.totalorder %s23, 0
    %p189 = por %p187, %p188
    %p190 = scmp.ne.s32.totalorder %s178, %s179
    %p191 = scmp.eq.s32.totalorder %s24, 1
    %p192 = por %p190, %p191
    %p194 = scmp.ne.s32.totalorder %s179, %s193
    %p195 = scmp.eq.s32.totalorder %s24, 0
    %p196 = por %p194, %p195
    %s198 = sadd.s32 %s197, 1
    %p201 = scmp.eq.s32.totalorder %s18, 1
    %p202 = scmp.ne.s32.totalorder %s197, %s199
    %p203 = scmp.eq.s32.totalorder %s18, 0
    %p204 = por %p202, %p203
    %p205 = scmp.ne.s32.totalorder %s197, %s199
    %p206 = scmp.eq.s32.totalorder %s23, 1
    %p207 = por %p205, %p206
    %p208 = scmp.ne.s32.totalorder %s199, %s200
    %p209 = scmp.eq.s32.totalorder %s23, 0
    %p210 = por %p208, %p209
    %p211 = scmp.ne.s32.totalorder %s199, %s200
    %p212 = scmp.eq.s32.totalorder %s24, 1
    %p213 = por %p211, %p212
    %p215 = scmp.ne.s32.totalorder %s200, %s214
    %p216 = scmp.eq.s32.totalorder %s24, 0
    %p217 = por %p215, %p216
    %s219 = sadd.s32 %s218, 1
    %p222 = scmp.eq.s32.totalorder %s18, 1
    %p223 = scmp.ne.s32.totalorder %s218, %s220
    %p224 = scmp.eq.s32.totalorder %s18, 0
    %p225 = por %p223, %p224
    %p226 = scmp.ne.s32.totalorder %s218, %s220
    %p227 = scmp.eq.s32.totalorder %s23, 1
    %p228 = por %p226, %p227
    %p229 = scmp.ne.s32.totalorder %s220, %s221
    %p230 = scmp.eq.s32.totalorder %s23, 0
    %p231 = por %p229, %p230
    %p232 = scmp.ne.s32.totalorder %s220, %s221
    %p233 = scmp.eq.s32.totalorder %s24, 1
    %p234 = por %p232, %p233
    %p236 = scmp.ne.s32.totalorder %s221, %s235
    %p237 = scmp.eq.s32.totalorder %s24, 0
    %p238 = por %p236, %p237
    %s240 = sadd.s32 %s239, 1
    %p243 = scmp.eq.s32.totalorder %s18, 1
    %p244 = scmp.ne.s32.totalorder %s239, %s241
    %p245 = scmp.eq.s32.totalorder %s18, 0
    %p246 = por %p244, %p245
    %p247 = scmp.ne.s32.totalorder %s239, %s241
    %p248 = scmp.eq.s32.totalorder %s23, 1
    %p249 = por %p247, %p248
    %p250 = scmp.ne.s32.totalorder %s241, %s242
    %p251 = scmp.eq.s32.totalorder %s23, 0
    %p252 = por %p250, %p251
    %p253 = scmp.ne.s32.totalorder %s241, %s242
    %p254 = scmp.eq.s32.totalorder %s24, 1
    %p255 = por %p253, %p254
    %p257 = scmp.ne.s32.totalorder %s242, %s256
    %p258 = scmp.eq.s32.totalorder %s24, 0
    %p259 = por %p257, %p258
    %s261 = sadd.s32 %s260, 1
    %p264 = scmp.eq.s32.totalorder %s18, 1
    %p265 = scmp.ne.s32.totalorder %s260, %s262
    %p266 = scmp.eq.s32.totalorder %s18, 0
    %p267 = por %p265, %p266
    %p268 = scmp.ne.s32.totalorder %s260, %s262
    %p269 = scmp.eq.s32.totalorder %s23, 1
    %p270 = por %p268, %p269
    %p271 = scmp.ne.s32.totalorder %s262, %s263
    %p272 = scmp.eq.s32.totalorder %s23, 0
    %p273 = por %p271, %p272
    %p274 = scmp.ne.s32.totalorder %s262, %s263
    %p275 = scmp.eq.s32.totalorder %s24, 1
    %p276 = por %p274, %p275
    %p278 = scmp.ne.s32.totalorder %s263, %s277
    %p279 = scmp.eq.s32.totalorder %s24, 0
    %p280 = por %p278, %p279
    %s282 = sadd.s32 %s281, 1
    %p285 = scmp.eq.s32.totalorder %s18, 1
    %p286 = scmp.ne.s32.totalorder %s281, %s283
    %p287 = scmp.eq.s32.totalorder %s18, 0
    %p288 = por %p286, %p287
    %p289 = scmp.ne.s32.totalorder %s281, %s283
    %p290 = scmp.eq.s32.totalorder %s23, 1
    %p291 = por %p289, %p290
    %p292 = scmp.ne.s32.totalorder %s283, %s284
    %p293 = scmp.eq.s32.totalorder %s23, 0
    %p294 = por %p292, %p293
    %p295 = scmp.ne.s32.totalorder %s283, %s284
    %p296 = scmp.eq.s32.totalorder %s24, 1
    %p297 = por %p295, %p296
    %p299 = scmp.ne.s32.totalorder %s284, %s298
    %p300 = scmp.eq.s32.totalorder %s24, 0
    %p301 = por %p299, %p300
    %s302 = ssub.s32 %s25, %s37
    %s303 = ssub.s32 %s26, %s33
    %s304 = sor.u32 %s302, %s303
    %p305 = scmp.eq.s32.totalorder %s304, 0
    %s307 = sadd.s32 %s306, 1
    %s308 = scalar_select %p305, %s306, %s307
    %p311 = pneg %p305
    %p312 = scmp.eq.s32.totalorder %s18, 1
    %p313 = por %p311, %p312
    %p314 = scmp.ne.s32.totalorder %s306, %s309
    %p315 = scmp.eq.s32.totalorder %s18, 0
    %p316 = por %p314, %p315
    %p317 = scmp.ne.s32.totalorder %s306, %s309
    %p318 = scmp.eq.s32.totalorder %s23, 1
    %p319 = por %p317, %p318
    %p320 = scmp.ne.s32.totalorder %s309, %s310
    %p321 = scmp.eq.s32.totalorder %s23, 0
    %p322 = por %p320, %p321
    %p323 = scmp.ne.s32.totalorder %s309, %s310
    %p324 = scmp.eq.s32.totalorder %s24, 1
    %p325 = por %p323, %p324
    %p327 = scmp.ne.s32.totalorder %s310, %s326
    %p328 = scmp.eq.s32.totalorder %s24, 0
    %p329 = por %p327, %p328
    %p330 = scmp.le.s32.totalorder 1, %s18
    %p331 = scmp.lt.s32.totalorder %s18, 3
    %p332 = pnand %p330, %p331
    %p333 = pneg %p332
    // Predicated region
    $region9: #{vanilla_transformer_forward.20} parent=5 // pred_check
      _
    $region10: #{vanilla_transformer_forward.20} parent=5 // pred_check_branch
      %335 = sbr.rel (%p332) target = $region12
    $region11: #{vanilla_transformer_forward.20} parent=5 // pred_region
      %s336 = ssub.s32 %s18, 1
      // Predicated region
      $region13: #{vanilla_transformer_forward.20} parent=11 // pred_check
        %p337 = pneg %p105
      $region14: #{vanilla_transformer_forward.20} parent=11 // pred_check_branch
        %339 = sbr.rel (%p337) target = $region16
      $region15: #{vanilla_transformer_forward.20} parent=11 // pred_region
        _
      $region16: #{vanilla_transformer_forward.20} parent=11 // pred_fallthru
        _
      // Predicated region
      $region17: #{vanilla_transformer_forward.20} parent=11 // pred_check
        %p340 = pneg %p126
      $region18: #{vanilla_transformer_forward.20} parent=11 // pred_check_branch
        %342 = sbr.rel (%p340) target = $region20
      $region19: #{vanilla_transformer_forward.20} parent=11 // pred_region
        _
      $region20: #{vanilla_transformer_forward.20} parent=11 // pred_fallthru
        _
      // Predicated region
      $region21: #{vanilla_transformer_forward.20} parent=11 // pred_check
        %p343 = pneg %p147
      $region22: #{vanilla_transformer_forward.20} parent=11 // pred_check_branch
        %345 = sbr.rel (%p343) target = $region24
      $region23: #{vanilla_transformer_forward.20} parent=11 // pred_region
        _
      $region24: #{vanilla_transformer_forward.20} parent=11 // pred_fallthru
        _
      // Predicated region
      $region25: #{vanilla_transformer_forward.20} parent=11 // pred_check
        %p346 = pneg %p168
      $region26: #{vanilla_transformer_forward.20} parent=11 // pred_check_branch
        %348 = sbr.rel (%p346) target = $region28
      $region27: #{vanilla_transformer_forward.20} parent=11 // pred_region
        _
      $region28: #{vanilla_transformer_forward.20} parent=11 // pred_fallthru
        _
      // Predicated region
      $region29: #{vanilla_transformer_forward.20} parent=11 // pred_check
        %p349 = pneg %p189
      $region30: #{vanilla_transformer_forward.20} parent=11 // pred_check_branch
        %351 = sbr.rel (%p349) target = $region32
      $region31: #{vanilla_transformer_forward.20} parent=11 // pred_region
        _
      $region32: #{vanilla_transformer_forward.20} parent=11 // pred_fallthru
        _
      // Predicated region
      $region33: #{vanilla_transformer_forward.20} parent=11 // pred_check
        %p352 = pneg %p210
      $region34: #{vanilla_transformer_forward.20} parent=11 // pred_check_branch
        %354 = sbr.rel (%p352) target = $region36
      $region35: #{vanilla_transformer_forward.20} parent=11 // pred_region
        _
      $region36: #{vanilla_transformer_forward.20} parent=11 // pred_fallthru
        _
      // Predicated region
      $region37: #{vanilla_transformer_forward.20} parent=11 // pred_check
        %p355 = pneg %p231
      $region38: #{vanilla_transformer_forward.20} parent=11 // pred_check_branch
        %357 = sbr.rel (%p355) target = $region40
      $region39: #{vanilla_transformer_forward.20} parent=11 // pred_region
        _
      $region40: #{vanilla_transformer_forward.20} parent=11 // pred_fallthru
        _
      // Predicated region
      $region41: #{vanilla_transformer_forward.20} parent=11 // pred_check
        %p358 = pneg %p252
      $region42: #{vanilla_transformer_forward.20} parent=11 // pred_check_branch
        %360 = sbr.rel (%p358) target = $region44
      $region43: #{vanilla_transformer_forward.20} parent=11 // pred_region
        _
      $region44: #{vanilla_transformer_forward.20} parent=11 // pred_fallthru
        _
      // Predicated region
      $region45: #{vanilla_transformer_forward.20} parent=11 // pred_check
        %p361 = pneg %p273
      $region46: #{vanilla_transformer_forward.20} parent=11 // pred_check_branch
        %363 = sbr.rel (%p361) target = $region48
      $region47: #{vanilla_transformer_forward.20} parent=11 // pred_region
        _
      $region48: #{vanilla_transformer_forward.20} parent=11 // pred_fallthru
        _
      // Predicated region
      $region49: #{vanilla_transformer_forward.20} parent=11 // pred_check
        %p364 = pneg %p294
      $region50: #{vanilla_transformer_forward.20} parent=11 // pred_check_branch
        %366 = sbr.rel (%p364) target = $region52
      $region51: #{vanilla_transformer_forward.20} parent=11 // pred_region
        _
      $region52: #{vanilla_transformer_forward.20} parent=11 // pred_fallthru
        _
    $region12: #{vanilla_transformer_forward.20} parent=5 // pred_fallthru
      _
    %p367 = scmp.lt.s32.totalorder %s18, 2
    // Predicated region
    $region53: #{vanilla_transformer_forward.20} parent=5 // pred_check
      %p368 = pneg %p367
    $region54: #{vanilla_transformer_forward.20} parent=5 // pred_check_branch
      %370 = sbr.rel (%p368) target = $region56
    $region55: #{vanilla_transformer_forward.20} parent=5 // pred_region
      // Predicated region
      $region57: #{vanilla_transformer_forward.20} parent=55 // pred_check
        %p371 = pneg %p52
      $region58: #{vanilla_transformer_forward.20} parent=55 // pred_check_branch
        %373 = sbr.rel (%p371) target = $region60
      $region59: #{vanilla_transformer_forward.20} parent=55 // pred_region
        %p374 = scmp.lt.s32.totalorder %s25, 1
        %s375 = scalar_select %p374, %s25, 1
        %p376 = scmp.lt.s32.totalorder %s26, 0
        %s377 = scalar_select %p376, %s26, 0
        %s378 = sadd.s32 %s377, %s375
        %s379 = smul.addr %s378, 4
        %s380 = scalar_lea.vmem %s0, %s379
      $region60: #{vanilla_transformer_forward.20} parent=55 // pred_fallthru
        _
      // Predicated region
      $region61: #{vanilla_transformer_forward.20} parent=55 // pred_check
        %p381 = pneg %p78
      $region62: #{vanilla_transformer_forward.20} parent=55 // pred_check_branch
        %383 = sbr.rel (%p381) target = $region64
      $region63: #{vanilla_transformer_forward.20} parent=55 // pred_region
        %p384 = scmp.lt.s32.totalorder %s25, 1
        %s385 = scalar_select %p384, %s25, 1
        %s386 = smul.addr %s385, 4
        %s387 = scalar_lea.vmem %s1, %s386
      $region64: #{vanilla_transformer_forward.20} parent=55 // pred_fallthru
        _
    $region56: #{vanilla_transformer_forward.20} parent=5 // pred_fallthru
      _
    %p388 = scmp.le.s32.totalorder 1, %s18
    %p389 = scmp.lt.s32.totalorder %s18, 3
    %p390 = pnand %p388, %p389
    %p391 = pneg %p390
    // Predicated region
    $region65: #{vanilla_transformer_forward.20} parent=5 // pred_check
      _
    $region66: #{vanilla_transformer_forward.20} parent=5 // pred_check_branch
      %393 = sbr.rel (%p390) target = $region68
    $region67: #{vanilla_transformer_forward.20} parent=5 // pred_region
      %s394 = ssub.s32 %s18, 1
      %p395 = scmp.lt.s32.totalorder %s27, 1
      %s396 = scalar_select %p395, %s27, 1
      %p397 = scmp.lt.s32.totalorder %s28, 0
      %s398 = scalar_select %p397, %s28, 0
      %s399 = sadd.s32 %s398, %s396
      %s400 = smul.addr %s399, 4
      %s401 = scalar_lea.vmem %s0, %s400
      %p402 = pneg %p58
      %p403 = pneg %p55
      %p404 = scmp.lt.s32.totalorder %s27, 1
      %s405 = scalar_select %p404, %s27, 1
      %s406 = smul.addr %s405, 4
      %s407 = scalar_lea.vmem %s1, %s406
      %p408 = pneg %p84
      %p409 = pneg %p81
      %p410 = pneg %p105
      %p411 = pneg %p102
      %p412 = pneg %p126
      %p413 = pneg %p123
      %p414 = pneg %p147
      %p415 = pneg %p144
      %p416 = pneg %p168
      %p417 = pneg %p165
      %p418 = pneg %p189
      %p419 = pneg %p186
      %p420 = pneg %p210
      %p421 = pneg %p207
      %p422 = pneg %p231
      %p423 = pneg %p228
      %p424 = pneg %p252
      %p425 = pneg %p249
      %p426 = pneg %p273
      %p427 = pneg %p270
      %p428 = pneg %p294
      %p429 = pneg %p291
      %p430 = pneg %p322
      %p431 = pneg %p319
      %p432 = scmp.lt.s32.totalorder %s27, 1
      %s433 = scalar_select %p432, %s27, 1
      %p434 = scmp.lt.s32.totalorder %s28, 0
      %s435 = scalar_select %p434, %s28, 0
      %s436 = sadd.s32 %s435, %s433
      %s437 = smul.addr %s436, 4
      %s438 = scalar_lea.vmem %s12, %s437
      %p439 = scmp.lt.s32.totalorder %s27, 1
      %s440 = scalar_select %p439, %s27, 1
      %p441 = scmp.lt.s32.totalorder %s28, 0
      %s442 = scalar_select %p441, %s28, 0
      %s443 = sadd.s32 %s442, %s440
      %s444 = smul.addr %s443, 4
      %s445 = scalar_lea.vmem %s0, %s444
      %p446 = scmp.lt.s32.totalorder %s27, 1
      %s447 = scalar_select %p446, %s27, 1
      %s448 = smul.addr %s447, 4
      %s449 = scalar_lea.vmem %s1, %s448
      %p450 = scmp.lt.s32.totalorder %s27, 1
      %s451 = scalar_select %p450, %s27, 1
      %p452 = scmp.lt.s32.totalorder %s28, 0
      %s453 = scalar_select %p452, %s28, 0
      %s454 = sadd.s32 %s453, %s451
      %s455 = smul.addr %s454, 4
      %s456 = scalar_lea.vmem %s12, %s455
      %p458 = scmp.eq.s32.totalorder %s28, 0
      // Predicated region
      $region69: #{vanilla_transformer_forward.20} parent=67 // pred_check
        %p459 = pneg %p458
      $region70: #{vanilla_transformer_forward.20} parent=67 // pred_check_branch
        %461 = sbr.rel (%p459) target = $region72
      $region71: #{vanilla_transformer_forward.20} parent=67 // pred_region
        %v462 = vld [vmem:[%s449] sm:$0xf]
        %v463 = vld [vmem:[%s3] sm:$0xf]
        %v464 = vld [vmem:[%s3 + $0x4] sm:$0xf]
        %v465 = vld [vmem:[%s3 + $0x8] sm:$0xf]
        %v466 = vld [vmem:[%s3 + $0xc] sm:$0xf]
        %v467 = vld [vmem:[%s7] sm:$0x1]
        %v469 = vlaneseq
        %v470 = vshrl.u32 %v469, 7
        %v471 = vsub.s32 0, %v470
        %v472 = vrot.slane %v467, %v471
        %v478 = vunpack.c.l.b16 %v463
        %v479 = vunpack.c.l.b16 %v464
        %v480 = vunpack.c.l.b16 %v465
        %v481 = vunpack.c.l.b16 %v466
        %v482 = vpack.c.b16 %v479, %v478
        %v483 = vpack.c.b16 %v481, %v480
        %vm486 = vcmask 261120
        %v488 = vsel %vm486, %v462, 0
        %490 = vmatprep.subr.bf16.mxu0 0
        %491 = vmatpush1.bf16.msra.mxu0 %v482
        %492 = vmatprep.subr.bf16.mxu0 0
        %493 = vmatpush1.bf16.msra.mxu0 %v483
        %494 = vmatprep.subr.bf16.mxu0 0
        %495 = vmatpush1.bf16.msra.mxu0 0
        %496 = vmatprep.subr.bf16.mxu0 0
        %497 = vmatpush1.bf16.msra.mxu0 0
        %498 = vmatprep.subr.bf16.mxu0 0
        %499 = vmatpush1.bf16.msra.mxu0 0
        %500 = vmatprep.subr.bf16.mxu0 0
        %501 = vmatpush1.bf16.msra.mxu0 0
        %502 = vmatprep.subr.bf16.mxu0 0
        %503 = vmatpush1.bf16.msra.mxu0 0
        %504 = vmatprep.subr.bf16.mxu0 0
        %505 = vmatpush1.bf16.msra.mxu0 0
        %506 = vmatprep.subr.bf16.mxu0 0
        %507 = vmatpush1.bf16.msra.mxu0 0
        %508 = vmatprep.subr.bf16.mxu0 0
        %509 = vmatpush1.bf16.msra.mxu0 0
        %510 = vmatprep.subr.bf16.mxu0 0
        %511 = vmatpush1.bf16.msra.mxu0 0
        %512 = vmatprep.subr.bf16.mxu0 0
        %513 = vmatpush1.bf16.msra.mxu0 0
        %514 = vmatprep.subr.bf16.mxu0 0
        %515 = vmatpush1.bf16.msra.mxu0 0
        %516 = vmatprep.subr.bf16.mxu0 0
        %517 = vmatpush1.bf16.msra.mxu0 0
        %518 = vmatprep.subr.bf16.mxu0 0
        %519 = vmatpush1.bf16.msra.mxu0 0
        %520 = vmatprep.subr.bf16.mxu0 0
        %521 = vmatpush1.bf16.msra.mxu0 0
        %522 = vmatprep.mubr.bf16.mxu0 0
        %523 = vmatmul.mubr.bf16.gmra.mrb[0].mxu0 %v488
        %v524 = vpop.f32.mrb[0].mxu0
        %v525 = vadd.f32 %v472, %v524
        %v526 = vpop.f32.mrb[0].mxu0
        %v527 = vpop.f32.mrb[0].mxu0
        %v528 = vpop.f32.mrb[0].mxu0
        %529 = vdwg.mxu0
        %v530 = vld [vmem:[%s4] sm:$0xf]
        %v531 = vld [vmem:[%s4 + $0x4] sm:$0xf]
        %v532 = vld [vmem:[%s4 + $0x8] sm:$0xf]
        %v533 = vld [vmem:[%s4 + $0xc] sm:$0xf]
        %v534 = vld [vmem:[%s8] sm:$0x1]
        %v536 = vlaneseq
        %v537 = vshrl.u32 %v536, 7
        %v538 = vsub.s32 0, %v537
        %v539 = vrot.slane %v534, %v538
        %v545 = vunpack.c.l.b16 %v530
        %v546 = vunpack.c.l.b16 %v531
        %v547 = vunpack.c.l.b16 %v532
        %v548 = vunpack.c.l.b16 %v533
        %v549 = vpack.c.b16 %v546, %v545
        %v550 = vpack.c.b16 %v548, %v547
        %553 = vmatprep.subr.bf16.mxu0 0
        %554 = vmatpush1.bf16.msra.mxu0 %v549
        %555 = vmatprep.subr.bf16.mxu0 0
        %556 = vmatpush1.bf16.msra.mxu0 %v550
        %557 = vmatprep.subr.bf16.mxu0 0
        %558 = vmatpush1.bf16.msra.mxu0 0
        %559 = vmatprep.subr.bf16.mxu0 0
        %560 = vmatpush1.bf16.msra.mxu0 0
        %561 = vmatprep.subr.bf16.mxu0 0
        %562 = vmatpush1.bf16.msra.mxu0 0
        %563 = vmatprep.subr.bf16.mxu0 0
        %564 = vmatpush1.bf16.msra.mxu0 0
        %565 = vmatprep.subr.bf16.mxu0 0
        %566 = vmatpush1.bf16.msra.mxu0 0
        %567 = vmatprep.subr.bf16.mxu0 0
        %568 = vmatpush1.bf16.msra.mxu0 0
        %569 = vmatprep.subr.bf16.mxu0 0
        %570 = vmatpush1.bf16.msra.mxu0 0
        %571 = vmatprep.subr.bf16.mxu0 0
        %572 = vmatpush1.bf16.msra.mxu0 0
        %573 = vmatprep.subr.bf16.mxu0 0
        %574 = vmatpush1.bf16.msra.mxu0 0
        %575 = vmatprep.subr.bf16.mxu0 0
        %576 = vmatpush1.bf16.msra.mxu0 0
        %577 = vmatprep.subr.bf16.mxu0 0
        %578 = vmatpush1.bf16.msra.mxu0 0
        %579 = vmatprep.subr.bf16.mxu0 0
        %580 = vmatpush1.bf16.msra.mxu0 0
        %581 = vmatprep.subr.bf16.mxu0 0
        %582 = vmatpush1.bf16.msra.mxu0 0
        %583 = vmatprep.subr.bf16.mxu0 0
        %584 = vmatpush1.bf16.msra.mxu0 0
        %585 = vmatprep.mubr.bf16.mxu0 0
        %586 = vmatmul.mubr.bf16.gmra.mrb[0].mxu0 %v488
        %v587 = vpop.f32.mrb[0].mxu0
        %v588 = vadd.f32 %v539, %v587
        %v589 = vpop.f32.mrb[0].mxu0
        %v590 = vpop.f32.mrb[0].mxu0
        %v591 = vpop.f32.mrb[0].mxu0
        %592 = vdwg.mxu0
        %v593 = vpack.c.bf16 %v525, %v525
        %vm594 = vcmask 257024
        %595 = vst.msk [vmem:[#allocation2] sm:$0xf] %vm594, %v593
        %v596 = vpack.c.bf16 %v588, %v588
        %597 = vst.msk [vmem:[#allocation3] sm:$0xf] %vm594, %v596
      $region72: #{vanilla_transformer_forward.20} parent=67 // pred_fallthru
        _
      %v598 = vld [vmem:[%s445] sm:$0xf]
      %v599 = vld [vmem:[%s2] sm:$0xf]
      %v600 = vld [vmem:[%s2 + $0x4] sm:$0xf]
      %v601 = vld [vmem:[%s2 + $0x8] sm:$0xf]
      %v602 = vld [vmem:[%s2 + $0xc] sm:$0xf]
      %v603 = vld [vmem:[%s6] sm:$0x1]
      %v605 = vlaneseq
      %v606 = vshrl.u32 %v605, 7
      %v607 = vsub.s32 0, %v606
      %v608 = vrot.slane %v603, %v607
      %v614 = vunpack.c.l.b16 %v599
      %v615 = vunpack.c.l.b16 %v600
      %v616 = vunpack.c.l.b16 %v601
      %v617 = vunpack.c.l.b16 %v602
      %v618 = vpack.c.b16 %v615, %v614
      %v619 = vpack.c.b16 %v617, %v616
      %vm622 = vcmask 261120
      %v624 = vsel %vm622, %v598, 0
      %626 = vmatprep.subr.bf16.mxu0 0
      %627 = vmatpush1.bf16.msra.mxu0 %v618
      %628 = vmatprep.subr.bf16.mxu0 0
      %629 = vmatpush1.bf16.msra.mxu0 %v619
      %630 = vmatprep.subr.bf16.mxu0 0
      %631 = vmatpush1.bf16.msra.mxu0 0
      %632 = vmatprep.subr.bf16.mxu0 0
      %633 = vmatpush1.bf16.msra.mxu0 0
      %634 = vmatprep.subr.bf16.mxu0 0
      %635 = vmatpush1.bf16.msra.mxu0 0
      %636 = vmatprep.subr.bf16.mxu0 0
      %637 = vmatpush1.bf16.msra.mxu0 0
      %638 = vmatprep.subr.bf16.mxu0 0
      %639 = vmatpush1.bf16.msra.mxu0 0
      %640 = vmatprep.subr.bf16.mxu0 0
      %641 = vmatpush1.bf16.msra.mxu0 0
      %642 = vmatprep.subr.bf16.mxu0 0
      %643 = vmatpush1.bf16.msra.mxu0 0
      %644 = vmatprep.subr.bf16.mxu0 0
      %645 = vmatpush1.bf16.msra.mxu0 0
      %646 = vmatprep.subr.bf16.mxu0 0
      %647 = vmatpush1.bf16.msra.mxu0 0
      %648 = vmatprep.subr.bf16.mxu0 0
      %649 = vmatpush1.bf16.msra.mxu0 0
      %650 = vmatprep.subr.bf16.mxu0 0
      %651 = vmatpush1.bf16.msra.mxu0 0
      %652 = vmatprep.subr.bf16.mxu0 0
      %653 = vmatpush1.bf16.msra.mxu0 0
      %654 = vmatprep.subr.bf16.mxu0 0
      %655 = vmatpush1.bf16.msra.mxu0 0
      %656 = vmatprep.subr.bf16.mxu0 0
      %657 = vmatpush1.bf16.msra.mxu0 0
      %658 = vmatprep.mubr.bf16.mxu0 0
      %659 = vmatmul.mubr.bf16.gmra.mrb[0].mxu0 %v624
      %v660 = vpop.f32.mrb[0].mxu0
      %v661 = vadd.f32 %v608, %v660
      %v662 = vpop.f32.mrb[0].mxu0
      %v663 = vpop.f32.mrb[0].mxu0
      %v664 = vpop.f32.mrb[0].mxu0
      %665 = vdwg.mxu0
      %v666 = vmul.f32 %v661, 0.35355338
      %v667 = vpack.c.bf16 %v666, %v666
      %v668 = vld [vmem:[#allocation2] sm:$0xf]
      %v669 = vld [vmem:[#allocation3] sm:$0xf]
      %vm670 = vcmask 64512
      %v672 = vsel %vm670, %v667, 0
      %v675 = vsel %vm670, %v668, 0
      %677 = vmatprep.subr.bf16.mxu0 0
      %678 = vmatpush1.bf16.xpose.msra.mxu0 %v675
      %679 = vmatprep.subr.bf16.mxu0 0
      %680 = vmatpush1.bf16.xpose.msra.mxu0 0
      %681 = vmatprep.subr.bf16.mxu0 0
      %682 = vmatpush1.bf16.xpose.msra.mxu0 0
      %683 = vmatprep.subr.bf16.mxu0 0
      %684 = vmatpush1.bf16.xpose.msra.mxu0 0
      %685 = vmatprep.subr.bf16.mxu0 0
      %686 = vmatpush1.bf16.xpose.msra.mxu0 0
      %687 = vmatprep.subr.bf16.mxu0 0
      %688 = vmatpush1.bf16.xpose.msra.mxu0 0
      %689 = vmatprep.subr.bf16.mxu0 0
      %690 = vmatpush1.bf16.xpose.msra.mxu0 0
      %691 = vmatprep.subr.bf16.mxu0 0
      %692 = vmatpush1.bf16.xpose.msra.mxu0 0
      %693 = vmatprep.subr.bf16.mxu0 0
      %694 = vmatpush1.bf16.xpose.msra.mxu0 0
      %695 = vmatprep.subr.bf16.mxu0 0
      %696 = vmatpush1.bf16.xpose.msra.mxu0 0
      %697 = vmatprep.subr.bf16.mxu0 0
      %698 = vmatpush1.bf16.xpose.msra.mxu0 0
      %699 = vmatprep.subr.bf16.mxu0 0
      %700 = vmatpush1.bf16.xpose.msra.mxu0 0
      %701 = vmatprep.subr.bf16.mxu0 0
      %702 = vmatpush1.bf16.xpose.msra.mxu0 0
      %703 = vmatprep.subr.bf16.mxu0 0
      %704 = vmatpush1.bf16.xpose.msra.mxu0 0
      %705 = vmatprep.subr.bf16.mxu0 0
      %706 = vmatpush1.bf16.xpose.msra.mxu0 0
      %707 = vmatprep.subr.bf16.mxu0 0
      %708 = vmatpush1.bf16.xpose.msra.mxu0 0
      %709 = vmatprep.mubr.bf16.mxu0 0
      %710 = vmatmul.mubr.bf16.gmra.mrb[0].mxu0 %v672
      %v711 = vpop.f32.mrb[0].mxu0
      %v712 = vadd.f32 0.0, %v711
      %v713 = vpop.f32.mrb[0].mxu0
      %v714 = vpop.f32.mrb[0].mxu0
      %v715 = vpop.f32.mrb[0].mxu0
      %716 = vdwg.mxu0
      %v717 = vsel %vm670, %v712, -inf
      %718 = vmax.xlane.f32.xlu0 %v717
      %v719 = vpop.xlane.xlu0 %718
      %v720 = vsub.f32 %v712, %v719
      %v721 = vmul.f32 %v720, 1.442695
      %v722 = vpow.pop %v721
      %v723 = vsel %vm670, %v722, 0.0
      %724 = vadd.xlane.f32.xlu0 %v723
      %v725 = vpop.xlane.xlu0 %724
      %v726 = vrcp.pop %v725
      %v727 = vmul.f32 %v722, %v726
      %v728 = vpack.c.bf16 %v727, %v727
      %v730 = vsel %vm670, %v728, 0
      %vm732 = vcmask 1043456
      %v734 = vsel %vm732, %v669, 0
      %736 = vmatprep.subr.bf16.mxu0 0
      %737 = vmatpush1.bf16.msra.mxu0 %v734
      %738 = vmatprep.subr.bf16.mxu0 0
      %739 = vmatpush1.bf16.msra.mxu0 0
      %740 = vmatprep.subr.bf16.mxu0 0
      %741 = vmatpush1.bf16.msra.mxu0 0
      %742 = vmatprep.subr.bf16.mxu0 0
      %743 = vmatpush1.bf16.msra.mxu0 0
      %744 = vmatprep.subr.bf16.mxu0 0
      %745 = vmatpush1.bf16.msra.mxu0 0
      %746 = vmatprep.subr.bf16.mxu0 0
      %747 = vmatpush1.bf16.msra.mxu0 0
      %748 = vmatprep.subr.bf16.mxu0 0
      %749 = vmatpush1.bf16.msra.mxu0 0
      %750 = vmatprep.subr.bf16.mxu0 0
      %751 = vmatpush1.bf16.msra.mxu0 0
      %752 = vmatprep.subr.bf16.mxu0 0
      %753 = vmatpush1.bf16.msra.mxu0 0
      %754 = vmatprep.subr.bf16.mxu0 0
      %755 = vmatpush1.bf16.msra.mxu0 0
      %756 = vmatprep.subr.bf16.mxu0 0
      %757 = vmatpush1.bf16.msra.mxu0 0
      %758 = vmatprep.subr.bf16.mxu0 0
      %759 = vmatpush1.bf16.msra.mxu0 0
      %760 = vmatprep.subr.bf16.mxu0 0
      %761 = vmatpush1.bf16.msra.mxu0 0
      %762 = vmatprep.subr.bf16.mxu0 0
      %763 = vmatpush1.bf16.msra.mxu0 0
      %764 = vmatprep.subr.bf16.mxu0 0
      %765 = vmatpush1.bf16.msra.mxu0 0
      %766 = vmatprep.subr.bf16.mxu0 0
      %767 = vmatpush1.bf16.msra.mxu0 0
      %768 = vmatprep.mubr.bf16.mxu0 0
      %769 = vmatmul.mubr.bf16.gmra.mrb[0].mxu0 %v730
      %v770 = vpop.f32.mrb[0].mxu0
      %v771 = vadd.f32 0.0, %v770
      %v772 = vpop.f32.mrb[0].mxu0
      %v773 = vpop.f32.mrb[0].mxu0
      %v774 = vpop.f32.mrb[0].mxu0
      %775 = vdwg.mxu0
      %776 = vst.msk [vmem:[#allocation4] sm:$0xff] %vm670, %v771
      %778 = vrot.lane.b32.xlu0 %v667, 120
      %v779 = vpop.permute.xlu0 %778
      %v781 = vunpack.c.l.b16 %v668
      %v782 = vpack.c.b16 %v781, %v781
      %783 = vrot.lane.b32.xlu0 %v782, 120
      %v784 = vpop.permute.xlu0 %783
      %v786 = vsel %vm670, %v779, 0
      %v789 = vsel %vm670, %v784, 0
      %791 = vmatprep.subr.bf16.mxu0 0
      %792 = vmatpush1.bf16.xpose.msra.mxu0 %v789
      %793 = vmatprep.subr.bf16.mxu0 0
      %794 = vmatpush1.bf16.xpose.msra.mxu0 0
      %795 = vmatprep.subr.bf16.mxu0 0
      %796 = vmatpush1.bf16.xpose.msra.mxu0 0
      %797 = vmatprep.subr.bf16.mxu0 0
      %798 = vmatpush1.bf16.xpose.msra.mxu0 0
      %799 = vmatprep.subr.bf16.mxu0 0
      %800 = vmatpush1.bf16.xpose.msra.mxu0 0
      %801 = vmatprep.subr.bf16.mxu0 0
      %802 = vmatpush1.bf16.xpose.msra.mxu0 0
      %803 = vmatprep.subr.bf16.mxu0 0
      %804 = vmatpush1.bf16.xpose.msra.mxu0 0
      %805 = vmatprep.subr.bf16.mxu0 0
      %806 = vmatpush1.bf16.xpose.msra.mxu0 0
      %807 = vmatprep.subr.bf16.mxu0 0
      %808 = vmatpush1.bf16.xpose.msra.mxu0 0
      %809 = vmatprep.subr.bf16.mxu0 0
      %810 = vmatpush1.bf16.xpose.msra.mxu0 0
      %811 = vmatprep.subr.bf16.mxu0 0
      %812 = vmatpush1.bf16.xpose.msra.mxu0 0
      %813 = vmatprep.subr.bf16.mxu0 0
      %814 = vmatpush1.bf16.xpose.msra.mxu0 0
      %815 = vmatprep.subr.bf16.mxu0 0
      %816 = vmatpush1.bf16.xpose.msra.mxu0 0
      %817 = vmatprep.subr.bf16.mxu0 0
      %818 = vmatpush1.bf16.xpose.msra.mxu0 0
      %819 = vmatprep.subr.bf16.mxu0 0
      %820 = vmatpush1.bf16.xpose.msra.mxu0 0
      %821 = vmatprep.subr.bf16.mxu0 0
      %822 = vmatpush1.bf16.xpose.msra.mxu0 0
      %823 = vmatprep.mubr.bf16.mxu0 0
      %824 = vmatmul.mubr.bf16.gmra.mrb[0].mxu0 %v786
      %v825 = vpop.f32.mrb[0].mxu0
      %v826 = vadd.f32 0.0, %v825
      %v827 = vpop.f32.mrb[0].mxu0
      %v828 = vpop.f32.mrb[0].mxu0
      %v829 = vpop.f32.mrb[0].mxu0
      %830 = vdwg.mxu0
      %v831 = vsel %vm670, %v826, -inf
      %832 = vmax.xlane.f32.xlu0 %v831
      %v833 = vpop.xlane.xlu0 %832
      %v834 = vsub.f32 %v826, %v833
      %v835 = vmul.f32 %v834, 1.442695
      %v836 = vpow.pop %v835
      %v837 = vsel %vm670, %v836, 0.0
      %838 = vadd.xlane.f32.xlu0 %v837
      %v839 = vpop.xlane.xlu0 %838
      %v840 = vrcp.pop %v839
      %v841 = vmul.f32 %v836, %v840
      %v842 = vpack.c.bf16 %v841, %v841
      %v844 = vunpack.c.l.b16 %v669
      %v845 = vpack.c.b16 %v844, %v844
      %846 = vrot.lane.b32.xlu0 %v845, 120
      %v847 = vpop.permute.xlu0 %846
      %v849 = vsel %vm670, %v842, 0
      %v852 = vsel %vm732, %v847, 0
      %854 = vmatprep.subr.bf16.mxu0 0
      %855 = vmatpush1.bf16.msra.mxu0 %v852
      %856 = vmatprep.subr.bf16.mxu0 0
      %857 = vmatpush1.bf16.msra.mxu0 0
      %858 = vmatprep.subr.bf16.mxu0 0
      %859 = vmatpush1.bf16.msra.mxu0 0
      %860 = vmatprep.subr.bf16.mxu0 0
      %861 = vmatpush1.bf16.msra.mxu0 0
      %862 = vmatprep.subr.bf16.mxu0 0
      %863 = vmatpush1.bf16.msra.mxu0 0
      %864 = vmatprep.subr.bf16.mxu0 0
      %865 = vmatpush1.bf16.msra.mxu0 0
      %866 = vmatprep.subr.bf16.mxu0 0
      %867 = vmatpush1.bf16.msra.mxu0 0
      %868 = vmatprep.subr.bf16.mxu0 0
      %869 = vmatpush1.bf16.msra.mxu0 0
      %870 = vmatprep.subr.bf16.mxu0 0
      %871 = vmatpush1.bf16.msra.mxu0 0
      %872 = vmatprep.subr.bf16.mxu0 0
      %873 = vmatpush1.bf16.msra.mxu0 0
      %874 = vmatprep.subr.bf16.mxu0 0
      %875 = vmatpush1.bf16.msra.mxu0 0
      %876 = vmatprep.subr.bf16.mxu0 0
      %877 = vmatpush1.bf16.msra.mxu0 0
      %878 = vmatprep.subr.bf16.mxu0 0
      %879 = vmatpush1.bf16.msra.mxu0 0
      %880 = vmatprep.subr.bf16.mxu0 0
      %881 = vmatpush1.bf16.msra.mxu0 0
      %882 = vmatprep.subr.bf16.mxu0 0
      %883 = vmatpush1.bf16.msra.mxu0 0
      %884 = vmatprep.subr.bf16.mxu0 0
      %885 = vmatpush1.bf16.msra.mxu0 0
      %886 = vmatprep.mubr.bf16.mxu0 0
      %887 = vmatmul.mubr.bf16.gmra.mrb[0].mxu0 %v849
      %v888 = vpop.f32.mrb[0].mxu0
      %v889 = vadd.f32 0.0, %v888
      %v890 = vpop.f32.mrb[0].mxu0
      %v891 = vpop.f32.mrb[0].mxu0
      %v892 = vpop.f32.mrb[0].mxu0
      %893 = vdwg.mxu0
      %895 = vrot.lane.b32.xlu0 %v889, 8
      %v896 = vpop.permute.xlu0 %895
      %vm898 = vcmask 130112
      %899 = vst.msk [vmem:[#allocation4] sm:$0xff] %vm898, %v896
      %900 = vrot.lane.b32.xlu0 %v667, 112
      %v901 = vpop.permute.xlu0 %900
      %902 = vrot.lane.b32.xlu0 %v782, 112
      %v903 = vpop.permute.xlu0 %902
      %v905 = vsel %vm670, %v901, 0
      %v908 = vsel %vm670, %v903, 0
      %910 = vmatprep.subr.bf16.mxu0 0
      %911 = vmatpush1.bf16.xpose.msra.mxu0 %v908
      %912 = vmatprep.subr.bf16.mxu0 0
      %913 = vmatpush1.bf16.xpose.msra.mxu0 0
      %914 = vmatprep.subr.bf16.mxu0 0
      %915 = vmatpush1.bf16.xpose.msra.mxu0 0
      %916 = vmatprep.subr.bf16.mxu0 0
      %917 = vmatpush1.bf16.xpose.msra.mxu0 0
      %918 = vmatprep.subr.bf16.mxu0 0
      %919 = vmatpush1.bf16.xpose.msra.mxu0 0
      %920 = vmatprep.subr.bf16.mxu0 0
      %921 = vmatpush1.bf16.xpose.msra.mxu0 0
      %922 = vmatprep.subr.bf16.mxu0 0
      %923 = vmatpush1.bf16.xpose.msra.mxu0 0
      %924 = vmatprep.subr.bf16.mxu0 0
      %925 = vmatpush1.bf16.xpose.msra.mxu0 0
      %926 = vmatprep.subr.bf16.mxu0 0
      %927 = vmatpush1.bf16.xpose.msra.mxu0 0
      %928 = vmatprep.subr.bf16.mxu0 0
      %929 = vmatpush1.bf16.xpose.msra.mxu0 0
      %930 = vmatprep.subr.bf16.mxu0 0
      %931 = vmatpush1.bf16.xpose.msra.mxu0 0
      %932 = vmatprep.subr.bf16.mxu0 0
      %933 = vmatpush1.bf16.xpose.msra.mxu0 0
      %934 = vmatprep.subr.bf16.mxu0 0
      %935 = vmatpush1.bf16.xpose.msra.mxu0 0
      %936 = vmatprep.subr.bf16.mxu0 0
      %937 = vmatpush1.bf16.xpose.msra.mxu0 0
      %938 = vmatprep.subr.bf16.mxu0 0
      %939 = vmatpush1.bf16.xpose.msra.mxu0 0
      %940 = vmatprep.subr.bf16.mxu0 0
      %941 = vmatpush1.bf16.xpose.msra.mxu0 0
      %942 = vmatprep.mubr.bf16.mxu0 0
      %943 = vmatmul.mubr.bf16.gmra.mrb[0].mxu0 %v905
      %v944 = vpop.f32.mrb[0].mxu0
      %v945 = vadd.f32 0.0, %v944
      %v946 = vpop.f32.mrb[0].mxu0
      %v947 = vpop.f32.mrb[0].mxu0
      %v948 = vpop.f32.mrb[0].mxu0
      %949 = vdwg.mxu0
      %v950 = vsel %vm670, %v945, -inf
      %951 = vmax.xlane.f32.xlu0 %v950
      %v952 = vpop.xlane.xlu0 %951
      %v953 = vsub.f32 %v945, %v952
      %v954 = vmul.f32 %v953, 1.442695
      %v955 = vpow.pop %v954
      %v956 = vsel %vm670, %v955, 0.0
      %957 = vadd.xlane.f32.xlu0 %v956
      %v958 = vpop.xlane.xlu0 %957
      %v959 = vrcp.pop %v958
      %v960 = vmul.f32 %v955, %v959
      %v961 = vpack.c.bf16 %v960, %v960
      %962 = vrot.lane.b32.xlu0 %v845, 112
      %v963 = vpop.permute.xlu0 %962
      %v965 = vsel %vm670, %v961, 0
      %v968 = vsel %vm732, %v963, 0
      %970 = vmatprep.subr.bf16.mxu0 0
      %971 = vmatpush1.bf16.msra.mxu0 %v968
      %972 = vmatprep.subr.bf16.mxu0 0
      %973 = vmatpush1.bf16.msra.mxu0 0
      %974 = vmatprep.subr.bf16.mxu0 0
      %975 = vmatpush1.bf16.msra.mxu0 0
      %976 = vmatprep.subr.bf16.mxu0 0
      %977 = vmatpush1.bf16.msra.mxu0 0
      %978 = vmatprep.subr.bf16.mxu0 0
      %979 = vmatpush1.bf16.msra.mxu0 0
      %980 = vmatprep.subr.bf16.mxu0 0
      %981 = vmatpush1.bf16.msra.mxu0 0
      %982 = vmatprep.subr.bf16.mxu0 0
      %983 = vmatpush1.bf16.msra.mxu0 0
      %984 = vmatprep.subr.bf16.mxu0 0
      %985 = vmatpush1.bf16.msra.mxu0 0
      %986 = vmatprep.subr.bf16.mxu0 0
      %987 = vmatpush1.bf16.msra.mxu0 0
      %988 = vmatprep.subr.bf16.mxu0 0
      %989 = vmatpush1.bf16.msra.mxu0 0
      %990 = vmatprep.subr.bf16.mxu0 0
      %991 = vmatpush1.bf16.msra.mxu0 0
      %992 = vmatprep.subr.bf16.mxu0 0
      %993 = vmatpush1.bf16.msra.mxu0 0
      %994 = vmatprep.subr.bf16.mxu0 0
      %995 = vmatpush1.bf16.msra.mxu0 0
      %996 = vmatprep.subr.bf16.mxu0 0
      %997 = vmatpush1.bf16.msra.mxu0 0
      %998 = vmatprep.subr.bf16.mxu0 0
      %999 = vmatpush1.bf16.msra.mxu0 0
      %1000 = vmatprep.subr.bf16.mxu0 0
      %1001 = vmatpush1.bf16.msra.mxu0 0
      %1002 = vmatprep.mubr.bf16.mxu0 0
      %1003 = vmatmul.mubr.bf16.gmra.mrb[0].mxu0 %v965
      %v1004 = vpop.f32.mrb[0].mxu0
      %v1005 = vadd.f32 0.0, %v1004
      %v1006 = vpop.f32.mrb[0].mxu0
      %v1007 = vpop.f32.mrb[0].mxu0
      %v1008 = vpop.f32.mrb[0].mxu0
      %1009 = vdwg.mxu0
      %1011 = vrot.lane.b32.xlu0 %v1005, 16
      %v1012 = vpop.permute.xlu0 %1011
      %vm1014 = vcmask 195712
      %1015 = vst.msk [vmem:[#allocation4] sm:$0xff] %vm1014, %v1012
      %1016 = vrot.lane.b32.xlu0 %v667, 104
      %v1017 = vpop.permute.xlu0 %1016
      %1018 = vrot.lane.b32.xlu0 %v782, 104
      %v1019 = vpop.permute.xlu0 %1018
      %v1021 = vsel %vm670, %v1017, 0
      %v1024 = vsel %vm670, %v1019, 0
      %1026 = vmatprep.subr.bf16.mxu0 0
      %1027 = vmatpush1.bf16.xpose.msra.mxu0 %v1024
      %1028 = vmatprep.subr.bf16.mxu0 0
      %1029 = vmatpush1.bf16.xpose.msra.mxu0 0
      %1030 = vmatprep.subr.bf16.mxu0 0
      %1031 = vmatpush1.bf16.xpose.msra.mxu0 0
      %1032 = vmatprep.subr.bf16.mxu0 0
      %1033 = vmatpush1.bf16.xpose.msra.mxu0 0
      %1034 = vmatprep.subr.bf16.mxu0 0
      %1035 = vmatpush1.bf16.xpose.msra.mxu0 0
      %1036 = vmatprep.subr.bf16.mxu0 0
      %1037 = vmatpush1.bf16.xpose.msra.mxu0 0
      %1038 = vmatprep.subr.bf16.mxu0 0
      %1039 = vmatpush1.bf16.xpose.msra.mxu0 0
      %1040 = vmatprep.subr.bf16.mxu0 0
      %1041 = vmatpush1.bf16.xpose.msra.mxu0 0
      %1042 = vmatprep.subr.bf16.mxu0 0
      %1043 = vmatpush1.bf16.xpose.msra.mxu0 0
      %1044 = vmatprep.subr.bf16.mxu0 0
      %1045 = vmatpush1.bf16.xpose.msra.mxu0 0
      %1046 = vmatprep.subr.bf16.mxu0 0
      %1047 = vmatpush1.bf16.xpose.msra.mxu0 0
      %1048 = vmatprep.subr.bf16.mxu0 0
      %1049 = vmatpush1.bf16.xpose.msra.mxu0 0
      %1050 = vmatprep.subr.bf16.mxu0 0
      %1051 = vmatpush1.bf16.xpose.msra.mxu0 0
      %1052 = vmatprep.subr.bf16.mxu0 0
      %1053 = vmatpush1.bf16.xpose.msra.mxu0 0
      %1054 = vmatprep.subr.bf16.mxu0 0
      %1055 = vmatpush1.bf16.xpose.msra.mxu0 0
      %1056 = vmatprep.subr.bf16.mxu0 0
      %1057 = vmatpush1.bf16.xpose.msra.mxu0 0
      %1058 = vmatprep.mubr.bf16.mxu0 0
      %1059 = vmatmul.mubr.bf16.gmra.mrb[0].mxu0 %v1021
      %v1060 = vpop.f32.mrb[0].mxu0
      %v1061 = vadd.f32 0.0, %v1060
      %v1062 = vpop.f32.mrb[0].mxu0
      %v1063 = vpop.f32.mrb[0].mxu0
      %v1064 = vpop.f32.mrb[0].mxu0
      %1065 = vdwg.mxu0
      %v1066 = vsel %vm670, %v1061, -inf
      %1067 = vmax.xlane.f32.xlu0 %v1066
      %v1068 = vpop.xlane.xlu0 %1067
      %v1069 = vsub.f32 %v1061, %v1068
      %v1070 = vmul.f32 %v1069, 1.442695
      %v1071 = vpow.pop %v1070
      %v1072 = vsel %vm670, %v1071, 0.0
      %1073 = vadd.xlane.f32.xlu0 %v1072
      %v1074 = vpop.xlane.xlu0 %1073
      %v1075 = vrcp.pop %v1074
      %v1076 = vmul.f32 %v1071, %v1075
      %v1077 = vpack.c.bf16 %v1076, %v1076
      %1078 = vrot.lane.b32.xlu0 %v845, 104
      %v1079 = vpop.permute.xlu0 %1078
      %v1081 = vsel %vm670, %v1077, 0
      %v1084 = vsel %vm732, %v1079, 0
      %1086 = vmatprep.subr.bf16.mxu0 0
      %1087 = vmatpush1.bf16.msra.mxu0 %v1084
      %1088 = vmatprep.subr.bf16.mxu0 0
      %1089 = vmatpush1.bf16.msra.mxu0 0
      %1090 = vmatprep.subr.bf16.mxu0 0
      %1091 = vmatpush1.bf16.msra.mxu0 0
      %1092 = vmatprep.subr.bf16.mxu0 0
      %1093 = vmatpush1.bf16.msra.mxu0 0
      %1094 = vmatprep.subr.bf16.mxu0 0
      %1095 = vmatpush1.bf16.msra.mxu0 0
      %1096 = vmatprep.subr.bf16.mxu0 0
      %1097 = vmatpush1.bf16.msra.mxu0 0
      %1098 = vmatprep.subr.bf16.mxu0 0
      %1099 = vmatpush1.bf16.msra.mxu0 0
      %1100 = vmatprep.subr.bf16.mxu0 0
      %1101 = vmatpush1.bf16.msra.mxu0 0
      %1102 = vmatprep.subr.bf16.mxu0 0
      %1103 = vmatpush1.bf16.msra.mxu0 0
      %1104 = vmatprep.subr.bf16.mxu0 0
      %1105 = vmatpush1.bf16.msra.mxu0 0
      %1106 = vmatprep.subr.bf16.mxu0 0
      %1107 = vmatpush1.bf16.msra.mxu0 0
      %1108 = vmatprep.subr.bf16.mxu0 0
      %1109 = vmatpush1.bf16.msra.mxu0 0
      %1110 = vmatprep.subr.bf16.mxu0 0
      %1111 = vmatpush1.bf16.msra.mxu0 0
      %1112 = vmatprep.subr.bf16.mxu0 0
      %1113 = vmatpush1.bf16.msra.mxu0 0
      %1114 = vmatprep.subr.bf16.mxu0 0
      %1115 = vmatpush1.bf16.msra.mxu0 0
      %1116 = vmatprep.subr.bf16.mxu0 0
      %1117 = vmatpush1.bf16.msra.mxu0 0
      %1118 = vmatprep.mubr.bf16.mxu0 0
      %1119 = vmatmul.mubr.bf16.gmra.mrb[0].mxu0 %v1081
      %v1120 = vpop.f32.mrb[0].mxu0
      %v1121 = vadd.f32 0.0, %v1120
      %v1122 = vpop.f32.mrb[0].mxu0
      %v1123 = vpop.f32.mrb[0].mxu0
      %v1124 = vpop.f32.mrb[0].mxu0
      %1125 = vdwg.mxu0
      %1127 = vrot.lane.b32.xlu0 %v1121, 24
      %v1128 = vpop.permute.xlu0 %1127
      %vm1130 = vcmask 261312
      %1131 = vst.msk [vmem:[#allocation4] sm:$0xff] %vm1130, %v1128
      %v1132 = vld [vmem:[#allocation4] sm:$0xff]
      %v1133 = vpack.c.bf16 %v1132, %v1132
      %v1134 = vld [vmem:[%s5] sm:$0xf]
      %v1135 = vld [vmem:[%s5 + $0x4] sm:$0xf]
      %v1136 = vld [vmem:[%s5 + $0x8] sm:$0xf]
      %v1137 = vld [vmem:[%s5 + $0xc] sm:$0xf]
      %v1138 = vld [vmem:[%s9] sm:$0x1]
      %v1140 = vlaneseq
      %v1141 = vshrl.u32 %v1140, 7
      %v1142 = vsub.s32 0, %v1141
      %v1143 = vrot.slane %v1138, %v1142
      %v1149 = vunpack.c.l.b16 %v1134
      %v1150 = vunpack.c.l.b16 %v1135
      %v1151 = vunpack.c.l.b16 %v1136
      %v1152 = vunpack.c.l.b16 %v1137
      %v1153 = vpack.c.b16 %v1150, %v1149
      %v1154 = vpack.c.b16 %v1152, %v1151
      %v1158 = vsel %vm622, %v1133, 0
      %1160 = vmatprep.subr.bf16.mxu0 0
      %1161 = vmatpush1.bf16.msra.mxu0 %v1153
      %1162 = vmatprep.subr.bf16.mxu0 0
      %1163 = vmatpush1.bf16.msra.mxu0 %v1154
      %1164 = vmatprep.subr.bf16.mxu0 0
      %1165 = vmatpush1.bf16.msra.mxu0 0
      %1166 = vmatprep.subr.bf16.mxu0 0
      %1167 = vmatpush1.bf16.msra.mxu0 0
      %1168 = vmatprep.subr.bf16.mxu0 0
      %1169 = vmatpush1.bf16.msra.mxu0 0
      %1170 = vmatprep.subr.bf16.mxu0 0
      %1171 = vmatpush1.bf16.msra.mxu0 0
      %1172 = vmatprep.subr.bf16.mxu0 0
      %1173 = vmatpush1.bf16.msra.mxu0 0
      %1174 = vmatprep.subr.bf16.mxu0 0
      %1175 = vmatpush1.bf16.msra.mxu0 0
      %1176 = vmatprep.subr.bf16.mxu0 0
      %1177 = vmatpush1.bf16.msra.mxu0 0
      %1178 = vmatprep.subr.bf16.mxu0 0
      %1179 = vmatpush1.bf16.msra.mxu0 0
      %1180 = vmatprep.subr.bf16.mxu0 0
      %1181 = vmatpush1.bf16.msra.mxu0 0
      %1182 = vmatprep.subr.bf16.mxu0 0
      %1183 = vmatpush1.bf16.msra.mxu0 0
      %1184 = vmatprep.subr.bf16.mxu0 0
      %1185 = vmatpush1.bf16.msra.mxu0 0
      %1186 = vmatprep.subr.bf16.mxu0 0
      %1187 = vmatpush1.bf16.msra.mxu0 0
      %1188 = vmatprep.subr.bf16.mxu0 0
      %1189 = vmatpush1.bf16.msra.mxu0 0
      %1190 = vmatprep.subr.bf16.mxu0 0
      %1191 = vmatpush1.bf16.msra.mxu0 0
      %1192 = vmatprep.mubr.bf16.mxu0 0
      %1193 = vmatmul.mubr.bf16.gmra.mrb[0].mxu0 %v1158
      %v1194 = vpop.f32.mrb[0].mxu0
      %v1195 = vadd.f32 %v1143, %v1194
      %v1196 = vpop.f32.mrb[0].mxu0
      %v1197 = vpop.f32.mrb[0].mxu0
      %v1198 = vpop.f32.mrb[0].mxu0
      %1199 = vdwg.mxu0
      %v1200 = vunpack.c.l.bf16 %v598
      %v1201 = vadd.f32 %v1200, %v1195
      %v1202 = vld [vmem:[%s10] sm:$0x1]
      %v1203 = vld [vmem:[%s11] sm:$0x1]
      %v1204 = vsel %vm622, %v1201, 0.0
      %1205 = vadd.xlane.f32.xlu0 %v1204
      %v1206 = vpop.xlane.xlu0 %1205
      %v1207 = vrcp.pop 32.0
      %v1208 = vmul.f32 %v1206, %v1207
      %v1209 = vsub.f32 %v1201, %v1208
      %v1210 = vmul.f32 %v1209, %v1209
      %v1211 = vsel %vm622, %v1210, 0.0
      %1212 = vadd.xlane.f32.xlu0 %v1211
      %v1213 = vpop.xlane.xlu0 %1212
      %v1214 = vmul.f32 %v1213, %v1207
      %v1215 = vadd.f32 %v1214, 1e-05
      %v1216 = vrsqrt.pop %v1215
      %v1217 = vmul.f32 %v1209, %v1216
      %v1219 = vlaneseq
      %v1220 = vshrl.u32 %v1219, 7
      %v1221 = vsub.s32 0, %v1220
      %v1222 = vrot.slane %v1202, %v1221
      %v1224 = vmul.f32 %v1217, %v1222
      %v1226 = vlaneseq
      %v1227 = vshrl.u32 %v1226, 7
      %v1228 = vsub.s32 0, %v1227
      %v1229 = vrot.slane %v1203, %v1228
      %v1231 = vadd.f32 %v1224, %v1229
      %v1232 = vpack.c.bf16 %v1231, %v1231
      %vm1233 = vcmask 257024
      %1234 = vst.msk [vmem:[%s456] sm:$0xf] %vm1233, %v1232
      %p1235 = scmp.lt.s32.totalorder %s27, 1
      %s1236 = scalar_select %p1235, %s27, 1
      %p1237 = scmp.lt.s32.totalorder %s28, 0
      %s1238 = scalar_select %p1237, %s28, 0
      %s1239 = sadd.s32 %s1238, %s1236
      %s1240 = smul.addr %s1239, 4
      %s1241 = scalar_lea.vmem %s12, %s1240
      // Predicated region
      $region73: #{vanilla_transformer_forward.20} parent=67 // pred_check
        %p1242 = pneg %p319
      $region74: #{vanilla_transformer_forward.20} parent=67 // pred_check_branch
        %1244 = sbr.rel (%p1242) target = $region76
      $region75: #{vanilla_transformer_forward.20} parent=67 // pred_region
        _
      $region76: #{vanilla_transformer_forward.20} parent=67 // pred_fallthru
        _
    $region68: #{vanilla_transformer_forward.20} parent=5 // pred_fallthru
      _
    %p1245 = scmp.le.s32.totalorder 2, %s18
    // Predicated region
    $region77: #{vanilla_transformer_forward.20} parent=5 // pred_check
      %p1246 = pneg %p1245
    $region78: #{vanilla_transformer_forward.20} parent=5 // pred_check_branch
      %1248 = sbr.rel (%p1246) target = $region80
    $region79: #{vanilla_transformer_forward.20} parent=5 // pred_region
      %s1249 = ssub.s32 %s18, 2
      // Predicated region
      $region81: #{vanilla_transformer_forward.20} parent=79 // pred_check
        %p1250 = pneg %p325
      $region82: #{vanilla_transformer_forward.20} parent=79 // pred_check_branch
        %1252 = sbr.rel (%p1250) target = $region84
      $region83: #{vanilla_transformer_forward.20} parent=79 // pred_region
        %p1253 = scmp.lt.s32.totalorder %s29, 1
        %s1254 = scalar_select %p1253, %s29, 1
        %p1255 = scmp.lt.s32.totalorder %s30, 0
        %s1256 = scalar_select %p1255, %s30, 0
        %s1257 = sadd.s32 %s1256, %s1254
        %s1258 = smul.addr %s1257, 4
        %s1259 = scalar_lea.vmem %s12, %s1258
      $region84: #{vanilla_transformer_forward.20} parent=79 // pred_fallthru
        _
    $region80: #{vanilla_transformer_forward.20} parent=5 // pred_fallthru
      _
  $region6: #{vanilla_transformer_forward.20} parent=0 // loop_footer
    %s22 = sadd.s32 1, %s18
  $region7: #{vanilla_transformer_forward.20} parent=0 // loop_footer_branch
    %17 = sbr.rel target = $region3
  $region8: #{vanilla_transformer_forward.20} parent=0 // loop_exit
    _

</llo_original>
